<compile_context>
chip_gen: v7x
topology: tpu7x:2x2x1
jax: 0.10.0
libtpu: 0.0.40
codegen_flags: <defaults>
</compile_context>

<pallas_src>
import random

import jax
import jax.numpy as jnp
from jax import lax
from jax.experimental import pallas as pl
from jax.experimental.pallas import tpu as pltpu

# ----------------------------- model sizes (small) ---------------------------------
B = 2              # batch
SRC_LEN = 8        # encoder sequence length
TGT_LEN = 8        # decoder sequence length (target_len)
EMB = 32           # config.emb_dim
HID = 32           # per-direction encoder hidden size
DEC_HID = 2 * HID  # decoder hidden = concat(fwd, bwd) = 64
ATTN = 32          # attention energy dim
CB = 64            # decoder.cb_size (codebook / vocab size)
N_LAYERS = 1       # encoder.n_layers == decoder.n_layers

_VMEM = pl.BlockSpec(memory_space=pltpu.MemorySpace.VMEM)


# ----------------------------- fused seq2seq kernel ---------------------------------
def seq2seq_kernel(
    x2_ref,         # (S*B, E)      source, time-major rows (t*B + b)
    tgt_oh_ref,     # (T, B, CB)    one-hot target tokens (for teacher forcing)
    tf_ref,         # (T, 1, 1)     teacher-forcing mask (1.0 = target, 0.0 = argmax)
    enc_wih_ref,    # (2, 3, E, H)  [direction, gate(r,z,n), E, H]
    enc_whh_ref,    # (2, 3, H, H)
    enc_bih_ref,    # (2, 3, 1, H)
    enc_bhh_ref,    # (2, 3, 1, H)
    attn_wh_ref,    # (2H, A)       hidden-side half of additive-attention weight
    attn_we_ref,    # (2H, A)       encoder-side half (applied once, loop-invariant)
    attn_b_ref,     # (1, A)
    attn_v_ref,     # (1, A)        energy -> score row (VPU reduce, no N=1 matmul)
    dec_wih_e_ref,  # (3, E, 2H)    decoder GRU input weights, embedding part
    dec_wih_c_ref,  # (3, 2H, 2H)   decoder GRU input weights, context part
    dec_whh_ref,    # (3, 2H, 2H)
    dec_bih_ref,    # (3, 1, 2H)
    dec_bhh_ref,    # (3, 1, 2H)
    out_wh_ref,     # (2H, CB)
    out_wc_ref,     # (2H, CB)
    out_we_ref,     # (E, CB)
    out_b_ref,      # (1, CB)
    emb_ref,        # (CB, E)       decoder token embedding table
    logits_ref,     # out: (T, B, CB)
    preds_ref,      # out: (T, B, 1) int32
    gi_f_ref,       # scratch (3*S, B, H)  hoisted fwd input projections (per gate)
    gi_b_ref,       # scratch (3*S, B, H)  hoisted bwd input projections (per gate)
    enc_f_ref,      # scratch (S, B, H)
    enc_b_ref,      # scratch (S, B, H)
):
    f32 = jnp.float32
    S, Bk, H = enc_f_ref.shape
    T, _, CBk = logits_ref.shape
    A = attn_b_ref.shape[1]
    E = emb_ref.shape[1]
    H2 = 2 * H

    # ---- hoisted encoder input projections (no serial dependence on h) --------------
    x2 = x2_ref[...]                                                   # (S*B, E)
    for g in range(3):
        gi_f_ref[pl.ds(g * S, S)] = (
            jnp.dot(x2, enc_wih_ref[0, g], preferred_element_type=f32)
            + enc_bih_ref[0, g]).reshape(S, Bk, H)
        gi_b_ref[pl.ds(g * S, S)] = (
            jnp.dot(x2, enc_wih_ref[1, g], preferred_element_type=f32)
            + enc_bih_ref[1, g]).reshape(S, Bk, H)

    # ---- bidirectional encoder: fwd(t) and bwd(S-1-t) interleaved in one loop -------
    def gru_half(h, d, gi_r, gi_z, gi_n):
        gh_r = jnp.dot(h, enc_whh_ref[d, 0], preferred_element_type=f32) + enc_bhh_ref[d, 0]
        gh_z = jnp.dot(h, enc_whh_ref[d, 1], preferred_element_type=f32) + enc_bhh_ref[d, 1]
        gh_n = jnp.dot(h, enc_whh_ref[d, 2], preferred_element_type=f32) + enc_bhh_ref[d, 2]
        r = jax.nn.sigmoid(gi_r + gh_r)
        z = jax.nn.sigmoid(gi_z + gh_z)
        n = jnp.tanh(gi_n + r * gh_n)
        return (1.0 - z) * n + z * h

    def enc_body(i, carry):
        h_f, h_b = carry
        tb = S - 1 - i
        h_f = gru_half(h_f, 0, gi_f_ref[i], gi_f_ref[S + i], gi_f_ref[2 * S + i])
        enc_f_ref[i] = h_f
        h_b = gru_half(h_b, 1, gi_b_ref[tb], gi_b_ref[S + tb], gi_b_ref[2 * S + tb])
        enc_b_ref[tb] = h_b
        return (h_f, h_b)

    h0 = jnp.zeros((Bk, H), f32)
    h_f, h_b = lax.fori_loop(0, S, enc_body, (h0, h0))

    enc = jnp.concatenate([enc_f_ref[...], enc_b_ref[...]], axis=-1)   # (S, B, 2H)
    hidden0 = jnp.concatenate([h_f, h_b], axis=-1)                     # (B, 2H)

    # ---- loop-invariant encoder-side attention projection (bias folded in) ----------
    enc_proj = (jnp.dot(enc.reshape(S * Bk, H2), attn_we_ref[...],
                        preferred_element_type=f32)
                + attn_b_ref[...]).reshape(S, Bk, A)                   # (S, B, A)
    v_row = attn_v_ref[...]                                            # (1, A)
    iota = lax.broadcasted_iota(jnp.int32, (Bk, CBk), 1).astype(f32)   # (B, CB)

    # ---- fused decode loop: attention + GRU + projection + argmax + next input ------
    def dec_body(t, carry):
        hidden, x_emb = carry                                          # (B, 2H), (B, E)

        # additive attention: per step only the hidden-side projection
        h_proj = jnp.dot(hidden, attn_wh_ref[...], preferred_element_type=f32)  # (B, A)
        energy = jnp.tanh(h_proj[None, :, :] + enc_proj)               # (S, B, A)
        scores = jnp.sum(energy * v_row, axis=-1, keepdims=True)       # (S, B, 1)
        m = jnp.max(scores, axis=0, keepdims=True)
        e = jnp.exp(scores - m)
        inv = pl.reciprocal(jnp.sum(e, axis=0, keepdims=True), approx=True)
        ctx = jnp.sum((e * inv) * enc, axis=0)                         # (B, 2H)

        # GRU step on [emb ; ctx] as split per-gate matmuls (no concat, no lane slices)
        def gates(g):
            gi = (jnp.dot(x_emb, dec_wih_e_ref[g], preferred_element_type=f32)
                  + jnp.dot(ctx, dec_wih_c_ref[g], preferred_element_type=f32)
                  + dec_bih_ref[g])
            gh = jnp.dot(hidden, dec_whh_ref[g], preferred_element_type=f32) + dec_bhh_ref[g]
            return gi, gh

        gi_r, gh_r = gates(0)
        gi_z, gh_z = gates(1)
        gi_n, gh_n = gates(2)
        r = jax.nn.sigmoid(gi_r + gh_r)
        z = jax.nn.sigmoid(gi_z + gh_z)
        n = jnp.tanh(gi_n + r * gh_n)
        h_new = (1.0 - z) * n + z * hidden                             # (B, 2H)

        # output projection to codebook logits (split matmuls, concat-free)
        logits = (jnp.dot(h_new, out_wh_ref[...], preferred_element_type=f32)
                  + jnp.dot(ctx, out_wc_ref[...], preferred_element_type=f32)
                  + jnp.dot(x_emb, out_we_ref[...], preferred_element_type=f32)
                  + out_b_ref[...])                                    # (B, CB)
        logits_ref[t] = logits

        # argmax over codebook (first index of the max, like torch.argmax)
        mval = jnp.max(logits, axis=-1, keepdims=True)
        top1_f = jnp.min(jnp.where(logits >= mval, iota, float(CBk)),
                         axis=-1, keepdims=True)                       # (B, 1)
        preds_ref[t] = top1_f.astype(jnp.int32)

        # next decoder input: teacher-forcing blend + embedding gather (one-hot matmul)
        pred_oh = (iota == top1_f).astype(f32)                         # (B, CB)
        tf = tf_ref[t]                                                 # (1, 1)
        next_oh = tf * tgt_oh_ref[t] + (1.0 - tf) * pred_oh
        x_next = jnp.dot(next_oh, emb_ref[...], preferred_element_type=f32)  # (B, E)
        return (h_new, x_next)

    lax.fori_loop(0, T, dec_body, (hidden0, jnp.zeros((Bk, E), f32)))


# ----------------------------- jitted forward ----------------------------------------
@jax.jit
def _forward_jit(params, inp, target, tf_mask):
    x2 = jnp.transpose(inp, (1, 0, 2)).reshape(SRC_LEN * B, EMB)
    tgt_oh_tm = jnp.transpose(jax.nn.one_hot(target, CB, dtype=jnp.float32), (1, 0, 2))

    logits_tm, preds_tm = pl.pallas_call(
        seq2seq_kernel,
        out_shape=(
            jax.ShapeDtypeStruct((TGT_LEN, B, CB), jnp.float32),
            jax.ShapeDtypeStruct((TGT_LEN, B, 1), jnp.int32),
        ),
        in_specs=[_VMEM] * 21,
        out_specs=(_VMEM, _VMEM),
        scratch_shapes=[
            pltpu.VMEM((3 * SRC_LEN, B, HID), jnp.float32),   # hoisted fwd gi (r,z,n)
            pltpu.VMEM((3 * SRC_LEN, B, HID), jnp.float32),   # hoisted bwd gi (r,z,n)
            pltpu.VMEM((SRC_LEN, B, HID), jnp.float32),       # fwd encoder outputs
            pltpu.VMEM((SRC_LEN, B, HID), jnp.float32),       # bwd encoder outputs
        ],
    )(x2, tgt_oh_tm, tf_mask,
      params['enc_wih'], params['enc_whh'], params['enc_bih'], params['enc_bhh'],
      params['attn_wh'], params['attn_we'], params['attn_b'], params['attn_v'],
      params['dec_wih_e'], params['dec_wih_c'], params['dec_whh'],
      params['dec_bih'], params['dec_bhh'],
      params['out_wh'], params['out_wc'], params['out_we'], params['out_b'],
      params['emb_table'])

    outputs = jnp.transpose(logits_tm, (1, 0, 2))           # (B, T, CB)
    preds = jnp.transpose(preds_tm[:, :, 0], (1, 0))        # (B, T)
    return outputs, preds


def seq2seq_forward(params, inp, target, teacher_forcing_ratio):
    """inp: (B, SRC_LEN, EMB) f32; target: (B, TGT_LEN) int32 codebook indices.
    Returns (outputs (B, TGT_LEN, CB), preds (B, TGT_LEN))."""
    # Python-side coin flips (like torch's per-step random.random()), precomputed so the
    # whole forward is one jit / one pallas_call (also fixes the jit-freeze hazard).
    flips = [1.0 if random.random() <= teacher_forcing_ratio else 0.0
             for _ in range(TGT_LEN)]
    tf_mask = jnp.asarray(flips, jnp.float32).reshape(TGT_LEN, 1, 1)
    return _forward_jit(params, inp, target, tf_mask)


# TODO(synk): Seq2Seq.inference is the same fused decode with tf_mask = zeros and
#             config.output_len steps; not duplicated here.
# TODO(synk): for non-toy sizes, pad CB->128 / batch->8+ and add a parallel batch grid
#             axis (dimension_semantics=("parallel",)) so v7x's two TensorCores split it.


# ----------------------------- parameter init ---------------------------------------
def init_params(key):
    ks = jax.random.split(key, 16)
    s = 0.1
    f32 = jnp.float32
    # Weights are stored per gate (r, z, n) and per input block, which is equivalent to
    # the standard fused GRU/linear layouts split along their gate / input axes.
    p = {
        # encoder (bidirectional GRU, 1 layer): [direction, gate, in, H]
        'enc_wih': jax.random.normal(ks[0], (2, 3, EMB, HID), f32) * s,
        'enc_whh': jax.random.normal(ks[1], (2, 3, HID, HID), f32) * s,
        'enc_bih': jnp.zeros((2, 3, 1, HID), f32),
        'enc_bhh': jnp.zeros((2, 3, 1, HID), f32),
        # additive attention: split into hidden-side and encoder-side halves
        'attn_wh': jax.random.normal(ks[2], (DEC_HID, ATTN), f32) * s,
        'attn_we': jax.random.normal(ks[3], (DEC_HID, ATTN), f32) * s,
        'attn_b': jnp.zeros((1, ATTN), f32),
        'attn_v': jax.random.normal(ks[4], (1, ATTN), f32) * s,
        # decoder GRU (hidden = 2*HID): input weights split into emb / context parts
        'dec_wih_e': jax.random.normal(ks[5], (3, EMB, DEC_HID), f32) * s,
        'dec_wih_c': jax.random.normal(ks[6], (3, DEC_HID, DEC_HID), f32) * s,
        'dec_whh': jax.random.normal(ks[7], (3, DEC_HID, DEC_HID), f32) * s,
        'dec_bih': jnp.zeros((3, 1, DEC_HID), f32),
        'dec_bhh': jnp.zeros((3, 1, DEC_HID), f32),
        # output projection (split over [hidden | context | emb] input blocks)
        'out_wh': jax.random.normal(ks[8], (DEC_HID, CB), f32) * s,
        'out_wc': jax.random.normal(ks[9], (DEC_HID, CB), f32) * s,
        'out_we': jax.random.normal(ks[10], (EMB, CB), f32) * s,
        'out_b': jnp.zeros((1, CB), f32),
        # decoder token embedding table (cb_size -> emb_dim)
        'emb_table': jax.random.normal(ks[11], (CB, EMB), f32) * s,
    }
    return p


# ----------------------------- main --------------------------------------------------
if __name__ == "__main__":
    random.seed(0)  # deterministic teacher-forcing coin flips
    key = jax.random.PRNGKey(0)
    kp, kx, kt = jax.random.split(key, 3)

    params = init_params(kp)
    inp = jax.random.normal(kx, (B, SRC_LEN, EMB), jnp.float32)
    target = jax.random.randint(kt, (B, TGT_LEN), 0, CB, jnp.int32)

    outputs, preds = seq2seq_forward(params, inp, target, teacher_forcing_ratio=0.5)
    outputs = jax.block_until_ready(outputs)
    preds = jax.block_until_ready(preds)

    assert outputs.shape == (B, TGT_LEN, CB) and outputs.dtype == jnp.float32
    assert preds.shape == (B, TGT_LEN)
    assert bool(jnp.all(jnp.isfinite(outputs)))
    assert bool(jnp.all((preds >= 0) & (preds < CB)))
    print("KERNEL_OK")
</pallas_src>

<mosaic_0001>
module attributes {stable_mosaic.version = 11 : i64} {
  func.func @seq2seq_kernel(%arg0: memref<16x32xf32, #tpu.memory_space<vmem>>, %arg1: memref<8x2x64xf32, #tpu.memory_space<vmem>>, %arg2: memref<8x1x1xf32, #tpu.memory_space<vmem>>, %arg3: memref<2x3x32x32xf32, #tpu.memory_space<vmem>>, %arg4: memref<2x3x32x32xf32, #tpu.memory_space<vmem>>, %arg5: memref<2x3x1x32xf32, #tpu.memory_space<vmem>>, %arg6: memref<2x3x1x32xf32, #tpu.memory_space<vmem>>, %arg7: memref<64x32xf32, #tpu.memory_space<vmem>>, %arg8: memref<64x32xf32, #tpu.memory_space<vmem>>, %arg9: memref<1x32xf32, #tpu.memory_space<vmem>>, %arg10: memref<1x32xf32, #tpu.memory_space<vmem>>, %arg11: memref<3x32x64xf32, #tpu.memory_space<vmem>>, %arg12: memref<3x64x64xf32, #tpu.memory_space<vmem>>, %arg13: memref<3x64x64xf32, #tpu.memory_space<vmem>>, %arg14: memref<3x1x64xf32, #tpu.memory_space<vmem>>, %arg15: memref<3x1x64xf32, #tpu.memory_space<vmem>>, %arg16: memref<64x64xf32, #tpu.memory_space<vmem>>, %arg17: memref<64x64xf32, #tpu.memory_space<vmem>>, %arg18: memref<32x64xf32, #tpu.memory_space<vmem>>, %arg19: memref<1x64xf32, #tpu.memory_space<vmem>>, %arg20: memref<64x32xf32, #tpu.memory_space<vmem>>, %arg21: memref<8x2x64xf32, #tpu.memory_space<vmem>>, %arg22: memref<8x2x1xi32, #tpu.memory_space<vmem>>, %arg23: memref<24x2x32xf32, #tpu.memory_space<vmem>>, %arg24: memref<24x2x32xf32, #tpu.memory_space<vmem>>, %arg25: memref<8x2x32xf32, #tpu.memory_space<vmem>>, %arg26: memref<8x2x32xf32, #tpu.memory_space<vmem>>) attributes {dimension_semantics = [], scalar_prefetch = 0 : i64, scratch_operands = 4 : i64, tpu.core_type = #tpu.core_type<tc>} {
    %c0 = arith.constant 0 : index
    %c0_0 = arith.constant 0 : index
    %0 = vector.load %arg0[%c0, %c0_0] : memref<16x32xf32, #tpu.memory_space<vmem>>, vector<16x32xf32>
    %c0_1 = arith.constant 0 : index
    %c0_2 = arith.constant 0 : index
    %c0_3 = arith.constant 0 : index
    %c0_4 = arith.constant 0 : index
    %1 = vector.load %arg3[%c0_1, %c0_2, %c0_3, %c0_4] : memref<2x3x32x32xf32, #tpu.memory_space<vmem>>, vector<1x1x32x32xf32>
    %2 = vector.shape_cast %1 : vector<1x1x32x32xf32> to vector<32x32xf32>
    %cst = arith.constant dense<0.000000e+00> : vector<16x32xf32>
    %3 = tpu.matmul %0, %2, %cst {dimension_numbers = #tpu.dot_dimension_numbers<[1], [0], [0], [1], [0, 0, 1, 1], [], []>} : vector<16x32xf32>, vector<32x32xf32>, vector<16x32xf32> -> vector<16x32xf32>
    %c0_5 = arith.constant 0 : index
    %c0_6 = arith.constant 0 : index
    %c0_7 = arith.constant 0 : index
    %c0_8 = arith.constant 0 : index
    %4 = vector.load %arg5[%c0_5, %c0_6, %c0_7, %c0_8] : memref<2x3x1x32xf32, #tpu.memory_space<vmem>>, vector<1x1x1x32xf32>
    %5 = vector.shape_cast %4 : vector<1x1x1x32xf32> to vector<1x32xf32>
    %6 = vector.broadcast %5 : vector<1x32xf32> to vector<16x32xf32>
    %7 = arith.addf %3, %6 : vector<16x32xf32>
    %8 = vector.shape_cast %7 : vector<16x32xf32> to vector<8x2x32xf32>
    %c0_9 = arith.constant 0 : index
    %c0_10 = arith.constant 0 : index
    %c0_11 = arith.constant 0 : index
    %9 = vector.load %arg23[%c0_9, %c0_10, %c0_11] : memref<24x2x32xf32, #tpu.memory_space<vmem>>, vector<8x2x32xf32>
    tpu.vector_store %arg23[%c0_9, %c0_10, %c0_11], %8 {strides = array<i32>} : memref<24x2x32xf32, #tpu.memory_space<vmem>>, vector<8x2x32xf32>,
    %c1 = arith.constant 1 : index
    %c0_12 = arith.constant 0 : index
    %c0_13 = arith.constant 0 : index
    %c0_14 = arith.constant 0 : index
    %10 = vector.load %arg3[%c1, %c0_12, %c0_13, %c0_14] : memref<2x3x32x32xf32, #tpu.memory_space<vmem>>, vector<1x1x32x32xf32>
    %11 = vector.shape_cast %10 : vector<1x1x32x32xf32> to vector<32x32xf32>
    %cst_15 = arith.constant dense<0.000000e+00> : vector<16x32xf32>
    %12 = tpu.matmul %0, %11, %cst_15 {dimension_numbers = #tpu.dot_dimension_numbers<[1], [0], [0], [1], [0, 0, 1, 1], [], []>} : vector<16x32xf32>, vector<32x32xf32>, vector<16x32xf32> -> vector<16x32xf32>
    %c1_16 = arith.constant 1 : index
    %c0_17 = arith.constant 0 : index
    %c0_18 = arith.constant 0 : index
    %c0_19 = arith.constant 0 : index
    %13 = vector.load %arg5[%c1_16, %c0_17, %c0_18, %c0_19] : memref<2x3x1x32xf32, #tpu.memory_space<vmem>>, vector<1x1x1x32xf32>
    %14 = vector.shape_cast %13 : vector<1x1x1x32xf32> to vector<1x32xf32>
    %15 = vector.broadcast %14 : vector<1x32xf32> to vector<16x32xf32>
    %16 = arith.addf %12, %15 : vector<16x32xf32>
    %17 = vector.shape_cast %16 : vector<16x32xf32> to vector<8x2x32xf32>
    %c0_20 = arith.constant 0 : index
    %c0_21 = arith.constant 0 : index
    %c0_22 = arith.constant 0 : index
    %18 = vector.load %arg24[%c0_20, %c0_21, %c0_22] : memref<24x2x32xf32, #tpu.memory_space<vmem>>, vector<8x2x32xf32>
    tpu.vector_store %arg24[%c0_20, %c0_21, %c0_22], %17 {strides = array<i32>} : memref<24x2x32xf32, #tpu.memory_space<vmem>>, vector<8x2x32xf32>,
    %c0_23 = arith.constant 0 : index
    %c1_24 = arith.constant 1 : index
    %c0_25 = arith.constant 0 : index
    %c0_26 = arith.constant 0 : index
    %19 = vector.load %arg3[%c0_23, %c1_24, %c0_25, %c0_26] : memref<2x3x32x32xf32, #tpu.memory_space<vmem>>, vector<1x1x32x32xf32>
    %20 = vector.shape_cast %19 : vector<1x1x32x32xf32> to vector<32x32xf32>
    %cst_27 = arith.constant dense<0.000000e+00> : vector<16x32xf32>
    %21 = tpu.matmul %0, %20, %cst_27 {dimension_numbers = #tpu.dot_dimension_numbers<[1], [0], [0], [1], [0, 0, 1, 1], [], []>} : vector<16x32xf32>, vector<32x32xf32>, vector<16x32xf32> -> vector<16x32xf32>
    %c0_28 = arith.constant 0 : index
    %c1_29 = arith.constant 1 : index
    %c0_30 = arith.constant 0 : index
    %c0_31 = arith.constant 0 : index
    %22 = vector.load %arg5[%c0_28, %c1_29, %c0_30, %c0_31] : memref<2x3x1x32xf32, #tpu.memory_space<vmem>>, vector<1x1x1x32xf32>
    %23 = vector.shape_cast %22 : vector<1x1x1x32xf32> to vector<1x32xf32>
    %24 = vector.broadcast %23 : vector<1x32xf32> to vector<16x32xf32>
    %25 = arith.addf %21, %24 : vector<16x32xf32>
    %26 = vector.shape_cast %25 : vector<16x32xf32> to vector<8x2x32xf32>
    %c8 = arith.constant 8 : index
    %c0_32 = arith.constant 0 : index
    %c0_33 = arith.constant 0 : index
    %27 = vector.load %arg23[%c8, %c0_32, %c0_33] : memref<24x2x32xf32, #tpu.memory_space<vmem>>, vector<8x2x32xf32>
    tpu.vector_store %arg23[%c8, %c0_32, %c0_33], %26 {strides = array<i32>} : memref<24x2x32xf32, #tpu.memory_space<vmem>>, vector<8x2x32xf32>,
    %c1_34 = arith.constant 1 : index
    %c1_35 = arith.constant 1 : index
    %c0_36 = arith.constant 0 : index
    %c0_37 = arith.constant 0 : index
    %28 = vector.load %arg3[%c1_34, %c1_35, %c0_36, %c0_37] : memref<2x3x32x32xf32, #tpu.memory_space<vmem>>, vector<1x1x32x32xf32>
    %29 = vector.shape_cast %28 : vector<1x1x32x32xf32> to vector<32x32xf32>
    %cst_38 = arith.constant dense<0.000000e+00> : vector<16x32xf32>
    %30 = tpu.matmul %0, %29, %cst_38 {dimension_numbers = #tpu.dot_dimension_numbers<[1], [0], [0], [1], [0, 0, 1, 1], [], []>} : vector<16x32xf32>, vector<32x32xf32>, vector<16x32xf32> -> vector<16x32xf32>
    %c1_39 = arith.constant 1 : index
    %c1_40 = arith.constant 1 : index
    %c0_41 = arith.constant 0 : index
    %c0_42 = arith.constant 0 : index
    %31 = vector.load %arg5[%c1_39, %c1_40, %c0_41, %c0_42] : memref<2x3x1x32xf32, #tpu.memory_space<vmem>>, vector<1x1x1x32xf32>
    %32 = vector.shape_cast %31 : vector<1x1x1x32xf32> to vector<1x32xf32>
    %33 = vector.broadcast %32 : vector<1x32xf32> to vector<16x32xf32>
    %34 = arith.addf %30, %33 : vector<16x32xf32>
    %35 = vector.shape_cast %34 : vector<16x32xf32> to vector<8x2x32xf32>
    %c8_43 = arith.constant 8 : index
    %c0_44 = arith.constant 0 : index
    %c0_45 = arith.constant 0 : index
    %36 = vector.load %arg24[%c8_43, %c0_44, %c0_45] : memref<24x2x32xf32, #tpu.memory_space<vmem>>, vector<8x2x32xf32>
    tpu.vector_store %arg24[%c8_43, %c0_44, %c0_45], %35 {strides = array<i32>} : memref<24x2x32xf32, #tpu.memory_space<vmem>>, vector<8x2x32xf32>,
    %c0_46 = arith.constant 0 : index
    %c2 = arith.constant 2 : index
    %c0_47 = arith.constant 0 : index
    %c0_48 = arith.constant 0 : index
    %37 = vector.load %arg3[%c0_46, %c2, %c0_47, %c0_48] : memref<2x3x32x32xf32, #tpu.memory_space<vmem>>, vector<1x1x32x32xf32>
    %38 = vector.shape_cast %37 : vector<1x1x32x32xf32> to vector<32x32xf32>
    %cst_49 = arith.constant dense<0.000000e+00> : vector<16x32xf32>
    %39 = tpu.matmul %0, %38, %cst_49 {dimension_numbers = #tpu.dot_dimension_numbers<[1], [0], [0], [1], [0, 0, 1, 1], [], []>} : vector<16x32xf32>, vector<32x32xf32>, vector<16x32xf32> -> vector<16x32xf32>
    %c0_50 = arith.constant 0 : index
    %c2_51 = arith.constant 2 : index
    %c0_52 = arith.constant 0 : index
    %c0_53 = arith.constant 0 : index
    %40 = vector.load %arg5[%c0_50, %c2_51, %c0_52, %c0_53] : memref<2x3x1x32xf32, #tpu.memory_space<vmem>>, vector<1x1x1x32xf32>
    %41 = vector.shape_cast %40 : vector<1x1x1x32xf32> to vector<1x32xf32>
    %42 = vector.broadcast %41 : vector<1x32xf32> to vector<16x32xf32>
    %43 = arith.addf %39, %42 : vector<16x32xf32>
    %44 = vector.shape_cast %43 : vector<16x32xf32> to vector<8x2x32xf32>
    %c16 = arith.constant 16 : index
    %c0_54 = arith.constant 0 : index
    %c0_55 = arith.constant 0 : index
    %45 = vector.load %arg23[%c16, %c0_54, %c0_55] : memref<24x2x32xf32, #tpu.memory_space<vmem>>, vector<8x2x32xf32>
    tpu.vector_store %arg23[%c16, %c0_54, %c0_55], %44 {strides = array<i32>} : memref<24x2x32xf32, #tpu.memory_space<vmem>>, vector<8x2x32xf32>,
    %c1_56 = arith.constant 1 : index
    %c2_57 = arith.constant 2 : index
    %c0_58 = arith.constant 0 : index
    %c0_59 = arith.constant 0 : index
    %46 = vector.load %arg3[%c1_56, %c2_57, %c0_58, %c0_59] : memref<2x3x32x32xf32, #tpu.memory_space<vmem>>, vector<1x1x32x32xf32>
    %47 = vector.shape_cast %46 : vector<1x1x32x32xf32> to vector<32x32xf32>
    %cst_60 = arith.constant dense<0.000000e+00> : vector<16x32xf32>
    %48 = tpu.matmul %0, %47, %cst_60 {dimension_numbers = #tpu.dot_dimension_numbers<[1], [0], [0], [1], [0, 0, 1, 1], [], []>} : vector<16x32xf32>, vector<32x32xf32>, vector<16x32xf32> -> vector<16x32xf32>
    %c1_61 = arith.constant 1 : index
    %c2_62 = arith.constant 2 : index
    %c0_63 = arith.constant 0 : index
    %c0_64 = arith.constant 0 : index
    %49 = vector.load %arg5[%c1_61, %c2_62, %c0_63, %c0_64] : memref<2x3x1x32xf32, #tpu.memory_space<vmem>>, vector<1x1x1x32xf32>
    %50 = vector.shape_cast %49 : vector<1x1x1x32xf32> to vector<1x32xf32>
    %51 = vector.broadcast %50 : vector<1x32xf32> to vector<16x32xf32>
    %52 = arith.addf %48, %51 : vector<16x32xf32>
    %53 = vector.shape_cast %52 : vector<16x32xf32> to vector<8x2x32xf32>
    %c16_65 = arith.constant 16 : index
    %c0_66 = arith.constant 0 : index
    %c0_67 = arith.constant 0 : index
    %54 = vector.load %arg24[%c16_65, %c0_66, %c0_67] : memref<24x2x32xf32, #tpu.memory_space<vmem>>, vector<8x2x32xf32>
    tpu.vector_store %arg24[%c16_65, %c0_66, %c0_67], %53 {strides = array<i32>} : memref<24x2x32xf32, #tpu.memory_space<vmem>>, vector<8x2x32xf32>,
    %cst_68 = arith.constant 0.000000e+00 : f32
    %55 = vector.broadcast %cst_68 : f32 to vector<2x32xf32>
    %c0_i32 = arith.constant 0 : i32
    %c8_i32 = arith.constant 8 : i32
    %56 = arith.addi %c0_i32, %c8_i32 : i32
    %c1_i32 = arith.constant 1 : i32
    %57:2 = scf.for %arg27 = %c0_i32 to %56 step %c1_i32 iter_args(%arg28 = %55, %arg29 = %55) -> (vector<2x32xf32>, vector<2x32xf32>)  : i32 {
      %c7_i32 = arith.constant 7 : i32
      %75 = arith.subi %c7_i32, %arg27 : i32
      %76 = arith.index_cast %arg27 : i32 to index
      %c0_88 = arith.constant 0 : index
      %c0_89 = arith.constant 0 : index
      %77 = vector.load %arg23[%76, %c0_88, %c0_89] : memref<24x2x32xf32, #tpu.memory_space<vmem>>, vector<1x2x32xf32>
      %78 = vector.shape_cast %77 : vector<1x2x32xf32> to vector<2x32xf32>
      %c8_i32_90 = arith.constant 8 : i32
      %79 = arith.addi %c8_i32_90, %arg27 : i32
      %80 = arith.index_cast %79 : i32 to index
      %c0_91 = arith.constant 0 : index
      %c0_92 = arith.constant 0 : index
      %81 = vector.load %arg23[%80, %c0_91, %c0_92] : memref<24x2x32xf32, #tpu.memory_space<vmem>>, vector<1x2x32xf32>
      %82 = vector.shape_cast %81 : vector<1x2x32xf32> to vector<2x32xf32>
      %c16_i32 = arith.constant 16 : i32
      %83 = arith.addi %c16_i32, %arg27 : i32
      %84 = arith.index_cast %83 : i32 to index
      %c0_93 = arith.constant 0 : index
      %c0_94 = arith.constant 0 : index
      %85 = vector.load %arg23[%84, %c0_93, %c0_94] : memref<24x2x32xf32, #tpu.memory_space<vmem>>, vector<1x2x32xf32>
      %86 = vector.shape_cast %85 : vector<1x2x32xf32> to vector<2x32xf32>
      %c0_95 = arith.constant 0 : index
      %c0_96 = arith.constant 0 : index
      %c0_97 = arith.constant 0 : index
      %c0_98 = arith.constant 0 : index
      %87 = vector.load %arg4[%c0_95, %c0_96, %c0_97, %c0_98] : memref<2x3x32x32xf32, #tpu.memory_space<vmem>>, vector<1x1x32x32xf32>
      %88 = vector.shape_cast %87 : vector<1x1x32x32xf32> to vector<32x32xf32>
      %cst_99 = arith.constant dense<0.000000e+00> : vector<2x32xf32>
      %89 = tpu.matmul %arg28, %88, %cst_99 {dimension_numbers = #tpu.dot_dimension_numbers<[1], [0], [0], [1], [0, 0, 1, 1], [], []>} : vector<2x32xf32>, vector<32x32xf32>, vector<2x32xf32> -> vector<2x32xf32>
      %c0_100 = arith.constant 0 : index
      %c0_101 = arith.constant 0 : index
      %c0_102 = arith.constant 0 : index
      %c0_103 = arith.constant 0 : index
      %90 = vector.load %arg6[%c0_100, %c0_101, %c0_102, %c0_103] : memref<2x3x1x32xf32, #tpu.memory_space<vmem>>, vector<1x1x1x32xf32>
      %91 = vector.shape_cast %90 : vector<1x1x1x32xf32> to vector<1x32xf32>
      %92 = vector.broadcast %91 : vector<1x32xf32> to vector<2x32xf32>
      %93 = arith.addf %89, %92 : vector<2x32xf32>
      %c0_104 = arith.constant 0 : index
      %c1_105 = arith.constant 1 : index
      %c0_106 = arith.constant 0 : index
      %c0_107 = arith.constant 0 : index
      %94 = vector.load %arg4[%c0_104, %c1_105, %c0_106, %c0_107] : memref<2x3x32x32xf32, #tpu.memory_space<vmem>>, vector<1x1x32x32xf32>
      %95 = vector.shape_cast %94 : vector<1x1x32x32xf32> to vector<32x32xf32>
      %cst_108 = arith.constant dense<0.000000e+00> : vector<2x32xf32>
      %96 = tpu.matmul %arg28, %95, %cst_108 {dimension_numbers = #tpu.dot_dimension_numbers<[1], [0], [0], [1], [0, 0, 1, 1], [], []>} : vector<2x32xf32>, vector<32x32xf32>, vector<2x32xf32> -> vector<2x32xf32>
      %c0_109 = arith.constant 0 : index
      %c1_110 = arith.constant 1 : index
      %c0_111 = arith.constant 0 : index
      %c0_112 = arith.constant 0 : index
      %97 = vector.load %arg6[%c0_109, %c1_110, %c0_111, %c0_112] : memref<2x3x1x32xf32, #tpu.memory_space<vmem>>, vector<1x1x1x32xf32>
      %98 = vector.shape_cast %97 : vector<1x1x1x32xf32> to vector<1x32xf32>
      %99 = vector.broadcast %98 : vector<1x32xf32> to vector<2x32xf32>
      %100 = arith.addf %96, %99 : vector<2x32xf32>
      %c0_113 = arith.constant 0 : index
      %c2_114 = arith.constant 2 : index
      %c0_115 = arith.constant 0 : index
      %c0_116 = arith.constant 0 : index
      %101 = vector.load %arg4[%c0_113, %c2_114, %c0_115, %c0_116] : memref<2x3x32x32xf32, #tpu.memory_space<vmem>>, vector<1x1x32x32xf32>
      %102 = vector.shape_cast %101 : vector<1x1x32x32xf32> to vector<32x32xf32>
      %cst_117 = arith.constant dense<0.000000e+00> : vector<2x32xf32>
      %103 = tpu.matmul %arg28, %102, %cst_117 {dimension_numbers = #tpu.dot_dimension_numbers<[1], [0], [0], [1], [0, 0, 1, 1], [], []>} : vector<2x32xf32>, vector<32x32xf32>, vector<2x32xf32> -> vector<2x32xf32>
      %c0_118 = arith.constant 0 : index
      %c2_119 = arith.constant 2 : index
      %c0_120 = arith.constant 0 : index
      %c0_121 = arith.constant 0 : index
      %104 = vector.load %arg6[%c0_118, %c2_119, %c0_120, %c0_121] : memref<2x3x1x32xf32, #tpu.memory_space<vmem>>, vector<1x1x1x32xf32>
      %105 = vector.shape_cast %104 : vector<1x1x1x32xf32> to vector<1x32xf32>
      %106 = vector.broadcast %105 : vector<1x32xf32> to vector<2x32xf32>
      %107 = arith.addf %103, %106 : vector<2x32xf32>
      %108 = arith.addf %78, %93 : vector<2x32xf32>
      %109 = arith.negf %108 : vector<2x32xf32>
      %110 = math.exp %109 : vector<2x32xf32>
      %cst_122 = arith.constant 1.000000e+00 : f32
      %111 = vector.broadcast %cst_122 : f32 to vector<2x32xf32>
      %112 = arith.addf %111, %110 : vector<2x32xf32>
      %113 = arith.divf %111, %112 : vector<2x32xf32>
      %114 = arith.addf %82, %100 : vector<2x32xf32>
      %115 = arith.negf %114 : vector<2x32xf32>
      %116 = math.exp %115 : vector<2x32xf32>
      %cst_123 = arith.constant 1.000000e+00 : f32
      %117 = vector.broadcast %cst_123 : f32 to vector<2x32xf32>
      %118 = arith.addf %117, %116 : vector<2x32xf32>
      %119 = arith.divf %117, %118 : vector<2x32xf32>
      %120 = arith.mulf %113, %107 : vector<2x32xf32>
      %121 = arith.addf %86, %120 : vector<2x32xf32>
      %122 = math.tanh %121 : vector<2x32xf32>
      %cst_124 = arith.constant 1.000000e+00 : f32
      %123 = vector.broadcast %cst_124 : f32 to vector<2x32xf32>
      %124 = arith.subf %123, %119 : vector<2x32xf32>
      %125 = arith.mulf %124, %122 : vector<2x32xf32>
      %126 = arith.mulf %119, %arg28 : vector<2x32xf32>
      %127 = arith.addf %125, %126 : vector<2x32xf32>
      %128 = arith.index_cast %arg27 : i32 to index
      %c0_125 = arith.constant 0 : index
      %c0_126 = arith.constant 0 : index
      %129 = vector.load %arg25[%128, %c0_125, %c0_126] : memref<8x2x32xf32, #tpu.memory_space<vmem>>, vector<1x2x32xf32>
      %130 = vector.shape_cast %129 : vector<1x2x32xf32> to vector<2x32xf32>
      %131 = vector.shape_cast %127 : vector<2x32xf32> to vector<1x2x32xf32>
      tpu.vector_store %arg25[%128, %c0_125, %c0_126], %131 {strides = array<i32>} : memref<8x2x32xf32, #tpu.memory_space<vmem>>, vector<1x2x32xf32>,
      %132 = arith.index_cast %75 : i32 to index
      %c0_127 = arith.constant 0 : index
      %c0_128 = arith.constant 0 : index
      %133 = vector.load %arg24[%132, %c0_127, %c0_128] : memref<24x2x32xf32, #tpu.memory_space<vmem>>, vector<1x2x32xf32>
      %134 = vector.shape_cast %133 : vector<1x2x32xf32> to vector<2x32xf32>
      %c8_i32_129 = arith.constant 8 : i32
      %135 = arith.addi %c8_i32_129, %75 : i32
      %136 = arith.index_cast %135 : i32 to index
      %c0_130 = arith.constant 0 : index
      %c0_131 = arith.constant 0 : index
      %137 = vector.load %arg24[%136, %c0_130, %c0_131] : memref<24x2x32xf32, #tpu.memory_space<vmem>>, vector<1x2x32xf32>
      %138 = vector.shape_cast %137 : vector<1x2x32xf32> to vector<2x32xf32>
      %c16_i32_132 = arith.constant 16 : i32
      %139 = arith.addi %c16_i32_132, %75 : i32
      %140 = arith.index_cast %139 : i32 to index
      %c0_133 = arith.constant 0 : index
      %c0_134 = arith.constant 0 : index
      %141 = vector.load %arg24[%140, %c0_133, %c0_134] : memref<24x2x32xf32, #tpu.memory_space<vmem>>, vector<1x2x32xf32>
      %142 = vector.shape_cast %141 : vector<1x2x32xf32> to vector<2x32xf32>
      %c1_135 = arith.constant 1 : index
      %c0_136 = arith.constant 0 : index
      %c0_137 = arith.constant 0 : index
      %c0_138 = arith.constant 0 : index
      %143 = vector.load %arg4[%c1_135, %c0_136, %c0_137, %c0_138] : memref<2x3x32x32xf32, #tpu.memory_space<vmem>>, vector<1x1x32x32xf32>
      %144 = vector.shape_cast %143 : vector<1x1x32x32xf32> to vector<32x32xf32>
      %cst_139 = arith.constant dense<0.000000e+00> : vector<2x32xf32>
      %145 = tpu.matmul %arg29, %144, %cst_139 {dimension_numbers = #tpu.dot_dimension_numbers<[1], [0], [0], [1], [0, 0, 1, 1], [], []>} : vector<2x32xf32>, vector<32x32xf32>, vector<2x32xf32> -> vector<2x32xf32>
      %c1_140 = arith.constant 1 : index
      %c0_141 = arith.constant 0 : index
      %c0_142 = arith.constant 0 : index
      %c0_143 = arith.constant 0 : index
      %146 = vector.load %arg6[%c1_140, %c0_141, %c0_142, %c0_143] : memref<2x3x1x32xf32, #tpu.memory_space<vmem>>, vector<1x1x1x32xf32>
      %147 = vector.shape_cast %146 : vector<1x1x1x32xf32> to vector<1x32xf32>
      %148 = vector.broadcast %147 : vector<1x32xf32> to vector<2x32xf32>
      %149 = arith.addf %145, %148 : vector<2x32xf32>
      %c1_144 = arith.constant 1 : index
      %c1_145 = arith.constant 1 : index
      %c0_146 = arith.constant 0 : index
      %c0_147 = arith.constant 0 : index
      %150 = vector.load %arg4[%c1_144, %c1_145, %c0_146, %c0_147] : memref<2x3x32x32xf32, #tpu.memory_space<vmem>>, vector<1x1x32x32xf32>
      %151 = vector.shape_cast %150 : vector<1x1x32x32xf32> to vector<32x32xf32>
      %cst_148 = arith.constant dense<0.000000e+00> : vector<2x32xf32>
      %152 = tpu.matmul %arg29, %151, %cst_148 {dimension_numbers = #tpu.dot_dimension_numbers<[1], [0], [0], [1], [0, 0, 1, 1], [], []>} : vector<2x32xf32>, vector<32x32xf32>, vector<2x32xf32> -> vector<2x32xf32>
      %c1_149 = arith.constant 1 : index
      %c1_150 = arith.constant 1 : index
      %c0_151 = arith.constant 0 : index
      %c0_152 = arith.constant 0 : index
      %153 = vector.load %arg6[%c1_149, %c1_150, %c0_151, %c0_152] : memref<2x3x1x32xf32, #tpu.memory_space<vmem>>, vector<1x1x1x32xf32>
      %154 = vector.shape_cast %153 : vector<1x1x1x32xf32> to vector<1x32xf32>
      %155 = vector.broadcast %154 : vector<1x32xf32> to vector<2x32xf32>
      %156 = arith.addf %152, %155 : vector<2x32xf32>
      %c1_153 = arith.constant 1 : index
      %c2_154 = arith.constant 2 : index
      %c0_155 = arith.constant 0 : index
      %c0_156 = arith.constant 0 : index
      %157 = vector.load %arg4[%c1_153, %c2_154, %c0_155, %c0_156] : memref<2x3x32x32xf32, #tpu.memory_space<vmem>>, vector<1x1x32x32xf32>
      %158 = vector.shape_cast %157 : vector<1x1x32x32xf32> to vector<32x32xf32>
      %cst_157 = arith.constant dense<0.000000e+00> : vector<2x32xf32>
      %159 = tpu.matmul %arg29, %158, %cst_157 {dimension_numbers = #tpu.dot_dimension_numbers<[1], [0], [0], [1], [0, 0, 1, 1], [], []>} : vector<2x32xf32>, vector<32x32xf32>, vector<2x32xf32> -> vector<2x32xf32>
      %c1_158 = arith.constant 1 : index
      %c2_159 = arith.constant 2 : index
      %c0_160 = arith.constant 0 : index
      %c0_161 = arith.constant 0 : index
      %160 = vector.load %arg6[%c1_158, %c2_159, %c0_160, %c0_161] : memref<2x3x1x32xf32, #tpu.memory_space<vmem>>, vector<1x1x1x32xf32>
      %161 = vector.shape_cast %160 : vector<1x1x1x32xf32> to vector<1x32xf32>
      %162 = vector.broadcast %161 : vector<1x32xf32> to vector<2x32xf32>
      %163 = arith.addf %159, %162 : vector<2x32xf32>
      %164 = arith.addf %134, %149 : vector<2x32xf32>
      %165 = arith.negf %164 : vector<2x32xf32>
      %166 = math.exp %165 : vector<2x32xf32>
      %cst_162 = arith.constant 1.000000e+00 : f32
      %167 = vector.broadcast %cst_162 : f32 to vector<2x32xf32>
      %168 = arith.addf %167, %166 : vector<2x32xf32>
      %169 = arith.divf %167, %168 : vector<2x32xf32>
      %170 = arith.addf %138, %156 : vector<2x32xf32>
      %171 = arith.negf %170 : vector<2x32xf32>
      %172 = math.exp %171 : vector<2x32xf32>
      %cst_163 = arith.constant 1.000000e+00 : f32
      %173 = vector.broadcast %cst_163 : f32 to vector<2x32xf32>
      %174 = arith.addf %173, %172 : vector<2x32xf32>
      %175 = arith.divf %173, %174 : vector<2x32xf32>
      %176 = arith.mulf %169, %163 : vector<2x32xf32>
      %177 = arith.addf %142, %176 : vector<2x32xf32>
      %178 = math.tanh %177 : vector<2x32xf32>
      %cst_164 = arith.constant 1.000000e+00 : f32
      %179 = vector.broadcast %cst_164 : f32 to vector<2x32xf32>
      %180 = arith.subf %179, %175 : vector<2x32xf32>
      %181 = arith.mulf %180, %178 : vector<2x32xf32>
      %182 = arith.mulf %175, %arg29 : vector<2x32xf32>
      %183 = arith.addf %181, %182 : vector<2x32xf32>
      %184 = arith.index_cast %75 : i32 to index
      %c0_165 = arith.constant 0 : index
      %c0_166 = arith.constant 0 : index
      %185 = vector.load %arg26[%184, %c0_165, %c0_166] : memref<8x2x32xf32, #tpu.memory_space<vmem>>, vector<1x2x32xf32>
      %186 = vector.shape_cast %185 : vector<1x2x32xf32> to vector<2x32xf32>
      %187 = vector.shape_cast %183 : vector<2x32xf32> to vector<1x2x32xf32>
      tpu.vector_store %arg26[%184, %c0_165, %c0_166], %187 {strides = array<i32>} : memref<8x2x32xf32, #tpu.memory_space<vmem>>, vector<1x2x32xf32>,
      scf.yield %127, %183 : vector<2x32xf32>, vector<2x32xf32>
    }
    %c8_i32_69 = arith.constant 8 : i32
    %c0_70 = arith.constant 0 : index
    %c0_71 = arith.constant 0 : index
    %c0_72 = arith.constant 0 : index
    %58 = vector.load %arg25[%c0_70, %c0_71, %c0_72] : memref<8x2x32xf32, #tpu.memory_space<vmem>>, vector<8x2x32xf32>
    %c0_73 = arith.constant 0 : index
    %c0_74 = arith.constant 0 : index
    %c0_75 = arith.constant 0 : index
    %59 = vector.load %arg26[%c0_73, %c0_74, %c0_75] : memref<8x2x32xf32, #tpu.memory_space<vmem>>, vector<8x2x32xf32>
    %60 = tpu.concatenate %58, %59 in 2 : vector<8x2x32xf32>, vector<8x2x32xf32> -> vector<8x2x64xf32>
    %61 = tpu.concatenate %57#0, %57#1 in 1 : vector<2x32xf32>, vector<2x32xf32> -> vector<2x64xf32>
    %62 = vector.shape_cast %60 : vector<8x2x64xf32> to vector<16x64xf32>
    %c0_76 = arith.constant 0 : index
    %c0_77 = arith.constant 0 : index
    %63 = vector.load %arg8[%c0_76, %c0_77] : memref<64x32xf32, #tpu.memory_space<vmem>>, vector<64x32xf32>
    %cst_78 = arith.constant dense<0.000000e+00> : vector<16x32xf32>
    %64 = tpu.matmul %62, %63, %cst_78 {dimension_numbers = #tpu.dot_dimension_numbers<[1], [0], [0], [1], [0, 0, 1, 1], [], []>} : vector<16x64xf32>, vector<64x32xf32>, vector<16x32xf32> -> vector<16x32xf32>
    %c0_79 = arith.constant 0 : index
    %c0_80 = arith.constant 0 : index
    %65 = vector.load %arg9[%c0_79, %c0_80] : memref<1x32xf32, #tpu.memory_space<vmem>>, vector<1x32xf32>
    %66 = vector.broadcast %65 : vector<1x32xf32> to vector<16x32xf32>
    %67 = arith.addf %64, %66 : vector<16x32xf32>
    %68 = vector.shape_cast %67 : vector<16x32xf32> to vector<8x2x32xf32>
    %c0_81 = arith.constant 0 : index
    %c0_82 = arith.constant 0 : index
    %69 = vector.load %arg10[%c0_81, %c0_82] : memref<1x32xf32, #tpu.memory_space<vmem>>, vector<1x32xf32>
    %70 = tpu.iota {dimensions = array<i32: 1>} : vector<2x64xi32>
    %71 = arith.sitofp %70 : vector<2x64xi32> to vector<2x64xf32>
    %cst_83 = arith.constant 0.000000e+00 : f32
    %72 = vector.broadcast %cst_83 : f32 to vector<2x32xf32>
    %c0_i32_84 = arith.constant 0 : i32
    %c8_i32_85 = arith.constant 8 : i32
    %73 = arith.addi %c0_i32_84, %c8_i32_85 : i32
    %c1_i32_86 = arith.constant 1 : i32
    %74:2 = scf.for %arg27 = %c0_i32_84 to %73 step %c1_i32_86 iter_args(%arg28 = %61, %arg29 = %72) -> (vector<2x64xf32>, vector<2x32xf32>)  : i32 {
      %c0_88 = arith.constant 0 : index
      %c0_89 = arith.constant 0 : index
      %75 = vector.load %arg7[%c0_88, %c0_89] : memref<64x32xf32, #tpu.memory_space<vmem>>, vector<64x32xf32>
      %cst_90 = arith.constant dense<0.000000e+00> : vector<2x32xf32>
      %76 = tpu.matmul %arg28, %75, %cst_90 {dimension_numbers = #tpu.dot_dimension_numbers<[1], [0], [0], [1], [0, 0, 1, 1], [], []>} : vector<2x64xf32>, vector<64x32xf32>, vector<2x32xf32> -> vector<2x32xf32>
      %77 = vector.shape_cast %76 : vector<2x32xf32> to vector<1x2x32xf32>
      %78 = vector.broadcast %77 : vector<1x2x32xf32> to vector<8x2x32xf32>
      %79 = arith.addf %78, %68 : vector<8x2x32xf32>
      %80 = math.tanh %79 : vector<8x2x32xf32>
      %81 = vector.shape_cast %69 : vector<1x32xf32> to vector<1x1x32xf32>
      %82 = vector.broadcast %81 : vector<1x1x32xf32> to vector<8x2x32xf32>
      %83 = arith.mulf %80, %82 : vector<8x2x32xf32>
      %cst_91 = arith.constant dense<0.000000e+00> : vector<8x2xf32>
      %84 = vector.multi_reduction <add>, %83, %cst_91 [2] : vector<8x2x32xf32> to vector<8x2xf32>
      %85 = vector.shape_cast %84 : vector<8x2xf32> to vector<8x2x1xf32>
      %cst_92 = arith.constant dense<0xFF800000> : vector<2x1xf32>
      %86 = vector.multi_reduction <maximumf>, %85, %cst_92 [0] : vector<8x2x1xf32> to vector<2x1xf32>
      %87 = vector.shape_cast %86 : vector<2x1xf32> to vector<1x2x1xf32>
      %88 = vector.broadcast %87 : vector<1x2x1xf32> to vector<8x2x1xf32>
      %89 = arith.subf %85, %88 : vector<8x2x1xf32>
      %90 = math.exp %89 : vector<8x2x1xf32>
      %cst_93 = arith.constant dense<0.000000e+00> : vector<2x1xf32>
      %91 = vector.multi_reduction <add>, %90, %cst_93 [0] : vector<8x2x1xf32> to vector<2x1xf32>
      %92 = vector.shape_cast %91 : vector<2x1xf32> to vector<1x2x1xf32>
      %93 = tpu.reciprocal %92 {approx = true} : vector<1x2x1xf32> -> vector<1x2x1xf32>
      %94 = vector.broadcast %93 : vector<1x2x1xf32> to vector<8x2x1xf32>
      %95 = arith.mulf %90, %94 : vector<8x2x1xf32>
      %96 = vector.broadcast %95 : vector<8x2x1xf32> to vector<8x2x64xf32>
      %97 = arith.mulf %96, %60 : vector<8x2x64xf32>
      %cst_94 = arith.constant dense<0.000000e+00> : vector<2x64xf32>
      %98 = vector.multi_reduction <add>, %97, %cst_94 [0] : vector<8x2x64xf32> to vector<2x64xf32>
      %c0_95 = arith.constant 0 : index
      %c0_96 = arith.constant 0 : index
      %c0_97 = arith.constant 0 : index
      %99 = vector.load %arg11[%c0_95, %c0_96, %c0_97] : memref<3x32x64xf32, #tpu.memory_space<vmem>>, vector<1x32x64xf32>
      %100 = vector.shape_cast %99 : vector<1x32x64xf32> to vector<32x64xf32>
      %cst_98 = arith.constant dense<0.000000e+00> : vector<2x64xf32>
      %101 = tpu.matmul %arg29, %100, %cst_98 {dimension_numbers = #tpu.dot_dimension_numbers<[1], [0], [0], [1], [0, 0, 1, 1], [], []>} : vector<2x32xf32>, vector<32x64xf32>, vector<2x64xf32> -> vector<2x64xf32>
      %c0_99 = arith.constant 0 : index
      %c0_100 = arith.constant 0 : index
      %c0_101 = arith.constant 0 : index
      %102 = vector.load %arg12[%c0_99, %c0_100, %c0_101] : memref<3x64x64xf32, #tpu.memory_space<vmem>>, vector<1x64x64xf32>
      %103 = vector.shape_cast %102 : vector<1x64x64xf32> to vector<64x64xf32>
      %cst_102 = arith.constant dense<0.000000e+00> : vector<2x64xf32>
      %104 = tpu.matmul %98, %103, %cst_102 {dimension_numbers = #tpu.dot_dimension_numbers<[1], [0], [0], [1], [0, 0, 1, 1], [], []>} : vector<2x64xf32>, vector<64x64xf32>, vector<2x64xf32> -> vector<2x64xf32>
      %105 = arith.addf %101, %104 : vector<2x64xf32>
      %c0_103 = arith.constant 0 : index
      %c0_104 = arith.constant 0 : index
      %c0_105 = arith.constant 0 : index
      %106 = vector.load %arg14[%c0_103, %c0_104, %c0_105] : memref<3x1x64xf32, #tpu.memory_space<vmem>>, vector<1x1x64xf32>
      %107 = vector.shape_cast %106 : vector<1x1x64xf32> to vector<1x64xf32>
      %108 = vector.broadcast %107 : vector<1x64xf32> to vector<2x64xf32>
      %109 = arith.addf %105, %108 : vector<2x64xf32>
      %c0_106 = arith.constant 0 : index
      %c0_107 = arith.constant 0 : index
      %c0_108 = arith.constant 0 : index
      %110 = vector.load %arg13[%c0_106, %c0_107, %c0_108] : memref<3x64x64xf32, #tpu.memory_space<vmem>>, vector<1x64x64xf32>
      %111 = vector.shape_cast %110 : vector<1x64x64xf32> to vector<64x64xf32>
      %cst_109 = arith.constant dense<0.000000e+00> : vector<2x64xf32>
      %112 = tpu.matmul %arg28, %111, %cst_109 {dimension_numbers = #tpu.dot_dimension_numbers<[1], [0], [0], [1], [0, 0, 1, 1], [], []>} : vector<2x64xf32>, vector<64x64xf32>, vector<2x64xf32> -> vector<2x64xf32>
      %c0_110 = arith.constant 0 : index
      %c0_111 = arith.constant 0 : index
      %c0_112 = arith.constant 0 : index
      %113 = vector.load %arg15[%c0_110, %c0_111, %c0_112] : memref<3x1x64xf32, #tpu.memory_space<vmem>>, vector<1x1x64xf32>
      %114 = vector.shape_cast %113 : vector<1x1x64xf32> to vector<1x64xf32>
      %115 = vector.broadcast %114 : vector<1x64xf32> to vector<2x64xf32>
      %116 = arith.addf %112, %115 : vector<2x64xf32>
      %c1_113 = arith.constant 1 : index
      %c0_114 = arith.constant 0 : index
      %c0_115 = arith.constant 0 : index
      %117 = vector.load %arg11[%c1_113, %c0_114, %c0_115] : memref<3x32x64xf32, #tpu.memory_space<vmem>>, vector<1x32x64xf32>
      %118 = vector.shape_cast %117 : vector<1x32x64xf32> to vector<32x64xf32>
      %cst_116 = arith.constant dense<0.000000e+00> : vector<2x64xf32>
      %119 = tpu.matmul %arg29, %118, %cst_116 {dimension_numbers = #tpu.dot_dimension_numbers<[1], [0], [0], [1], [0, 0, 1, 1], [], []>} : vector<2x32xf32>, vector<32x64xf32>, vector<2x64xf32> -> vector<2x64xf32>
      %c1_117 = arith.constant 1 : index
      %c0_118 = arith.constant 0 : index
      %c0_119 = arith.constant 0 : index
      %120 = vector.load %arg12[%c1_117, %c0_118, %c0_119] : memref<3x64x64xf32, #tpu.memory_space<vmem>>, vector<1x64x64xf32>
      %121 = vector.shape_cast %120 : vector<1x64x64xf32> to vector<64x64xf32>
      %cst_120 = arith.constant dense<0.000000e+00> : vector<2x64xf32>
      %122 = tpu.matmul %98, %121, %cst_120 {dimension_numbers = #tpu.dot_dimension_numbers<[1], [0], [0], [1], [0, 0, 1, 1], [], []>} : vector<2x64xf32>, vector<64x64xf32>, vector<2x64xf32> -> vector<2x64xf32>
      %123 = arith.addf %119, %122 : vector<2x64xf32>
      %c1_121 = arith.constant 1 : index
      %c0_122 = arith.constant 0 : index
      %c0_123 = arith.constant 0 : index
      %124 = vector.load %arg14[%c1_121, %c0_122, %c0_123] : memref<3x1x64xf32, #tpu.memory_space<vmem>>, vector<1x1x64xf32>
      %125 = vector.shape_cast %124 : vector<1x1x64xf32> to vector<1x64xf32>
      %126 = vector.broadcast %125 : vector<1x64xf32> to vector<2x64xf32>
      %127 = arith.addf %123, %126 : vector<2x64xf32>
      %c1_124 = arith.constant 1 : index
      %c0_125 = arith.constant 0 : index
      %c0_126 = arith.constant 0 : index
      %128 = vector.load %arg13[%c1_124, %c0_125, %c0_126] : memref<3x64x64xf32, #tpu.memory_space<vmem>>, vector<1x64x64xf32>
      %129 = vector.shape_cast %128 : vector<1x64x64xf32> to vector<64x64xf32>
      %cst_127 = arith.constant dense<0.000000e+00> : vector<2x64xf32>
      %130 = tpu.matmul %arg28, %129, %cst_127 {dimension_numbers = #tpu.dot_dimension_numbers<[1], [0], [0], [1], [0, 0, 1, 1], [], []>} : vector<2x64xf32>, vector<64x64xf32>, vector<2x64xf32> -> vector<2x64xf32>
      %c1_128 = arith.constant 1 : index
      %c0_129 = arith.constant 0 : index
      %c0_130 = arith.constant 0 : index
      %131 = vector.load %arg15[%c1_128, %c0_129, %c0_130] : memref<3x1x64xf32, #tpu.memory_space<vmem>>, vector<1x1x64xf32>
      %132 = vector.shape_cast %131 : vector<1x1x64xf32> to vector<1x64xf32>
      %133 = vector.broadcast %132 : vector<1x64xf32> to vector<2x64xf32>
      %134 = arith.addf %130, %133 : vector<2x64xf32>
      %c2_131 = arith.constant 2 : index
      %c0_132 = arith.constant 0 : index
      %c0_133 = arith.constant 0 : index
      %135 = vector.load %arg11[%c2_131, %c0_132, %c0_133] : memref<3x32x64xf32, #tpu.memory_space<vmem>>, vector<1x32x64xf32>
      %136 = vector.shape_cast %135 : vector<1x32x64xf32> to vector<32x64xf32>
      %cst_134 = arith.constant dense<0.000000e+00> : vector<2x64xf32>
      %137 = tpu.matmul %arg29, %136, %cst_134 {dimension_numbers = #tpu.dot_dimension_numbers<[1], [0], [0], [1], [0, 0, 1, 1], [], []>} : vector<2x32xf32>, vector<32x64xf32>, vector<2x64xf32> -> vector<2x64xf32>
      %c2_135 = arith.constant 2 : index
      %c0_136 = arith.constant 0 : index
      %c0_137 = arith.constant 0 : index
      %138 = vector.load %arg12[%c2_135, %c0_136, %c0_137] : memref<3x64x64xf32, #tpu.memory_space<vmem>>, vector<1x64x64xf32>
      %139 = vector.shape_cast %138 : vector<1x64x64xf32> to vector<64x64xf32>
      %cst_138 = arith.constant dense<0.000000e+00> : vector<2x64xf32>
      %140 = tpu.matmul %98, %139, %cst_138 {dimension_numbers = #tpu.dot_dimension_numbers<[1], [0], [0], [1], [0, 0, 1, 1], [], []>} : vector<2x64xf32>, vector<64x64xf32>, vector<2x64xf32> -> vector<2x64xf32>
      %141 = arith.addf %137, %140 : vector<2x64xf32>
      %c2_139 = arith.constant 2 : index
      %c0_140 = arith.constant 0 : index
      %c0_141 = arith.constant 0 : index
      %142 = vector.load %arg14[%c2_139, %c0_140, %c0_141] : memref<3x1x64xf32, #tpu.memory_space<vmem>>, vector<1x1x64xf32>
      %143 = vector.shape_cast %142 : vector<1x1x64xf32> to vector<1x64xf32>
      %144 = vector.broadcast %143 : vector<1x64xf32> to vector<2x64xf32>
      %145 = arith.addf %141, %144 : vector<2x64xf32>
      %c2_142 = arith.constant 2 : index
      %c0_143 = arith.constant 0 : index
      %c0_144 = arith.constant 0 : index
      %146 = vector.load %arg13[%c2_142, %c0_143, %c0_144] : memref<3x64x64xf32, #tpu.memory_space<vmem>>, vector<1x64x64xf32>
      %147 = vector.shape_cast %146 : vector<1x64x64xf32> to vector<64x64xf32>
      %cst_145 = arith.constant dense<0.000000e+00> : vector<2x64xf32>
      %148 = tpu.matmul %arg28, %147, %cst_145 {dimension_numbers = #tpu.dot_dimension_numbers<[1], [0], [0], [1], [0, 0, 1, 1], [], []>} : vector<2x64xf32>, vector<64x64xf32>, vector<2x64xf32> -> vector<2x64xf32>
      %c2_146 = arith.constant 2 : index
      %c0_147 = arith.constant 0 : index
      %c0_148 = arith.constant 0 : index
      %149 = vector.load %arg15[%c2_146, %c0_147, %c0_148] : memref<3x1x64xf32, #tpu.memory_space<vmem>>, vector<1x1x64xf32>
      %150 = vector.shape_cast %149 : vector<1x1x64xf32> to vector<1x64xf32>
      %151 = vector.broadcast %150 : vector<1x64xf32> to vector<2x64xf32>
      %152 = arith.addf %148, %151 : vector<2x64xf32>
      %153 = arith.addf %109, %116 : vector<2x64xf32>
      %154 = arith.negf %153 : vector<2x64xf32>
      %155 = math.exp %154 : vector<2x64xf32>
      %cst_149 = arith.constant 1.000000e+00 : f32
      %156 = vector.broadcast %cst_149 : f32 to vector<2x64xf32>
      %157 = arith.addf %156, %155 : vector<2x64xf32>
      %158 = arith.divf %156, %157 : vector<2x64xf32>
      %159 = arith.addf %127, %134 : vector<2x64xf32>
      %160 = arith.negf %159 : vector<2x64xf32>
      %161 = math.exp %160 : vector<2x64xf32>
      %cst_150 = arith.constant 1.000000e+00 : f32
      %162 = vector.broadcast %cst_150 : f32 to vector<2x64xf32>
      %163 = arith.addf %162, %161 : vector<2x64xf32>
      %164 = arith.divf %162, %163 : vector<2x64xf32>
      %165 = arith.mulf %158, %152 : vector<2x64xf32>
      %166 = arith.addf %145, %165 : vector<2x64xf32>
      %167 = math.tanh %166 : vector<2x64xf32>
      %cst_151 = arith.constant 1.000000e+00 : f32
      %168 = vector.broadcast %cst_151 : f32 to vector<2x64xf32>
      %169 = arith.subf %168, %164 : vector<2x64xf32>
      %170 = arith.mulf %169, %167 : vector<2x64xf32>
      %171 = arith.mulf %164, %arg28 : vector<2x64xf32>
      %172 = arith.addf %170, %171 : vector<2x64xf32>
      %c0_152 = arith.constant 0 : index
      %c0_153 = arith.constant 0 : index
      %173 = vector.load %arg16[%c0_152, %c0_153] : memref<64x64xf32, #tpu.memory_space<vmem>>, vector<64x64xf32>
      %cst_154 = arith.constant dense<0.000000e+00> : vector<2x64xf32>
      %174 = tpu.matmul %172, %173, %cst_154 {dimension_numbers = #tpu.dot_dimension_numbers<[1], [0], [0], [1], [0, 0, 1, 1], [], []>} : vector<2x64xf32>, vector<64x64xf32>, vector<2x64xf32> -> vector<2x64xf32>
      %c0_155 = arith.constant 0 : index
      %c0_156 = arith.constant 0 : index
      %175 = vector.load %arg17[%c0_155, %c0_156] : memref<64x64xf32, #tpu.memory_space<vmem>>, vector<64x64xf32>
      %cst_157 = arith.constant dense<0.000000e+00> : vector<2x64xf32>
      %176 = tpu.matmul %98, %175, %cst_157 {dimension_numbers = #tpu.dot_dimension_numbers<[1], [0], [0], [1], [0, 0, 1, 1], [], []>} : vector<2x64xf32>, vector<64x64xf32>, vector<2x64xf32> -> vector<2x64xf32>
      %177 = arith.addf %174, %176 : vector<2x64xf32>
      %c0_158 = arith.constant 0 : index
      %c0_159 = arith.constant 0 : index
      %178 = vector.load %arg18[%c0_158, %c0_159] : memref<32x64xf32, #tpu.memory_space<vmem>>, vector<32x64xf32>
      %cst_160 = arith.constant dense<0.000000e+00> : vector<2x64xf32>
      %179 = tpu.matmul %arg29, %178, %cst_160 {dimension_numbers = #tpu.dot_dimension_numbers<[1], [0], [0], [1], [0, 0, 1, 1], [], []>} : vector<2x32xf32>, vector<32x64xf32>, vector<2x64xf32> -> vector<2x64xf32>
      %180 = arith.addf %177, %179 : vector<2x64xf32>
      %c0_161 = arith.constant 0 : index
      %c0_162 = arith.constant 0 : index
      %181 = vector.load %arg19[%c0_161, %c0_162] : memref<1x64xf32, #tpu.memory_space<vmem>>, vector<1x64xf32>
      %182 = vector.broadcast %181 : vector<1x64xf32> to vector<2x64xf32>
      %183 = arith.addf %180, %182 : vector<2x64xf32>
      %184 = arith.index_cast %arg27 : i32 to index
      %c0_163 = arith.constant 0 : index
      %c0_164 = arith.constant 0 : index
      %185 = vector.load %arg21[%184, %c0_163, %c0_164] : memref<8x2x64xf32, #tpu.memory_space<vmem>>, vector<1x2x64xf32>
      %186 = vector.shape_cast %185 : vector<1x2x64xf32> to vector<2x64xf32>
      %187 = vector.shape_cast %183 : vector<2x64xf32> to vector<1x2x64xf32>
      tpu.vector_store %arg21[%184, %c0_163, %c0_164], %187 {strides = array<i32>} : memref<8x2x64xf32, #tpu.memory_space<vmem>>, vector<1x2x64xf32>,
      %cst_165 = arith.constant dense<0xFF800000> : vector<2xf32>
      %188 = vector.multi_reduction <maximumf>, %183, %cst_165 [1] : vector<2x64xf32> to vector<2xf32>
      %189 = vector.shape_cast %188 : vector<2xf32> to vector<2x1xf32>
      %190 = vector.broadcast %189 : vector<2x1xf32> to vector<2x64xf32>
      %191 = arith.cmpf oge, %183, %190 : vector<2x64xf32>
      %cst_166 = arith.constant 6.400000e+01 : f32
      %192 = vector.broadcast %cst_166 : f32 to vector<2x64xf32>
      %193 = arith.select %191, %71, %192 : vector<2x64xi1>, vector<2x64xf32>
      %cst_167 = arith.constant dense<0x7F800000> : vector<2xf32>
      %194 = vector.multi_reduction <minimumf>, %193, %cst_167 [1] : vector<2x64xf32> to vector<2xf32>
      %195 = vector.shape_cast %194 : vector<2xf32> to vector<2x1xf32>
      %196 = arith.fptosi %195 : vector<2x1xf32> to vector<2x1xi32>
      %197 = arith.index_cast %arg27 : i32 to index
      %c0_168 = arith.constant 0 : index
      %c0_169 = arith.constant 0 : index
      %198 = vector.load %arg22[%197, %c0_168, %c0_169] : memref<8x2x1xi32, #tpu.memory_space<vmem>>, vector<1x2x1xi32>
      %199 = vector.shape_cast %198 : vector<1x2x1xi32> to vector<2x1xi32>
      %200 = vector.shape_cast %196 : vector<2x1xi32> to vector<1x2x1xi32>
      tpu.vector_store %arg22[%197, %c0_168, %c0_169], %200 {strides = array<i32>} : memref<8x2x1xi32, #tpu.memory_space<vmem>>, vector<1x2x1xi32>,
      %201 = vector.broadcast %195 : vector<2x1xf32> to vector<2x64xf32>
      %202 = arith.cmpf oeq, %71, %201 : vector<2x64xf32>
      %203 = arith.extui %202 : vector<2x64xi1> to vector<2x64xi32>
      %204 = arith.sitofp %203 : vector<2x64xi32> to vector<2x64xf32>
      %205 = arith.index_cast %arg27 : i32 to index
      %c0_170 = arith.constant 0 : index
      %c0_171 = arith.constant 0 : index
      %206 = vector.load %arg2[%205, %c0_170, %c0_171] : memref<8x1x1xf32, #tpu.memory_space<vmem>>, vector<1x1x1xf32>
      %207 = vector.shape_cast %206 : vector<1x1x1xf32> to vector<1x1xf32>
      %208 = arith.index_cast %arg27 : i32 to index
      %c0_172 = arith.constant 0 : index
      %c0_173 = arith.constant 0 : index
      %209 = vector.load %arg1[%208, %c0_172, %c0_173] : memref<8x2x64xf32, #tpu.memory_space<vmem>>, vector<1x2x64xf32>
      %210 = vector.shape_cast %209 : vector<1x2x64xf32> to vector<2x64xf32>
      %211 = vector.broadcast %207 : vector<1x1xf32> to vector<2x64xf32>
      %212 = arith.mulf %211, %210 : vector<2x64xf32>
      %cst_174 = arith.constant 1.000000e+00 : f32
      %213 = vector.broadcast %cst_174 : f32 to vector<1x1xf32>
      %214 = arith.subf %213, %207 : vector<1x1xf32>
      %215 = vector.broadcast %214 : vector<1x1xf32> to vector<2x64xf32>
      %216 = arith.mulf %215, %204 : vector<2x64xf32>
      %217 = arith.addf %212, %216 : vector<2x64xf32>
      %c0_175 = arith.constant 0 : index
      %c0_176 = arith.constant 0 : index
      %218 = vector.load %arg20[%c0_175, %c0_176] : memref<64x32xf32, #tpu.memory_space<vmem>>, vector<64x32xf32>
      %cst_177 = arith.constant dense<0.000000e+00> : vector<2x32xf32>
      %219 = tpu.matmul %217, %218, %cst_177 {dimension_numbers = #tpu.dot_dimension_numbers<[1], [0], [0], [1], [0, 0, 1, 1], [], []>} : vector<2x64xf32>, vector<64x32xf32>, vector<2x32xf32> -> vector<2x32xf32>
      scf.yield %172, %219 : vector<2x64xf32>, vector<2x32xf32>
    }
    %c8_i32_87 = arith.constant 8 : i32
    return
  }
}

</mosaic_0001>

<llo_original>
// kernel: _forward_jit.1
$region0: #{_forward_jit.1}
  #allocation0 [shape = 'u32[]', space=smem, size = 0x4, offset = 0x4, fixed_abs, tag = 'smem constant byte address 0x4 - core index']
  #allocation1 [shape = 'u32[144,128]{1,0:T(1,128)}', space=vmem, size = 0x12000, scoped, tag = 'internal scratch']
  #allocation2 [shape = 'f32[24,2,32]{2,1,0:T(2,128)}', space=vmem, size = 0x6000, scoped, tag = 'scratch operand']
  #allocation3 [shape = 'f32[24,2,32]{2,1,0:T(2,128)}', space=vmem, size = 0x6000, scoped, tag = 'scratch operand']
  #allocation4 [shape = 'f32[8,2,32]{2,1,0:T(2,128)}', space=vmem, size = 0x2000, scoped, tag = 'scratch operand']
  #allocation5 [shape = 'f32[8,2,32]{2,1,0:T(2,128)}', space=vmem, size = 0x2000, scoped, tag = 'scratch operand']
  %s0 = inlined_call_operand.vmem [shape: f32[16,32], index: 0, kind: input, shape index: {}]
  %s1 = inlined_call_operand.vmem [shape: f32[8,2,64], index: 1, kind: input, shape index: {}]
  %s2 = inlined_call_operand.vmem [shape: f32[8,1,1], index: 2, kind: input, shape index: {}]
  %s3 = inlined_call_operand.vmem [shape: f32[2,3,32,32], index: 3, kind: input, shape index: {}]
  %s4 = inlined_call_operand.vmem [shape: f32[2,3,32,32], index: 4, kind: input, shape index: {}]
  %s5 = inlined_call_operand.hbm [shape: f32[2,3,1,32], index: 5, kind: input, shape index: {}]
  %s6 = inlined_call_operand.hbm [shape: f32[2,3,1,32], index: 6, kind: input, shape index: {}]
  %s7 = inlined_call_operand.vmem [shape: f32[64,32], index: 7, kind: input, shape index: {}]
  %s8 = inlined_call_operand.vmem [shape: f32[64,32], index: 8, kind: input, shape index: {}]
  %s9 = inlined_call_operand.hbm [shape: f32[1,32], index: 9, kind: input, shape index: {}]
  %s10 = inlined_call_operand.hbm [shape: f32[1,32], index: 10, kind: input, shape index: {}]
  %s11 = inlined_call_operand.hbm [shape: f32[3,32,64], index: 11, kind: input, shape index: {}]
  %s12 = inlined_call_operand.hbm [shape: f32[3,64,64], index: 12, kind: input, shape index: {}]
  %s13 = inlined_call_operand.hbm [shape: f32[3,64,64], index: 13, kind: input, shape index: {}]
  %s14 = inlined_call_operand.hbm [shape: f32[3,1,64], index: 14, kind: input, shape index: {}]
  %s15 = inlined_call_operand.hbm [shape: f32[3,1,64], index: 15, kind: input, shape index: {}]
  %s16 = inlined_call_operand.hbm [shape: f32[64,64], index: 16, kind: input, shape index: {}]
  %s17 = inlined_call_operand.hbm [shape: f32[64,64], index: 17, kind: input, shape index: {}]
  %s18 = inlined_call_operand.vmem [shape: f32[32,64], index: 18, kind: input, shape index: {}]
  %s19 = inlined_call_operand.hbm [shape: f32[1,64], index: 19, kind: input, shape index: {}]
  %s20 = inlined_call_operand.vmem [shape: f32[64,32], index: 20, kind: input, shape index: {}]
  %s21 = inlined_call_operand.vmem [shape: f32[8,2,64], index: 21, kind: output, shape index: {0}]
  %s22 = inlined_call_operand.vmem [shape: s32[8,2,1], index: 22, kind: output, shape index: {1}]
  %23 = xla_tuple %s21, %s22
  %s24 = sld [smem:[#allocation0]]
  $region164: #{_forward_jit.1} parent=0
    _
  %s26 = ssub.s32 1, %s24
  %s27 = scalar_select 0, %s26, %s24
  $region1: #{_forward_jit.1} parent=0
    #allocation6 [shape = 'u8[3072]{0}', space=vmem, size = 0xc00, scoped, tag = 'input window, operand 5, single buffered']
    #allocation7 [shape = 's32[1]{0}', space=sflag, size = 0x4, scoped, tag = 'scoped memory for _forward_jit.1']
    #allocation8 [shape = 'u8[3072]{0}', space=vmem, size = 0xc00, scoped, tag = 'input window, operand 6, single buffered']
    #allocation9 [shape = 's32[1]{0}', space=sflag, size = 0x4, scoped, tag = 'scoped memory for _forward_jit.1']
    #allocation10 [shape = 'u8[512]{0}', space=vmem, size = 0x400, scoped, tag = 'input window, operand 9, single buffered']
    #allocation11 [shape = 'u8[512]{0}', space=vmem, size = 0x400, scoped, tag = 'input window, operand 10, single buffered']
    #allocation12 [shape = 's32[1]{0}', space=sflag, size = 0x4, scoped, tag = 'scoped memory for _forward_jit.1']
    #allocation13 [shape = 'u8[49152]{0}', space=vmem, size = 0xc000, scoped, tag = 'input window, operand 11, single buffered']
    #allocation14 [shape = 'u8[98304]{0}', space=vmem, size = 0x18000, scoped, tag = 'input window, operand 12, single buffered']
    #allocation15 [shape = 's32[1]{0}', space=sflag, size = 0x4, scoped, tag = 'scoped memory for _forward_jit.1']
    #allocation16 [shape = 'u8[98304]{0}', space=vmem, size = 0x18000, scoped, tag = 'input window, operand 13, single buffered']
    #allocation17 [shape = 'u8[1536]{0}', space=vmem, size = 0x800, scoped, tag = 'input window, operand 14, single buffered']
    #allocation18 [shape = 's32[1]{0}', space=sflag, size = 0x4, scoped, tag = 'scoped memory for _forward_jit.1']
    #allocation19 [shape = 'u8[1536]{0}', space=vmem, size = 0x800, scoped, tag = 'input window, operand 15, single buffered']
    #allocation20 [shape = 'u8[32768]{0}', space=vmem, size = 0x8000, scoped, tag = 'input window, operand 16, single buffered']
    #allocation21 [shape = 's32[1]{0}', space=sflag, size = 0x4, scoped, tag = 'scoped memory for _forward_jit.1']
    #allocation22 [shape = 'u8[32768]{0}', space=vmem, size = 0x8000, scoped, tag = 'input window, operand 17, single buffered']
    #allocation23 [shape = 'u8[512]{0}', space=vmem, size = 0x400, scoped, tag = 'input window, operand 19, single buffered']
    #allocation24 [shape = 's32[1]{0}', space=sflag, size = 0x4, scoped, tag = 'scoped memory for _forward_jit.1']
    %28 = vsyncpa [#allocation7], 0
    %29 = vsyncpa [#allocation9], 0
    %30 = vsyncpa [#allocation12], 0
    %31 = vsyncpa [#allocation15], 0
    %32 = vsyncpa [#allocation18], 0
    %33 = vsyncpa [#allocation21], 0
    %34 = vsyncpa [#allocation24], 0
    // Predicated region
    $region2: #{_forward_jit.1} parent=1 // pred_check
      _
    $region3: #{_forward_jit.1} parent=1 // pred_check_branch
      %36 = sbr.rel (0) target = $region5
    $region4: #{_forward_jit.1} parent=1 // pred_region
      _
    $region5: #{_forward_jit.1} parent=1 // pred_fallthru
      _
    // Predicated region
    $region6: #{_forward_jit.1} parent=1 // pred_check
      _
    $region7: #{_forward_jit.1} parent=1 // pred_check_branch
      %38 = sbr.rel (0) target = $region9
    $region8: #{_forward_jit.1} parent=1 // pred_region
      _
    $region9: #{_forward_jit.1} parent=1 // pred_fallthru
      _
    // Predicated region
    $region10: #{_forward_jit.1} parent=1 // pred_check
      _
    $region11: #{_forward_jit.1} parent=1 // pred_check_branch
      %40 = sbr.rel (0) target = $region13
    $region12: #{_forward_jit.1} parent=1 // pred_region
      _
    $region13: #{_forward_jit.1} parent=1 // pred_fallthru
      _
    // Predicated region
    $region14: #{_forward_jit.1} parent=1 // pred_check
      _
    $region15: #{_forward_jit.1} parent=1 // pred_check_branch
      %42 = sbr.rel (0) target = $region17
    $region16: #{_forward_jit.1} parent=1 // pred_region
      _
    $region17: #{_forward_jit.1} parent=1 // pred_fallthru
      _
    // Predicated region
    $region18: #{_forward_jit.1} parent=1 // pred_check
      _
    $region19: #{_forward_jit.1} parent=1 // pred_check_branch
      %44 = sbr.rel (0) target = $region21
    $region20: #{_forward_jit.1} parent=1 // pred_region
      _
    $region21: #{_forward_jit.1} parent=1 // pred_fallthru
      _
    // Predicated region
    $region22: #{_forward_jit.1} parent=1 // pred_check
      _
    $region23: #{_forward_jit.1} parent=1 // pred_check_branch
      %46 = sbr.rel (0) target = $region25
    $region24: #{_forward_jit.1} parent=1 // pred_region
      %s48 = ssub.s32 96, 96
      %49 = vsyncadd [#allocation7], %s48
      %s50 = sshll.u32 [#allocation6], 4
      %s51 = int_to_ptr.vmem [resolvable:$true] %s50
      %56 = dma.hbm_to_vmem [thread:$0]  %s5, 96, %s51, [#allocation7], 16, 16, 1
    $region25: #{_forward_jit.1} parent=1 // pred_fallthru
      _
    // Predicated region
    $region26: #{_forward_jit.1} parent=1 // pred_check
      _
    $region27: #{_forward_jit.1} parent=1 // pred_check_branch
      %58 = sbr.rel (0) target = $region29
    $region28: #{_forward_jit.1} parent=1 // pred_region
      %s60 = ssub.s32 96, 96
      %61 = vsyncadd [#allocation9], %s60
      %s62 = sshll.u32 [#allocation8], 4
      %s63 = int_to_ptr.vmem [resolvable:$true] %s62
      %68 = dma.hbm_to_vmem [thread:$0]  %s6, 96, %s63, [#allocation9], 16, 16, 1
    $region29: #{_forward_jit.1} parent=1 // pred_fallthru
      _
    // Predicated region
    $region30: #{_forward_jit.1} parent=1 // pred_check
      _
    $region31: #{_forward_jit.1} parent=1 // pred_check_branch
      %70 = sbr.rel (0) target = $region33
    $region32: #{_forward_jit.1} parent=1 // pred_region
      _
    $region33: #{_forward_jit.1} parent=1 // pred_fallthru
      _
    // Predicated region
    $region34: #{_forward_jit.1} parent=1 // pred_check
      _
    $region35: #{_forward_jit.1} parent=1 // pred_check_branch
      %72 = sbr.rel (0) target = $region37
    $region36: #{_forward_jit.1} parent=1 // pred_region
      _
    $region37: #{_forward_jit.1} parent=1 // pred_fallthru
      _
    // Predicated region
    $region38: #{_forward_jit.1} parent=1 // pred_check
      _
    $region39: #{_forward_jit.1} parent=1 // pred_check_branch
      %74 = sbr.rel (0) target = $region41
    $region40: #{_forward_jit.1} parent=1 // pred_region
      %s76 = ssub.s32 16, 16
      %77 = vsyncadd [#allocation9], %s76
      %s79 = sshll.u32 [#allocation10], 4
      %s80 = int_to_ptr.vmem [resolvable:$true] %s79
      %82 = dma.hbm_to_vmem [thread:$0]  %s9, 16, %s80, [#allocation9]
    $region41: #{_forward_jit.1} parent=1 // pred_fallthru
      _
    // Predicated region
    $region42: #{_forward_jit.1} parent=1 // pred_check
      _
    $region43: #{_forward_jit.1} parent=1 // pred_check_branch
      %84 = sbr.rel (0) target = $region45
    $region44: #{_forward_jit.1} parent=1 // pred_region
      %s86 = ssub.s32 16, 16
      %87 = vsyncadd [#allocation12], %s86
      %s89 = sshll.u32 [#allocation11], 4
      %s90 = int_to_ptr.vmem [resolvable:$true] %s89
      %92 = dma.hbm_to_vmem [thread:$0]  %s10, 16, %s90, [#allocation12]
    $region45: #{_forward_jit.1} parent=1 // pred_fallthru
      _
    // Predicated region
    $region46: #{_forward_jit.1} parent=1 // pred_check
      _
    $region47: #{_forward_jit.1} parent=1 // pred_check_branch
      %94 = sbr.rel (0) target = $region49
    $region48: #{_forward_jit.1} parent=1 // pred_region
      %s96 = ssub.s32 1536, 1536
      %97 = vsyncadd [#allocation12], %s96
      %s98 = sshll.u32 [#allocation13], 4
      %s99 = int_to_ptr.vmem [resolvable:$true] %s98
      %104 = dma.hbm_to_vmem [thread:$0]  %s11, 1536, %s99, [#allocation12], 128, 128, 8
    $region49: #{_forward_jit.1} parent=1 // pred_fallthru
      _
    // Predicated region
    $region50: #{_forward_jit.1} parent=1 // pred_check
      _
    $region51: #{_forward_jit.1} parent=1 // pred_check_branch
      %106 = sbr.rel (0) target = $region53
    $region52: #{_forward_jit.1} parent=1 // pred_region
      %s108 = ssub.s32 3072, 3072
      %109 = vsyncadd [#allocation15], %s108
      %s110 = sshll.u32 [#allocation14], 4
      %s111 = int_to_ptr.vmem [resolvable:$true] %s110
      %116 = dma.hbm_to_vmem [thread:$0]  %s12, 3072, %s111, [#allocation15], 128, 128, 8
    $region53: #{_forward_jit.1} parent=1 // pred_fallthru
      _
    // Predicated region
    $region54: #{_forward_jit.1} parent=1 // pred_check
      _
    $region55: #{_forward_jit.1} parent=1 // pred_check_branch
      %118 = sbr.rel (0) target = $region57
    $region56: #{_forward_jit.1} parent=1 // pred_region
      %s120 = ssub.s32 3072, 3072
      %121 = vsyncadd [#allocation15], %s120
      %s122 = sshll.u32 [#allocation16], 4
      %s123 = int_to_ptr.vmem [resolvable:$true] %s122
      %128 = dma.hbm_to_vmem [thread:$0]  %s13, 3072, %s123, [#allocation15], 128, 128, 8
    $region57: #{_forward_jit.1} parent=1 // pred_fallthru
      _
    // Predicated region
    $region58: #{_forward_jit.1} parent=1 // pred_check
      _
    $region59: #{_forward_jit.1} parent=1 // pred_check_branch
      %130 = sbr.rel (0) target = $region61
    $region60: #{_forward_jit.1} parent=1 // pred_region
      %s132 = ssub.s32 48, 48
      %133 = vsyncadd [#allocation18], %s132
      %s134 = sshll.u32 [#allocation17], 4
      %s135 = int_to_ptr.vmem [resolvable:$true] %s134
      %140 = dma.hbm_to_vmem [thread:$0]  %s14, 48, %s135, [#allocation18], 16, 16, 1
    $region61: #{_forward_jit.1} parent=1 // pred_fallthru
      _
    // Predicated region
    $region62: #{_forward_jit.1} parent=1 // pred_check
      _
    $region63: #{_forward_jit.1} parent=1 // pred_check_branch
      %142 = sbr.rel (0) target = $region65
    $region64: #{_forward_jit.1} parent=1 // pred_region
      %s144 = ssub.s32 48, 48
      %145 = vsyncadd [#allocation18], %s144
      %s146 = sshll.u32 [#allocation19], 4
      %s147 = int_to_ptr.vmem [resolvable:$true] %s146
      %152 = dma.hbm_to_vmem [thread:$0]  %s15, 48, %s147, [#allocation18], 16, 16, 1
    $region65: #{_forward_jit.1} parent=1 // pred_fallthru
      _
    // Predicated region
    $region66: #{_forward_jit.1} parent=1 // pred_check
      _
    $region67: #{_forward_jit.1} parent=1 // pred_check_branch
      %154 = sbr.rel (0) target = $region69
    $region68: #{_forward_jit.1} parent=1 // pred_region
      %s156 = ssub.s32 1024, 1024
      %157 = vsyncadd [#allocation21], %s156
      %s158 = sshll.u32 [#allocation20], 4
      %s159 = int_to_ptr.vmem [resolvable:$true] %s158
      %164 = dma.hbm_to_vmem [thread:$0]  %s16, 1024, %s159, [#allocation21], 128, 128, 8
    $region69: #{_forward_jit.1} parent=1 // pred_fallthru
      _
    // Predicated region
    $region70: #{_forward_jit.1} parent=1 // pred_check
      _
    $region71: #{_forward_jit.1} parent=1 // pred_check_branch
      %166 = sbr.rel (0) target = $region73
    $region72: #{_forward_jit.1} parent=1 // pred_region
      %s168 = ssub.s32 1024, 1024
      %169 = vsyncadd [#allocation21], %s168
      %s170 = sshll.u32 [#allocation22], 4
      %s171 = int_to_ptr.vmem [resolvable:$true] %s170
      %176 = dma.hbm_to_vmem [thread:$0]  %s17, 1024, %s171, [#allocation21], 128, 128, 8
    $region73: #{_forward_jit.1} parent=1 // pred_fallthru
      _
    // Predicated region
    $region74: #{_forward_jit.1} parent=1 // pred_check
      _
    $region75: #{_forward_jit.1} parent=1 // pred_check_branch
      %178 = sbr.rel (0) target = $region77
    $region76: #{_forward_jit.1} parent=1 // pred_region
      _
    $region77: #{_forward_jit.1} parent=1 // pred_fallthru
      _
    // Predicated region
    $region78: #{_forward_jit.1} parent=1 // pred_check
      _
    $region79: #{_forward_jit.1} parent=1 // pred_check_branch
      %180 = sbr.rel (0) target = $region81
    $region80: #{_forward_jit.1} parent=1 // pred_region
      %s182 = ssub.s32 16, 16
      %183 = vsyncadd [#allocation24], %s182
      %s185 = sshll.u32 [#allocation23], 4
      %s186 = int_to_ptr.vmem [resolvable:$true] %s185
      %188 = dma.hbm_to_vmem [thread:$0]  %s19, 16, %s186, [#allocation24]
    $region81: #{_forward_jit.1} parent=1 // pred_fallthru
      _
    // Predicated region
    $region82: #{_forward_jit.1} parent=1 // pred_check
      _
    $region83: #{_forward_jit.1} parent=1 // pred_check_branch
      %190 = sbr.rel (0) target = $region85
    $region84: #{_forward_jit.1} parent=1 // pred_region
      _
    $region85: #{_forward_jit.1} parent=1 // pred_fallthru
      _
    // Predicated region
    $region86: #{_forward_jit.1} parent=1 // pred_check
      _
    $region87: #{_forward_jit.1} parent=1 // pred_check_branch
      %192 = sbr.rel (0) target = $region89
    $region88: #{_forward_jit.1} parent=1 // pred_region
      %193 = dma.done [#allocation7], 96
    $region89: #{_forward_jit.1} parent=1 // pred_fallthru
      _
    // Predicated region
    $region90: #{_forward_jit.1} parent=1 // pred_check
      _
    $region91: #{_forward_jit.1} parent=1 // pred_check_branch
      %195 = sbr.rel (0) target = $region93
    $region92: #{_forward_jit.1} parent=1 // pred_region
      %196 = dma.done [#allocation9], 96
    $region93: #{_forward_jit.1} parent=1 // pred_fallthru
      _
    // Predicated region
    $region94: #{_forward_jit.1} parent=1 // pred_check
      _
    $region95: #{_forward_jit.1} parent=1 // pred_check_branch
      %198 = sbr.rel (0) target = $region97
    $region96: #{_forward_jit.1} parent=1 // pred_region
      %199 = dma.done [#allocation9], 16
    $region97: #{_forward_jit.1} parent=1 // pred_fallthru
      _
    // Predicated region
    $region98: #{_forward_jit.1} parent=1 // pred_check
      _
    $region99: #{_forward_jit.1} parent=1 // pred_check_branch
      %201 = sbr.rel (0) target = $region101
    $region100: #{_forward_jit.1} parent=1 // pred_region
      %202 = dma.done [#allocation12], 16
    $region101: #{_forward_jit.1} parent=1 // pred_fallthru
      _
    // Predicated region
    $region102: #{_forward_jit.1} parent=1 // pred_check
      _
    $region103: #{_forward_jit.1} parent=1 // pred_check_branch
      %204 = sbr.rel (0) target = $region105
    $region104: #{_forward_jit.1} parent=1 // pred_region
      %205 = dma.done [#allocation12], 1536
    $region105: #{_forward_jit.1} parent=1 // pred_fallthru
      _
    // Predicated region
    $region106: #{_forward_jit.1} parent=1 // pred_check
      _
    $region107: #{_forward_jit.1} parent=1 // pred_check_branch
      %207 = sbr.rel (0) target = $region109
    $region108: #{_forward_jit.1} parent=1 // pred_region
      %208 = dma.done [#allocation15], 3072
    $region109: #{_forward_jit.1} parent=1 // pred_fallthru
      _
    // Predicated region
    $region110: #{_forward_jit.1} parent=1 // pred_check
      _
    $region111: #{_forward_jit.1} parent=1 // pred_check_branch
      %210 = sbr.rel (0) target = $region113
    $region112: #{_forward_jit.1} parent=1 // pred_region
      %211 = dma.done [#allocation15], 3072
    $region113: #{_forward_jit.1} parent=1 // pred_fallthru
      _
    // Predicated region
    $region114: #{_forward_jit.1} parent=1 // pred_check
      _
    $region115: #{_forward_jit.1} parent=1 // pred_check_branch
      %213 = sbr.rel (0) target = $region117
    $region116: #{_forward_jit.1} parent=1 // pred_region
      %214 = dma.done [#allocation18], 48
    $region117: #{_forward_jit.1} parent=1 // pred_fallthru
      _
    // Predicated region
    $region118: #{_forward_jit.1} parent=1 // pred_check
      _
    $region119: #{_forward_jit.1} parent=1 // pred_check_branch
      %216 = sbr.rel (0) target = $region121
    $region120: #{_forward_jit.1} parent=1 // pred_region
      %217 = dma.done [#allocation18], 48
    $region121: #{_forward_jit.1} parent=1 // pred_fallthru
      _
    // Predicated region
    $region122: #{_forward_jit.1} parent=1 // pred_check
      _
    $region123: #{_forward_jit.1} parent=1 // pred_check_branch
      %219 = sbr.rel (0) target = $region125
    $region124: #{_forward_jit.1} parent=1 // pred_region
      %220 = dma.done [#allocation21], 1024
    $region125: #{_forward_jit.1} parent=1 // pred_fallthru
      _
    // Predicated region
    $region126: #{_forward_jit.1} parent=1 // pred_check
      _
    $region127: #{_forward_jit.1} parent=1 // pred_check_branch
      %222 = sbr.rel (0) target = $region129
    $region128: #{_forward_jit.1} parent=1 // pred_region
      %223 = dma.done [#allocation21], 1024
    $region129: #{_forward_jit.1} parent=1 // pred_fallthru
      _
    // Predicated region
    $region130: #{_forward_jit.1} parent=1 // pred_check
      _
    $region131: #{_forward_jit.1} parent=1 // pred_check_branch
      %225 = sbr.rel (0) target = $region133
    $region132: #{_forward_jit.1} parent=1 // pred_region
      %226 = dma.done [#allocation24], 16
    $region133: #{_forward_jit.1} parent=1 // pred_fallthru
      _
    %v227 = vld [vmem:[%s0] sm:$0xff]
    %v228 = vld [vmem:[%s0 + $0x8] sm:$0xff]
    %v229 = vld [vmem:[%s3] sm:$0xff]
    %v230 = vld [vmem:[%s3 + $0x8] sm:$0xff]
    %v231 = vld [vmem:[%s3 + $0x10] sm:$0xff]
    %v232 = vld [vmem:[%s3 + $0x18] sm:$0xff]
    %v233 = vld [vmem:[#allocation6] sm:$0x1]
    %v235 = vlaneseq
    %v236 = vshrl.u32 %v235, 7
    %v237 = vsub.s32 0, %v236
    %v238 = vrot.slane %v233, %v237
    %vm240 = vcmask 261120
    %v242 = vsel %vm240, %v227, 0
    %v245 = vsel %vm240, %v228, 0
    %247 = vmatprep.subr.mxu0 0.0
    %248 = vmatpush1.msra.mxu0 %v229
    %249 = vmatprep.subr.mxu0 0.0
    %250 = vmatpush1.msra.mxu0 %v230
    %251 = vmatprep.subr.mxu0 0.0
    %252 = vmatpush1.msra.mxu0 %v231
    %253 = vmatprep.subr.mxu0 0.0
    %254 = vmatpush1.msra.mxu0 %v232
    %255 = vmatprep.subr.mxu0 0.0
    %256 = vmatpush1.msra.mxu0 0.0
    %257 = vmatprep.subr.mxu0 0.0
    %258 = vmatpush1.msra.mxu0 0.0
    %259 = vmatprep.subr.mxu0 0.0
    %260 = vmatpush1.msra.mxu0 0.0
    %261 = vmatprep.subr.mxu0 0.0
    %262 = vmatpush1.msra.mxu0 0.0
    %263 = vmatprep.subr.mxu0 0.0
    %264 = vmatpush1.msra.mxu0 0.0
    %265 = vmatprep.subr.mxu0 0.0
    %266 = vmatpush1.msra.mxu0 0.0
    %267 = vmatprep.subr.mxu0 0.0
    %268 = vmatpush1.msra.mxu0 0.0
    %269 = vmatprep.subr.mxu0 0.0
    %270 = vmatpush1.msra.mxu0 0.0
    %271 = vmatprep.subr.mxu0 0.0
    %272 = vmatpush1.msra.mxu0 0.0
    %273 = vmatprep.subr.mxu0 0.0
    %274 = vmatpush1.msra.mxu0 0.0
    %275 = vmatprep.subr.mxu0 0.0
    %276 = vmatpush1.msra.mxu0 0.0
    %277 = vmatprep.subr.mxu0 0.0
    %278 = vmatpush1.msra.mxu0 0.0
    %279 = vmatprep.subr.mxu0 0.0
    %280 = vmatpush1.msra.mxu0 0.0
    %281 = vmatprep.subr.mxu0 0.0
    %282 = vmatpush1.msra.mxu0 0.0
    %283 = vmatprep.subr.mxu0 0.0
    %284 = vmatpush1.msra.mxu0 0.0
    %285 = vmatprep.subr.mxu0 0.0
    %286 = vmatpush1.msra.mxu0 0.0
    %287 = vmatprep.subr.mxu0 0.0
    %288 = vmatpush1.msra.mxu0 0.0
    %289 = vmatprep.subr.mxu0 0.0
    %290 = vmatpush1.msra.mxu0 0.0
    %291 = vmatprep.subr.mxu0 0.0
    %292 = vmatpush1.msra.mxu0 0.0
    %293 = vmatprep.subr.mxu0 0.0
    %294 = vmatpush1.msra.mxu0 0.0
    %295 = vmatprep.subr.mxu0 0.0
    %296 = vmatpush1.msra.mxu0 0.0
    %297 = vmatprep.subr.mxu0 0.0
    %298 = vmatpush1.msra.mxu0 0.0
    %299 = vmatprep.subr.mxu0 0.0
    %300 = vmatpush1.msra.mxu0 0.0
    %301 = vmatprep.subr.mxu0 0.0
    %302 = vmatpush1.msra.mxu0 0.0
    %303 = vmatprep.subr.mxu0 0.0
    %304 = vmatpush1.msra.mxu0 0.0
    %305 = vmatprep.subr.mxu0 0.0
    %306 = vmatpush1.msra.mxu0 0.0
    %307 = vmatprep.subr.mxu0 0.0
    %308 = vmatpush1.msra.mxu0 0.0
    %309 = vmatprep.subr.mxu0 0.0
    %310 = vmatpush1.msra.mxu0 0.0
    %311 = vmatprep.mubr.f32.mxu0 0.0
    %312 = vmatmul.mubr.f32.gmra.mrb[0].mxu0 %v242
    %v313 = vpop.f32.mrb[0].mxu0
    %v314 = vadd.f32 %v238, %v313
    %v315 = vpop.f32.mrb[0].mxu0
    %316 = vmatprep.mubr.f32.mxu0 0.0
    %317 = vmatmul.mubr.f32.gmra.mrb[0].mxu0 %v245
    %v318 = vpop.f32.mrb[0].mxu0
    %v319 = vadd.f32 %v238, %v318
    %v320 = vpop.f32.mrb[0].mxu0
    %321 = vdwg.mxu0
    %v324 = vcombine.high %v314, %v314
    %v326 = vunpack.c.l.s4 1983009808
    %v327 = vunpack.c.0.s8 %v326
    %v328 = vlaneseq
    %v329 = vshrl.u32 %v328, 7
    %v330 = vsub.s32 %v327, %v329
    %v331 = vrot.slane %v314, %v330
    %v333 = vunpack.c.l.s4 1983009808
    %v334 = vunpack.c.0.s8 %v333
    %v335 = vlaneseq
    %v336 = vshrl.u32 %v335, 7
    %v337 = vsub.s32 %v334, %v336
    %v338 = vrot.slane %v324, %v337
    %v339 = vcombine.high %v331, %v331
    %v340 = vcombine.high %v338, %v338
    %v341 = vcombine.high %v319, %v319
    %v343 = vunpack.c.l.s4 1983009808
    %v344 = vunpack.c.0.s8 %v343
    %v345 = vlaneseq
    %v346 = vshrl.u32 %v345, 7
    %v347 = vsub.s32 %v344, %v346
    %v348 = vrot.slane %v319, %v347
    %v350 = vunpack.c.l.s4 1983009808
    %v351 = vunpack.c.0.s8 %v350
    %v352 = vlaneseq
    %v353 = vshrl.u32 %v352, 7
    %v354 = vsub.s32 %v351, %v353
    %v355 = vrot.slane %v341, %v354
    %v356 = vcombine.high %v348, %v348
    %v357 = vcombine.high %v355, %v355
    %vm366 = vcmask 254976
    %367 = vst.msk [vmem:[#allocation2] sm:$0x3] %vm366, %v331
    %368 = vst.msk [vmem:[#allocation2 + $0x2] sm:$0x3] %vm366, %v339
    %369 = vst.msk [vmem:[#allocation2 + $0x4] sm:$0x3] %vm366, %v338
    %370 = vst.msk [vmem:[#allocation2 + $0x6] sm:$0x3] %vm366, %v340
    %371 = vst.msk [vmem:[#allocation2 + $0x8] sm:$0x3] %vm366, %v348
    %372 = vst.msk [vmem:[#allocation2 + $0xa] sm:$0x3] %vm366, %v356
    %373 = vst.msk [vmem:[#allocation2 + $0xc] sm:$0x3] %vm366, %v355
    %374 = vst.msk [vmem:[#allocation2 + $0xe] sm:$0x3] %vm366, %v357
    %s375 = scalar_lea.vmem %s3, 96
    %v376 = vld [vmem:[%s375] sm:$0xff]
    %v377 = vld [vmem:[%s375 + $0x8] sm:$0xff]
    %v378 = vld [vmem:[%s375 + $0x10] sm:$0xff]
    %v379 = vld [vmem:[%s375 + $0x18] sm:$0xff]
    %s380 = scalar_lea.vmem [#allocation6], 3
    %v381 = vld [vmem:[%s380] sm:$0x1]
    %v383 = vlaneseq
    %v384 = vshrl.u32 %v383, 7
    %v385 = vsub.s32 0, %v384
    %v386 = vrot.slane %v381, %v385
    %388 = vmatprep.subr.mxu0 0.0
    %389 = vmatpush1.msra.mxu0 %v376
    %390 = vmatprep.subr.mxu0 0.0
    %391 = vmatpush1.msra.mxu0 %v377
    %392 = vmatprep.subr.mxu0 0.0
    %393 = vmatpush1.msra.mxu0 %v378
    %394 = vmatprep.subr.mxu0 0.0
    %395 = vmatpush1.msra.mxu0 %v379
    %396 = vmatprep.subr.mxu0 0.0
    %397 = vmatpush1.msra.mxu0 0.0
    %398 = vmatprep.subr.mxu0 0.0
    %399 = vmatpush1.msra.mxu0 0.0
    %400 = vmatprep.subr.mxu0 0.0
    %401 = vmatpush1.msra.mxu0 0.0
    %402 = vmatprep.subr.mxu0 0.0
    %403 = vmatpush1.msra.mxu0 0.0
    %404 = vmatprep.subr.mxu0 0.0
    %405 = vmatpush1.msra.mxu0 0.0
    %406 = vmatprep.subr.mxu0 0.0
    %407 = vmatpush1.msra.mxu0 0.0
    %408 = vmatprep.subr.mxu0 0.0
    %409 = vmatpush1.msra.mxu0 0.0
    %410 = vmatprep.subr.mxu0 0.0
    %411 = vmatpush1.msra.mxu0 0.0
    %412 = vmatprep.subr.mxu0 0.0
    %413 = vmatpush1.msra.mxu0 0.0
    %414 = vmatprep.subr.mxu0 0.0
    %415 = vmatpush1.msra.mxu0 0.0
    %416 = vmatprep.subr.mxu0 0.0
    %417 = vmatpush1.msra.mxu0 0.0
    %418 = vmatprep.subr.mxu0 0.0
    %419 = vmatpush1.msra.mxu0 0.0
    %420 = vmatprep.subr.mxu0 0.0
    %421 = vmatpush1.msra.mxu0 0.0
    %422 = vmatprep.subr.mxu0 0.0
    %423 = vmatpush1.msra.mxu0 0.0
    %424 = vmatprep.subr.mxu0 0.0
    %425 = vmatpush1.msra.mxu0 0.0
    %426 = vmatprep.subr.mxu0 0.0
    %427 = vmatpush1.msra.mxu0 0.0
    %428 = vmatprep.subr.mxu0 0.0
    %429 = vmatpush1.msra.mxu0 0.0
    %430 = vmatprep.subr.mxu0 0.0
    %431 = vmatpush1.msra.mxu0 0.0
    %432 = vmatprep.subr.mxu0 0.0
    %433 = vmatpush1.msra.mxu0 0.0
    %434 = vmatprep.subr.mxu0 0.0
    %435 = vmatpush1.msra.mxu0 0.0
    %436 = vmatprep.subr.mxu0 0.0
    %437 = vmatpush1.msra.mxu0 0.0
    %438 = vmatprep.subr.mxu0 0.0
    %439 = vmatpush1.msra.mxu0 0.0
    %440 = vmatprep.subr.mxu0 0.0
    %441 = vmatpush1.msra.mxu0 0.0
    %442 = vmatprep.subr.mxu0 0.0
    %443 = vmatpush1.msra.mxu0 0.0
    %444 = vmatprep.subr.mxu0 0.0
    %445 = vmatpush1.msra.mxu0 0.0
    %446 = vmatprep.subr.mxu0 0.0
    %447 = vmatpush1.msra.mxu0 0.0
    %448 = vmatprep.subr.mxu0 0.0
    %449 = vmatpush1.msra.mxu0 0.0
    %450 = vmatprep.subr.mxu0 0.0
    %451 = vmatpush1.msra.mxu0 0.0
    %452 = vmatprep.mubr.f32.mxu0 0.0
    %453 = vmatmul.mubr.f32.gmra.mrb[0].mxu0 %v242
    %v454 = vpop.f32.mrb[0].mxu0
    %v455 = vadd.f32 %v386, %v454
    %v456 = vpop.f32.mrb[0].mxu0
    %457 = vmatprep.mubr.f32.mxu0 0.0
    %458 = vmatmul.mubr.f32.gmra.mrb[0].mxu0 %v245
    %v459 = vpop.f32.mrb[0].mxu0
    %v460 = vadd.f32 %v386, %v459
    %v461 = vpop.f32.mrb[0].mxu0
    %462 = vdwg.mxu0
    %v465 = vcombine.high %v455, %v455
    %v467 = vunpack.c.l.s4 1983009808
    %v468 = vunpack.c.0.s8 %v467
    %v469 = vlaneseq
    %v470 = vshrl.u32 %v469, 7
    %v471 = vsub.s32 %v468, %v470
    %v472 = vrot.slane %v455, %v471
    %v474 = vunpack.c.l.s4 1983009808
    %v475 = vunpack.c.0.s8 %v474
    %v476 = vlaneseq
    %v477 = vshrl.u32 %v476, 7
    %v478 = vsub.s32 %v475, %v477
    %v479 = vrot.slane %v465, %v478
    %v480 = vcombine.high %v472, %v472
    %v481 = vcombine.high %v479, %v479
    %v482 = vcombine.high %v460, %v460
    %v484 = vunpack.c.l.s4 1983009808
    %v485 = vunpack.c.0.s8 %v484
    %v486 = vlaneseq
    %v487 = vshrl.u32 %v486, 7
    %v488 = vsub.s32 %v485, %v487
    %v489 = vrot.slane %v460, %v488
    %v491 = vunpack.c.l.s4 1983009808
    %v492 = vunpack.c.0.s8 %v491
    %v493 = vlaneseq
    %v494 = vshrl.u32 %v493, 7
    %v495 = vsub.s32 %v492, %v494
    %v496 = vrot.slane %v482, %v495
    %v497 = vcombine.high %v489, %v489
    %v498 = vcombine.high %v496, %v496
    %507 = vst.msk [vmem:[#allocation3] sm:$0x3] %vm366, %v472
    %508 = vst.msk [vmem:[#allocation3 + $0x2] sm:$0x3] %vm366, %v480
    %509 = vst.msk [vmem:[#allocation3 + $0x4] sm:$0x3] %vm366, %v479
    %510 = vst.msk [vmem:[#allocation3 + $0x6] sm:$0x3] %vm366, %v481
    %511 = vst.msk [vmem:[#allocation3 + $0x8] sm:$0x3] %vm366, %v489
    %512 = vst.msk [vmem:[#allocation3 + $0xa] sm:$0x3] %vm366, %v497
    %513 = vst.msk [vmem:[#allocation3 + $0xc] sm:$0x3] %vm366, %v496
    %514 = vst.msk [vmem:[#allocation3 + $0xe] sm:$0x3] %vm366, %v498
    %s515 = scalar_lea.vmem %s3, 32
    %v516 = vld [vmem:[%s515] sm:$0xff]
    %v517 = vld [vmem:[%s515 + $0x8] sm:$0xff]
    %v518 = vld [vmem:[%s515 + $0x10] sm:$0xff]
    %v519 = vld [vmem:[%s515 + $0x18] sm:$0xff]
    %s520 = scalar_lea.vmem [#allocation6], 1
    %v521 = vld [vmem:[%s520] sm:$0x1]
    %v523 = vlaneseq
    %v524 = vshrl.u32 %v523, 7
    %v525 = vsub.s32 0, %v524
    %v526 = vrot.slane %v521, %v525
    %528 = vmatprep.subr.mxu0 0.0
    %529 = vmatpush1.msra.mxu0 %v516
    %530 = vmatprep.subr.mxu0 0.0
    %531 = vmatpush1.msra.mxu0 %v517
    %532 = vmatprep.subr.mxu0 0.0
    %533 = vmatpush1.msra.mxu0 %v518
    %534 = vmatprep.subr.mxu0 0.0
    %535 = vmatpush1.msra.mxu0 %v519
    %536 = vmatprep.subr.mxu0 0.0
    %537 = vmatpush1.msra.mxu0 0.0
    %538 = vmatprep.subr.mxu0 0.0
    %539 = vmatpush1.msra.mxu0 0.0
    %540 = vmatprep.subr.mxu0 0.0
    %541 = vmatpush1.msra.mxu0 0.0
    %542 = vmatprep.subr.mxu0 0.0
    %543 = vmatpush1.msra.mxu0 0.0
    %544 = vmatprep.subr.mxu0 0.0
    %545 = vmatpush1.msra.mxu0 0.0
    %546 = vmatprep.subr.mxu0 0.0
    %547 = vmatpush1.msra.mxu0 0.0
    %548 = vmatprep.subr.mxu0 0.0
    %549 = vmatpush1.msra.mxu0 0.0
    %550 = vmatprep.subr.mxu0 0.0
    %551 = vmatpush1.msra.mxu0 0.0
    %552 = vmatprep.subr.mxu0 0.0
    %553 = vmatpush1.msra.mxu0 0.0
    %554 = vmatprep.subr.mxu0 0.0
    %555 = vmatpush1.msra.mxu0 0.0
    %556 = vmatprep.subr.mxu0 0.0
    %557 = vmatpush1.msra.mxu0 0.0
    %558 = vmatprep.subr.mxu0 0.0
    %559 = vmatpush1.msra.mxu0 0.0
    %560 = vmatprep.subr.mxu0 0.0
    %561 = vmatpush1.msra.mxu0 0.0
    %562 = vmatprep.subr.mxu0 0.0
    %563 = vmatpush1.msra.mxu0 0.0
    %564 = vmatprep.subr.mxu0 0.0
    %565 = vmatpush1.msra.mxu0 0.0
    %566 = vmatprep.subr.mxu0 0.0
    %567 = vmatpush1.msra.mxu0 0.0
    %568 = vmatprep.subr.mxu0 0.0
    %569 = vmatpush1.msra.mxu0 0.0
    %570 = vmatprep.subr.mxu0 0.0
    %571 = vmatpush1.msra.mxu0 0.0
    %572 = vmatprep.subr.mxu0 0.0
    %573 = vmatpush1.msra.mxu0 0.0
    %574 = vmatprep.subr.mxu0 0.0
    %575 = vmatpush1.msra.mxu0 0.0
    %576 = vmatprep.subr.mxu0 0.0
    %577 = vmatpush1.msra.mxu0 0.0
    %578 = vmatprep.subr.mxu0 0.0
    %579 = vmatpush1.msra.mxu0 0.0
    %580 = vmatprep.subr.mxu0 0.0
    %581 = vmatpush1.msra.mxu0 0.0
    %582 = vmatprep.subr.mxu0 0.0
    %583 = vmatpush1.msra.mxu0 0.0
    %584 = vmatprep.subr.mxu0 0.0
    %585 = vmatpush1.msra.mxu0 0.0
    %586 = vmatprep.subr.mxu0 0.0
    %587 = vmatpush1.msra.mxu0 0.0
    %588 = vmatprep.subr.mxu0 0.0
    %589 = vmatpush1.msra.mxu0 0.0
    %590 = vmatprep.subr.mxu0 0.0
    %591 = vmatpush1.msra.mxu0 0.0
    %592 = vmatprep.mubr.f32.mxu0 0.0
    %593 = vmatmul.mubr.f32.gmra.mrb[0].mxu0 %v242
    %v594 = vpop.f32.mrb[0].mxu0
    %v595 = vadd.f32 %v526, %v594
    %v596 = vpop.f32.mrb[0].mxu0
    %597 = vmatprep.mubr.f32.mxu0 0.0
    %598 = vmatmul.mubr.f32.gmra.mrb[0].mxu0 %v245
    %v599 = vpop.f32.mrb[0].mxu0
    %v600 = vadd.f32 %v526, %v599
    %v601 = vpop.f32.mrb[0].mxu0
    %602 = vdwg.mxu0
    %v605 = vcombine.high %v595, %v595
    %v607 = vunpack.c.l.s4 1983009808
    %v608 = vunpack.c.0.s8 %v607
    %v609 = vlaneseq
    %v610 = vshrl.u32 %v609, 7
    %v611 = vsub.s32 %v608, %v610
    %v612 = vrot.slane %v595, %v611
    %v614 = vunpack.c.l.s4 1983009808
    %v615 = vunpack.c.0.s8 %v614
    %v616 = vlaneseq
    %v617 = vshrl.u32 %v616, 7
    %v618 = vsub.s32 %v615, %v617
    %v619 = vrot.slane %v605, %v618
    %v620 = vcombine.high %v612, %v612
    %v621 = vcombine.high %v619, %v619
    %v622 = vcombine.high %v600, %v600
    %v624 = vunpack.c.l.s4 1983009808
    %v625 = vunpack.c.0.s8 %v624
    %v626 = vlaneseq
    %v627 = vshrl.u32 %v626, 7
    %v628 = vsub.s32 %v625, %v627
    %v629 = vrot.slane %v600, %v628
    %v631 = vunpack.c.l.s4 1983009808
    %v632 = vunpack.c.0.s8 %v631
    %v633 = vlaneseq
    %v634 = vshrl.u32 %v633, 7
    %v635 = vsub.s32 %v632, %v634
    %v636 = vrot.slane %v622, %v635
    %v637 = vcombine.high %v629, %v629
    %v638 = vcombine.high %v636, %v636
    %s647 = scalar_lea.vmem [#allocation2], 16
    %648 = vst.msk [vmem:[%s647] sm:$0x3] %vm366, %v612
    %649 = vst.msk [vmem:[%s647 + $0x2] sm:$0x3] %vm366, %v620
    %650 = vst.msk [vmem:[%s647 + $0x4] sm:$0x3] %vm366, %v619
    %651 = vst.msk [vmem:[%s647 + $0x6] sm:$0x3] %vm366, %v621
    %652 = vst.msk [vmem:[%s647 + $0x8] sm:$0x3] %vm366, %v629
    %653 = vst.msk [vmem:[%s647 + $0xa] sm:$0x3] %vm366, %v637
    %654 = vst.msk [vmem:[%s647 + $0xc] sm:$0x3] %vm366, %v636
    %655 = vst.msk [vmem:[%s647 + $0xe] sm:$0x3] %vm366, %v638
    %s656 = scalar_lea.vmem %s3, 128
    %v657 = vld [vmem:[%s656] sm:$0xff]
    %v658 = vld [vmem:[%s656 + $0x8] sm:$0xff]
    %v659 = vld [vmem:[%s656 + $0x10] sm:$0xff]
    %v660 = vld [vmem:[%s656 + $0x18] sm:$0xff]
    %s661 = scalar_lea.vmem [#allocation6], 4
    %v662 = vld [vmem:[%s661] sm:$0x1]
    %v664 = vlaneseq
    %v665 = vshrl.u32 %v664, 7
    %v666 = vsub.s32 0, %v665
    %v667 = vrot.slane %v662, %v666
    %669 = vmatprep.subr.mxu0 0.0
    %670 = vmatpush1.msra.mxu0 %v657
    %671 = vmatprep.subr.mxu0 0.0
    %672 = vmatpush1.msra.mxu0 %v658
    %673 = vmatprep.subr.mxu0 0.0
    %674 = vmatpush1.msra.mxu0 %v659
    %675 = vmatprep.subr.mxu0 0.0
    %676 = vmatpush1.msra.mxu0 %v660
    %677 = vmatprep.subr.mxu0 0.0
    %678 = vmatpush1.msra.mxu0 0.0
    %679 = vmatprep.subr.mxu0 0.0
    %680 = vmatpush1.msra.mxu0 0.0
    %681 = vmatprep.subr.mxu0 0.0
    %682 = vmatpush1.msra.mxu0 0.0
    %683 = vmatprep.subr.mxu0 0.0
    %684 = vmatpush1.msra.mxu0 0.0
    %685 = vmatprep.subr.mxu0 0.0
    %686 = vmatpush1.msra.mxu0 0.0
    %687 = vmatprep.subr.mxu0 0.0
    %688 = vmatpush1.msra.mxu0 0.0
    %689 = vmatprep.subr.mxu0 0.0
    %690 = vmatpush1.msra.mxu0 0.0
    %691 = vmatprep.subr.mxu0 0.0
    %692 = vmatpush1.msra.mxu0 0.0
    %693 = vmatprep.subr.mxu0 0.0
    %694 = vmatpush1.msra.mxu0 0.0
    %695 = vmatprep.subr.mxu0 0.0
    %696 = vmatpush1.msra.mxu0 0.0
    %697 = vmatprep.subr.mxu0 0.0
    %698 = vmatpush1.msra.mxu0 0.0
    %699 = vmatprep.subr.mxu0 0.0
    %700 = vmatpush1.msra.mxu0 0.0
    %701 = vmatprep.subr.mxu0 0.0
    %702 = vmatpush1.msra.mxu0 0.0
    %703 = vmatprep.subr.mxu0 0.0
    %704 = vmatpush1.msra.mxu0 0.0
    %705 = vmatprep.subr.mxu0 0.0
    %706 = vmatpush1.msra.mxu0 0.0
    %707 = vmatprep.subr.mxu0 0.0
    %708 = vmatpush1.msra.mxu0 0.0
    %709 = vmatprep.subr.mxu0 0.0
    %710 = vmatpush1.msra.mxu0 0.0
    %711 = vmatprep.subr.mxu0 0.0
    %712 = vmatpush1.msra.mxu0 0.0
    %713 = vmatprep.subr.mxu0 0.0
    %714 = vmatpush1.msra.mxu0 0.0
    %715 = vmatprep.subr.mxu0 0.0
    %716 = vmatpush1.msra.mxu0 0.0
    %717 = vmatprep.subr.mxu0 0.0
    %718 = vmatpush1.msra.mxu0 0.0
    %719 = vmatprep.subr.mxu0 0.0
    %720 = vmatpush1.msra.mxu0 0.0
    %721 = vmatprep.subr.mxu0 0.0
    %722 = vmatpush1.msra.mxu0 0.0
    %723 = vmatprep.subr.mxu0 0.0
    %724 = vmatpush1.msra.mxu0 0.0
    %725 = vmatprep.subr.mxu0 0.0
    %726 = vmatpush1.msra.mxu0 0.0
    %727 = vmatprep.subr.mxu0 0.0
    %728 = vmatpush1.msra.mxu0 0.0
    %729 = vmatprep.subr.mxu0 0.0
    %730 = vmatpush1.msra.mxu0 0.0
    %731 = vmatprep.subr.mxu0 0.0
    %732 = vmatpush1.msra.mxu0 0.0
    %733 = vmatprep.mubr.f32.mxu0 0.0
    %734 = vmatmul.mubr.f32.gmra.mrb[0].mxu0 %v242
    %v735 = vpop.f32.mrb[0].mxu0
    %v736 = vadd.f32 %v667, %v735
    %v737 = vpop.f32.mrb[0].mxu0
    %738 = vmatprep.mubr.f32.mxu0 0.0
    %739 = vmatmul.mubr.f32.gmra.mrb[0].mxu0 %v245
    %v740 = vpop.f32.mrb[0].mxu0
    %v741 = vadd.f32 %v667, %v740
    %v742 = vpop.f32.mrb[0].mxu0
    %743 = vdwg.mxu0
    %v746 = vcombine.high %v736, %v736
    %v748 = vunpack.c.l.s4 1983009808
    %v749 = vunpack.c.0.s8 %v748
    %v750 = vlaneseq
    %v751 = vshrl.u32 %v750, 7
    %v752 = vsub.s32 %v749, %v751
    %v753 = vrot.slane %v736, %v752
    %v755 = vunpack.c.l.s4 1983009808
    %v756 = vunpack.c.0.s8 %v755
    %v757 = vlaneseq
    %v758 = vshrl.u32 %v757, 7
    %v759 = vsub.s32 %v756, %v758
    %v760 = vrot.slane %v746, %v759
    %v761 = vcombine.high %v753, %v753
    %v762 = vcombine.high %v760, %v760
    %v763 = vcombine.high %v741, %v741
    %v765 = vunpack.c.l.s4 1983009808
    %v766 = vunpack.c.0.s8 %v765
    %v767 = vlaneseq
    %v768 = vshrl.u32 %v767, 7
    %v769 = vsub.s32 %v766, %v768
    %v770 = vrot.slane %v741, %v769
    %v772 = vunpack.c.l.s4 1983009808
    %v773 = vunpack.c.0.s8 %v772
    %v774 = vlaneseq
    %v775 = vshrl.u32 %v774, 7
    %v776 = vsub.s32 %v773, %v775
    %v777 = vrot.slane %v763, %v776
    %v778 = vcombine.high %v770, %v770
    %v779 = vcombine.high %v777, %v777
    %s788 = scalar_lea.vmem [#allocation3], 16
    %789 = vst.msk [vmem:[%s788] sm:$0x3] %vm366, %v753
    %790 = vst.msk [vmem:[%s788 + $0x2] sm:$0x3] %vm366, %v761
    %791 = vst.msk [vmem:[%s788 + $0x4] sm:$0x3] %vm366, %v760
    %792 = vst.msk [vmem:[%s788 + $0x6] sm:$0x3] %vm366, %v762
    %793 = vst.msk [vmem:[%s788 + $0x8] sm:$0x3] %vm366, %v770
    %794 = vst.msk [vmem:[%s788 + $0xa] sm:$0x3] %vm366, %v778
    %795 = vst.msk [vmem:[%s788 + $0xc] sm:$0x3] %vm366, %v777
    %796 = vst.msk [vmem:[%s788 + $0xe] sm:$0x3] %vm366, %v779
    %s797 = scalar_lea.vmem %s3, 64
    %v798 = vld [vmem:[%s797] sm:$0xff]
    %v799 = vld [vmem:[%s797 + $0x8] sm:$0xff]
    %v800 = vld [vmem:[%s797 + $0x10] sm:$0xff]
    %v801 = vld [vmem:[%s797 + $0x18] sm:$0xff]
    %s802 = scalar_lea.vmem [#allocation6], 2
    %v803 = vld [vmem:[%s802] sm:$0x1]
    %v805 = vlaneseq
    %v806 = vshrl.u32 %v805, 7
    %v807 = vsub.s32 0, %v806
    %v808 = vrot.slane %v803, %v807
    %810 = vmatprep.subr.mxu0 0.0
    %811 = vmatpush1.msra.mxu0 %v798
    %812 = vmatprep.subr.mxu0 0.0
    %813 = vmatpush1.msra.mxu0 %v799
    %814 = vmatprep.subr.mxu0 0.0
    %815 = vmatpush1.msra.mxu0 %v800
    %816 = vmatprep.subr.mxu0 0.0
    %817 = vmatpush1.msra.mxu0 %v801
    %818 = vmatprep.subr.mxu0 0.0
    %819 = vmatpush1.msra.mxu0 0.0
    %820 = vmatprep.subr.mxu0 0.0
    %821 = vmatpush1.msra.mxu0 0.0
    %822 = vmatprep.subr.mxu0 0.0
    %823 = vmatpush1.msra.mxu0 0.0
    %824 = vmatprep.subr.mxu0 0.0
    %825 = vmatpush1.msra.mxu0 0.0
    %826 = vmatprep.subr.mxu0 0.0
    %827 = vmatpush1.msra.mxu0 0.0
    %828 = vmatprep.subr.mxu0 0.0
    %829 = vmatpush1.msra.mxu0 0.0
    %830 = vmatprep.subr.mxu0 0.0
    %831 = vmatpush1.msra.mxu0 0.0
    %832 = vmatprep.subr.mxu0 0.0
    %833 = vmatpush1.msra.mxu0 0.0
    %834 = vmatprep.subr.mxu0 0.0
    %835 = vmatpush1.msra.mxu0 0.0
    %836 = vmatprep.subr.mxu0 0.0
    %837 = vmatpush1.msra.mxu0 0.0
    %838 = vmatprep.subr.mxu0 0.0
    %839 = vmatpush1.msra.mxu0 0.0
    %840 = vmatprep.subr.mxu0 0.0
    %841 = vmatpush1.msra.mxu0 0.0
    %842 = vmatprep.subr.mxu0 0.0
    %843 = vmatpush1.msra.mxu0 0.0
    %844 = vmatprep.subr.mxu0 0.0
    %845 = vmatpush1.msra.mxu0 0.0
    %846 = vmatprep.subr.mxu0 0.0
    %847 = vmatpush1.msra.mxu0 0.0
    %848 = vmatprep.subr.mxu0 0.0
    %849 = vmatpush1.msra.mxu0 0.0
    %850 = vmatprep.subr.mxu0 0.0
    %851 = vmatpush1.msra.mxu0 0.0
    %852 = vmatprep.subr.mxu0 0.0
    %853 = vmatpush1.msra.mxu0 0.0
    %854 = vmatprep.subr.mxu0 0.0
    %855 = vmatpush1.msra.mxu0 0.0
    %856 = vmatprep.subr.mxu0 0.0
    %857 = vmatpush1.msra.mxu0 0.0
    %858 = vmatprep.subr.mxu0 0.0
    %859 = vmatpush1.msra.mxu0 0.0
    %860 = vmatprep.subr.mxu0 0.0
    %861 = vmatpush1.msra.mxu0 0.0
    %862 = vmatprep.subr.mxu0 0.0
    %863 = vmatpush1.msra.mxu0 0.0
    %864 = vmatprep.subr.mxu0 0.0
    %865 = vmatpush1.msra.mxu0 0.0
    %866 = vmatprep.subr.mxu0 0.0
    %867 = vmatpush1.msra.mxu0 0.0
    %868 = vmatprep.subr.mxu0 0.0
    %869 = vmatpush1.msra.mxu0 0.0
    %870 = vmatprep.subr.mxu0 0.0
    %871 = vmatpush1.msra.mxu0 0.0
    %872 = vmatprep.subr.mxu0 0.0
    %873 = vmatpush1.msra.mxu0 0.0
    %874 = vmatprep.mubr.f32.mxu0 0.0
    %875 = vmatmul.mubr.f32.gmra.mrb[0].mxu0 %v242
    %v876 = vpop.f32.mrb[0].mxu0
    %v877 = vadd.f32 %v808, %v876
    %v878 = vpop.f32.mrb[0].mxu0
    %879 = vmatprep.mubr.f32.mxu0 0.0
    %880 = vmatmul.mubr.f32.gmra.mrb[0].mxu0 %v245
    %v881 = vpop.f32.mrb[0].mxu0
    %v882 = vadd.f32 %v808, %v881
    %v883 = vpop.f32.mrb[0].mxu0
    %884 = vdwg.mxu0
    %v887 = vcombine.high %v877, %v877
    %v889 = vunpack.c.l.s4 1983009808
    %v890 = vunpack.c.0.s8 %v889
    %v891 = vlaneseq
    %v892 = vshrl.u32 %v891, 7
    %v893 = vsub.s32 %v890, %v892
    %v894 = vrot.slane %v877, %v893
    %v896 = vunpack.c.l.s4 1983009808
    %v897 = vunpack.c.0.s8 %v896
    %v898 = vlaneseq
    %v899 = vshrl.u32 %v898, 7
    %v900 = vsub.s32 %v897, %v899
    %v901 = vrot.slane %v887, %v900
    %v902 = vcombine.high %v894, %v894
    %v903 = vcombine.high %v901, %v901
    %v904 = vcombine.high %v882, %v882
    %v906 = vunpack.c.l.s4 1983009808
    %v907 = vunpack.c.0.s8 %v906
    %v908 = vlaneseq
    %v909 = vshrl.u32 %v908, 7
    %v910 = vsub.s32 %v907, %v909
    %v911 = vrot.slane %v882, %v910
    %v913 = vunpack.c.l.s4 1983009808
    %v914 = vunpack.c.0.s8 %v913
    %v915 = vlaneseq
    %v916 = vshrl.u32 %v915, 7
    %v917 = vsub.s32 %v914, %v916
    %v918 = vrot.slane %v904, %v917
    %v919 = vcombine.high %v911, %v911
    %v920 = vcombine.high %v918, %v918
    %s929 = scalar_lea.vmem [#allocation2], 32
    %930 = vst.msk [vmem:[%s929] sm:$0x3] %vm366, %v894
    %931 = vst.msk [vmem:[%s929 + $0x2] sm:$0x3] %vm366, %v902
    %932 = vst.msk [vmem:[%s929 + $0x4] sm:$0x3] %vm366, %v901
    %933 = vst.msk [vmem:[%s929 + $0x6] sm:$0x3] %vm366, %v903
    %934 = vst.msk [vmem:[%s929 + $0x8] sm:$0x3] %vm366, %v911
    %935 = vst.msk [vmem:[%s929 + $0xa] sm:$0x3] %vm366, %v919
    %936 = vst.msk [vmem:[%s929 + $0xc] sm:$0x3] %vm366, %v918
    %937 = vst.msk [vmem:[%s929 + $0xe] sm:$0x3] %vm366, %v920
    %s938 = scalar_lea.vmem %s3, 160
    %v939 = vld [vmem:[%s938] sm:$0xff]
    %v940 = vld [vmem:[%s938 + $0x8] sm:$0xff]
    %v941 = vld [vmem:[%s938 + $0x10] sm:$0xff]
    %v942 = vld [vmem:[%s938 + $0x18] sm:$0xff]
    %s943 = scalar_lea.vmem [#allocation6], 5
    %v944 = vld [vmem:[%s943] sm:$0x1]
    %v946 = vlaneseq
    %v947 = vshrl.u32 %v946, 7
    %v948 = vsub.s32 0, %v947
    %v949 = vrot.slane %v944, %v948
    %951 = vmatprep.subr.mxu0 0.0
    %952 = vmatpush1.msra.mxu0 %v939
    %953 = vmatprep.subr.mxu0 0.0
    %954 = vmatpush1.msra.mxu0 %v940
    %955 = vmatprep.subr.mxu0 0.0
    %956 = vmatpush1.msra.mxu0 %v941
    %957 = vmatprep.subr.mxu0 0.0
    %958 = vmatpush1.msra.mxu0 %v942
    %959 = vmatprep.subr.mxu0 0.0
    %960 = vmatpush1.msra.mxu0 0.0
    %961 = vmatprep.subr.mxu0 0.0
    %962 = vmatpush1.msra.mxu0 0.0
    %963 = vmatprep.subr.mxu0 0.0
    %964 = vmatpush1.msra.mxu0 0.0
    %965 = vmatprep.subr.mxu0 0.0
    %966 = vmatpush1.msra.mxu0 0.0
    %967 = vmatprep.subr.mxu0 0.0
    %968 = vmatpush1.msra.mxu0 0.0
    %969 = vmatprep.subr.mxu0 0.0
    %970 = vmatpush1.msra.mxu0 0.0
    %971 = vmatprep.subr.mxu0 0.0
    %972 = vmatpush1.msra.mxu0 0.0
    %973 = vmatprep.subr.mxu0 0.0
    %974 = vmatpush1.msra.mxu0 0.0
    %975 = vmatprep.subr.mxu0 0.0
    %976 = vmatpush1.msra.mxu0 0.0
    %977 = vmatprep.subr.mxu0 0.0
    %978 = vmatpush1.msra.mxu0 0.0
    %979 = vmatprep.subr.mxu0 0.0
    %980 = vmatpush1.msra.mxu0 0.0
    %981 = vmatprep.subr.mxu0 0.0
    %982 = vmatpush1.msra.mxu0 0.0
    %983 = vmatprep.subr.mxu0 0.0
    %984 = vmatpush1.msra.mxu0 0.0
    %985 = vmatprep.subr.mxu0 0.0
    %986 = vmatpush1.msra.mxu0 0.0
    %987 = vmatprep.subr.mxu0 0.0
    %988 = vmatpush1.msra.mxu0 0.0
    %989 = vmatprep.subr.mxu0 0.0
    %990 = vmatpush1.msra.mxu0 0.0
    %991 = vmatprep.subr.mxu0 0.0
    %992 = vmatpush1.msra.mxu0 0.0
    %993 = vmatprep.subr.mxu0 0.0
    %994 = vmatpush1.msra.mxu0 0.0
    %995 = vmatprep.subr.mxu0 0.0
    %996 = vmatpush1.msra.mxu0 0.0
    %997 = vmatprep.subr.mxu0 0.0
    %998 = vmatpush1.msra.mxu0 0.0
    %999 = vmatprep.subr.mxu0 0.0
    %1000 = vmatpush1.msra.mxu0 0.0
    %1001 = vmatprep.subr.mxu0 0.0
    %1002 = vmatpush1.msra.mxu0 0.0
    %1003 = vmatprep.subr.mxu0 0.0
    %1004 = vmatpush1.msra.mxu0 0.0
    %1005 = vmatprep.subr.mxu0 0.0
    %1006 = vmatpush1.msra.mxu0 0.0
    %1007 = vmatprep.subr.mxu0 0.0
    %1008 = vmatpush1.msra.mxu0 0.0
    %1009 = vmatprep.subr.mxu0 0.0
    %1010 = vmatpush1.msra.mxu0 0.0
    %1011 = vmatprep.subr.mxu0 0.0
    %1012 = vmatpush1.msra.mxu0 0.0
    %1013 = vmatprep.subr.mxu0 0.0
    %1014 = vmatpush1.msra.mxu0 0.0
    %1015 = vmatprep.mubr.f32.mxu0 0.0
    %1016 = vmatmul.mubr.f32.gmra.mrb[0].mxu0 %v242
    %v1017 = vpop.f32.mrb[0].mxu0
    %v1018 = vadd.f32 %v949, %v1017
    %v1019 = vpop.f32.mrb[0].mxu0
    %1020 = vmatprep.mubr.f32.mxu0 0.0
    %1021 = vmatmul.mubr.f32.gmra.mrb[0].mxu0 %v245
    %v1022 = vpop.f32.mrb[0].mxu0
    %v1023 = vadd.f32 %v949, %v1022
    %v1024 = vpop.f32.mrb[0].mxu0
    %1025 = vdwg.mxu0
    %v1028 = vcombine.high %v1018, %v1018
    %v1030 = vunpack.c.l.s4 1983009808
    %v1031 = vunpack.c.0.s8 %v1030
    %v1032 = vlaneseq
    %v1033 = vshrl.u32 %v1032, 7
    %v1034 = vsub.s32 %v1031, %v1033
    %v1035 = vrot.slane %v1018, %v1034
    %v1037 = vunpack.c.l.s4 1983009808
    %v1038 = vunpack.c.0.s8 %v1037
    %v1039 = vlaneseq
    %v1040 = vshrl.u32 %v1039, 7
    %v1041 = vsub.s32 %v1038, %v1040
    %v1042 = vrot.slane %v1028, %v1041
    %v1043 = vcombine.high %v1035, %v1035
    %v1044 = vcombine.high %v1042, %v1042
    %v1045 = vcombine.high %v1023, %v1023
    %v1047 = vunpack.c.l.s4 1983009808
    %v1048 = vunpack.c.0.s8 %v1047
    %v1049 = vlaneseq
    %v1050 = vshrl.u32 %v1049, 7
    %v1051 = vsub.s32 %v1048, %v1050
    %v1052 = vrot.slane %v1023, %v1051
    %v1054 = vunpack.c.l.s4 1983009808
    %v1055 = vunpack.c.0.s8 %v1054
    %v1056 = vlaneseq
    %v1057 = vshrl.u32 %v1056, 7
    %v1058 = vsub.s32 %v1055, %v1057
    %v1059 = vrot.slane %v1045, %v1058
    %v1060 = vcombine.high %v1052, %v1052
    %v1061 = vcombine.high %v1059, %v1059
    %s1070 = scalar_lea.vmem [#allocation3], 32
    %1071 = vst.msk [vmem:[%s1070] sm:$0x3] %vm366, %v1035
    %1072 = vst.msk [vmem:[%s1070 + $0x2] sm:$0x3] %vm366, %v1043
    %1073 = vst.msk [vmem:[%s1070 + $0x4] sm:$0x3] %vm366, %v1042
    %1074 = vst.msk [vmem:[%s1070 + $0x6] sm:$0x3] %vm366, %v1044
    %1075 = vst.msk [vmem:[%s1070 + $0x8] sm:$0x3] %vm366, %v1052
    %1076 = vst.msk [vmem:[%s1070 + $0xa] sm:$0x3] %vm366, %v1060
    %1077 = vst.msk [vmem:[%s1070 + $0xc] sm:$0x3] %vm366, %v1059
    %1078 = vst.msk [vmem:[%s1070 + $0xe] sm:$0x3] %vm366, %v1061
    loop: start=0, step=1, limit=8
    $region134: #{_forward_jit.1} parent=1 // loop_pre_header
      _
    $region135: #{_forward_jit.1} parent=1 // loop_header
      %s1080 = sphi 0, %s1084
      %p1081 = scmp.ge.s32.totalorder %s1080, 8
      %v1085 = vphi 0.0, %v1369
      %v1086 = vphi 0.0, %v1655
    $region136: #{_forward_jit.1} parent=1 // loop_header_branch
      %1083 = sbr.rel (%p1081) target = $region140
    $region137: #{_forward_jit.1} parent=1 // loop_body
      %s1087 = ssub.s32 7, %s1080
      %s1088 = smul.u32 %s1080, 2
      %s1089 = scalar_lea.vmem [#allocation2], %s1088
      %v1090 = vld [vmem:[%s1089] sm:$0x3]
      %s1091 = sadd.s32 %s1080, 8
      %s1092 = smul.u32 %s1091, 2
      %s1093 = scalar_lea.vmem [#allocation2], %s1092
      %v1094 = vld [vmem:[%s1093] sm:$0x3]
      %s1095 = sadd.s32 %s1080, 16
      %s1096 = smul.u32 %s1095, 2
      %s1097 = scalar_lea.vmem [#allocation2], %s1096
      %v1098 = vld [vmem:[%s1097] sm:$0x3]
      %v1099 = vld [vmem:[%s4] sm:$0xff]
      %v1100 = vld [vmem:[%s4 + $0x8] sm:$0xff]
      %v1101 = vld [vmem:[%s4 + $0x10] sm:$0xff]
      %v1102 = vld [vmem:[%s4 + $0x18] sm:$0xff]
      %v1103 = vld [vmem:[#allocation8] sm:$0x1]
      %v1105 = vlaneseq
      %v1106 = vshrl.u32 %v1105, 7
      %v1107 = vsub.s32 0, %v1106
      %v1108 = vrot.slane %v1103, %v1107
      %v1111 = vsel %vm240, %v1085, 0
      %1113 = vmatprep.subr.mxu0 0.0
      %1114 = vmatpush1.msra.mxu0 %v1099
      %1115 = vmatprep.subr.mxu0 0.0
      %1116 = vmatpush1.msra.mxu0 %v1100
      %1117 = vmatprep.subr.mxu0 0.0
      %1118 = vmatpush1.msra.mxu0 %v1101
      %1119 = vmatprep.subr.mxu0 0.0
      %1120 = vmatpush1.msra.mxu0 %v1102
      %1121 = vmatprep.subr.mxu0 0.0
      %1122 = vmatpush1.msra.mxu0 0.0
      %1123 = vmatprep.subr.mxu0 0.0
      %1124 = vmatpush1.msra.mxu0 0.0
      %1125 = vmatprep.subr.mxu0 0.0
      %1126 = vmatpush1.msra.mxu0 0.0
      %1127 = vmatprep.subr.mxu0 0.0
      %1128 = vmatpush1.msra.mxu0 0.0
      %1129 = vmatprep.subr.mxu0 0.0
      %1130 = vmatpush1.msra.mxu0 0.0
      %1131 = vmatprep.subr.mxu0 0.0
      %1132 = vmatpush1.msra.mxu0 0.0
      %1133 = vmatprep.subr.mxu0 0.0
      %1134 = vmatpush1.msra.mxu0 0.0
      %1135 = vmatprep.subr.mxu0 0.0
      %1136 = vmatpush1.msra.mxu0 0.0
      %1137 = vmatprep.subr.mxu0 0.0
      %1138 = vmatpush1.msra.mxu0 0.0
      %1139 = vmatprep.subr.mxu0 0.0
      %1140 = vmatpush1.msra.mxu0 0.0
      %1141 = vmatprep.subr.mxu0 0.0
      %1142 = vmatpush1.msra.mxu0 0.0
      %1143 = vmatprep.subr.mxu0 0.0
      %1144 = vmatpush1.msra.mxu0 0.0
      %1145 = vmatprep.subr.mxu0 0.0
      %1146 = vmatpush1.msra.mxu0 0.0
      %1147 = vmatprep.subr.mxu0 0.0
      %1148 = vmatpush1.msra.mxu0 0.0
      %1149 = vmatprep.subr.mxu0 0.0
      %1150 = vmatpush1.msra.mxu0 0.0
      %1151 = vmatprep.subr.mxu0 0.0
      %1152 = vmatpush1.msra.mxu0 0.0
      %1153 = vmatprep.subr.mxu0 0.0
      %1154 = vmatpush1.msra.mxu0 0.0
      %1155 = vmatprep.subr.mxu0 0.0
      %1156 = vmatpush1.msra.mxu0 0.0
      %1157 = vmatprep.subr.mxu0 0.0
      %1158 = vmatpush1.msra.mxu0 0.0
      %1159 = vmatprep.subr.mxu0 0.0
      %1160 = vmatpush1.msra.mxu0 0.0
      %1161 = vmatprep.subr.mxu0 0.0
      %1162 = vmatpush1.msra.mxu0 0.0
      %1163 = vmatprep.subr.mxu0 0.0
      %1164 = vmatpush1.msra.mxu0 0.0
      %1165 = vmatprep.subr.mxu0 0.0
      %1166 = vmatpush1.msra.mxu0 0.0
      %1167 = vmatprep.subr.mxu0 0.0
      %1168 = vmatpush1.msra.mxu0 0.0
      %1169 = vmatprep.subr.mxu0 0.0
      %1170 = vmatpush1.msra.mxu0 0.0
      %1171 = vmatprep.subr.mxu0 0.0
      %1172 = vmatpush1.msra.mxu0 0.0
      %1173 = vmatprep.subr.mxu0 0.0
      %1174 = vmatpush1.msra.mxu0 0.0
      %1175 = vmatprep.subr.mxu0 0.0
      %1176 = vmatpush1.msra.mxu0 0.0
      %1177 = vmatprep.mubr.f32.mxu0 0.0
      %1178 = vmatmul.mubr.f32.gmra.mrb[0].mxu0 %v1111
      %v1179 = vpop.f32.mrb[0].mxu0
      %v1180 = vadd.f32 %v1108, %v1179
      %v1181 = vpop.f32.mrb[0].mxu0
      %1182 = vdwg.mxu0
      %s1183 = scalar_lea.vmem %s4, 32
      %v1184 = vld [vmem:[%s1183] sm:$0xff]
      %v1185 = vld [vmem:[%s1183 + $0x8] sm:$0xff]
      %v1186 = vld [vmem:[%s1183 + $0x10] sm:$0xff]
      %v1187 = vld [vmem:[%s1183 + $0x18] sm:$0xff]
      %s1188 = scalar_lea.vmem [#allocation8], 1
      %v1189 = vld [vmem:[%s1188] sm:$0x1]
      %v1191 = vlaneseq
      %v1192 = vshrl.u32 %v1191, 7
      %v1193 = vsub.s32 0, %v1192
      %v1194 = vrot.slane %v1189, %v1193
      %1196 = vmatprep.subr.mxu0 0.0
      %1197 = vmatpush1.msra.mxu0 %v1184
      %1198 = vmatprep.subr.mxu0 0.0
      %1199 = vmatpush1.msra.mxu0 %v1185
      %1200 = vmatprep.subr.mxu0 0.0
      %1201 = vmatpush1.msra.mxu0 %v1186
      %1202 = vmatprep.subr.mxu0 0.0
      %1203 = vmatpush1.msra.mxu0 %v1187
      %1204 = vmatprep.subr.mxu0 0.0
      %1205 = vmatpush1.msra.mxu0 0.0
      %1206 = vmatprep.subr.mxu0 0.0
      %1207 = vmatpush1.msra.mxu0 0.0
      %1208 = vmatprep.subr.mxu0 0.0
      %1209 = vmatpush1.msra.mxu0 0.0
      %1210 = vmatprep.subr.mxu0 0.0
      %1211 = vmatpush1.msra.mxu0 0.0
      %1212 = vmatprep.subr.mxu0 0.0
      %1213 = vmatpush1.msra.mxu0 0.0
      %1214 = vmatprep.subr.mxu0 0.0
      %1215 = vmatpush1.msra.mxu0 0.0
      %1216 = vmatprep.subr.mxu0 0.0
      %1217 = vmatpush1.msra.mxu0 0.0
      %1218 = vmatprep.subr.mxu0 0.0
      %1219 = vmatpush1.msra.mxu0 0.0
      %1220 = vmatprep.subr.mxu0 0.0
      %1221 = vmatpush1.msra.mxu0 0.0
      %1222 = vmatprep.subr.mxu0 0.0
      %1223 = vmatpush1.msra.mxu0 0.0
      %1224 = vmatprep.subr.mxu0 0.0
      %1225 = vmatpush1.msra.mxu0 0.0
      %1226 = vmatprep.subr.mxu0 0.0
      %1227 = vmatpush1.msra.mxu0 0.0
      %1228 = vmatprep.subr.mxu0 0.0
      %1229 = vmatpush1.msra.mxu0 0.0
      %1230 = vmatprep.subr.mxu0 0.0
      %1231 = vmatpush1.msra.mxu0 0.0
      %1232 = vmatprep.subr.mxu0 0.0
      %1233 = vmatpush1.msra.mxu0 0.0
      %1234 = vmatprep.subr.mxu0 0.0
      %1235 = vmatpush1.msra.mxu0 0.0
      %1236 = vmatprep.subr.mxu0 0.0
      %1237 = vmatpush1.msra.mxu0 0.0
      %1238 = vmatprep.subr.mxu0 0.0
      %1239 = vmatpush1.msra.mxu0 0.0
      %1240 = vmatprep.subr.mxu0 0.0
      %1241 = vmatpush1.msra.mxu0 0.0
      %1242 = vmatprep.subr.mxu0 0.0
      %1243 = vmatpush1.msra.mxu0 0.0
      %1244 = vmatprep.subr.mxu0 0.0
      %1245 = vmatpush1.msra.mxu0 0.0
      %1246 = vmatprep.subr.mxu0 0.0
      %1247 = vmatpush1.msra.mxu0 0.0
      %1248 = vmatprep.subr.mxu0 0.0
      %1249 = vmatpush1.msra.mxu0 0.0
      %1250 = vmatprep.subr.mxu0 0.0
      %1251 = vmatpush1.msra.mxu0 0.0
      %1252 = vmatprep.subr.mxu0 0.0
      %1253 = vmatpush1.msra.mxu0 0.0
      %1254 = vmatprep.subr.mxu0 0.0
      %1255 = vmatpush1.msra.mxu0 0.0
      %1256 = vmatprep.subr.mxu0 0.0
      %1257 = vmatpush1.msra.mxu0 0.0
      %1258 = vmatprep.subr.mxu0 0.0
      %1259 = vmatpush1.msra.mxu0 0.0
      %1260 = vmatprep.mubr.f32.mxu0 0.0
      %1261 = vmatmul.mubr.f32.gmra.mrb[0].mxu0 %v1111
      %v1262 = vpop.f32.mrb[0].mxu0
      %v1263 = vadd.f32 %v1194, %v1262
      %v1264 = vpop.f32.mrb[0].mxu0
      %1265 = vdwg.mxu0
      %s1266 = scalar_lea.vmem %s4, 64
      %v1267 = vld [vmem:[%s1266] sm:$0xff]
      %v1268 = vld [vmem:[%s1266 + $0x8] sm:$0xff]
      %v1269 = vld [vmem:[%s1266 + $0x10] sm:$0xff]
      %v1270 = vld [vmem:[%s1266 + $0x18] sm:$0xff]
      %s1271 = scalar_lea.vmem [#allocation8], 2
      %v1272 = vld [vmem:[%s1271] sm:$0x1]
      %v1274 = vlaneseq
      %v1275 = vshrl.u32 %v1274, 7
      %v1276 = vsub.s32 0, %v1275
      %v1277 = vrot.slane %v1272, %v1276
      %1279 = vmatprep.subr.mxu0 0.0
      %1280 = vmatpush1.msra.mxu0 %v1267
      %1281 = vmatprep.subr.mxu0 0.0
      %1282 = vmatpush1.msra.mxu0 %v1268
      %1283 = vmatprep.subr.mxu0 0.0
      %1284 = vmatpush1.msra.mxu0 %v1269
      %1285 = vmatprep.subr.mxu0 0.0
      %1286 = vmatpush1.msra.mxu0 %v1270
      %1287 = vmatprep.subr.mxu0 0.0
      %1288 = vmatpush1.msra.mxu0 0.0
      %1289 = vmatprep.subr.mxu0 0.0
      %1290 = vmatpush1.msra.mxu0 0.0
      %1291 = vmatprep.subr.mxu0 0.0
      %1292 = vmatpush1.msra.mxu0 0.0
      %1293 = vmatprep.subr.mxu0 0.0
      %1294 = vmatpush1.msra.mxu0 0.0
      %1295 = vmatprep.subr.mxu0 0.0
      %1296 = vmatpush1.msra.mxu0 0.0
      %1297 = vmatprep.subr.mxu0 0.0
      %1298 = vmatpush1.msra.mxu0 0.0
      %1299 = vmatprep.subr.mxu0 0.0
      %1300 = vmatpush1.msra.mxu0 0.0
      %1301 = vmatprep.subr.mxu0 0.0
      %1302 = vmatpush1.msra.mxu0 0.0
      %1303 = vmatprep.subr.mxu0 0.0
      %1304 = vmatpush1.msra.mxu0 0.0
      %1305 = vmatprep.subr.mxu0 0.0
      %1306 = vmatpush1.msra.mxu0 0.0
      %1307 = vmatprep.subr.mxu0 0.0
      %1308 = vmatpush1.msra.mxu0 0.0
      %1309 = vmatprep.subr.mxu0 0.0
      %1310 = vmatpush1.msra.mxu0 0.0
      %1311 = vmatprep.subr.mxu0 0.0
      %1312 = vmatpush1.msra.mxu0 0.0
      %1313 = vmatprep.subr.mxu0 0.0
      %1314 = vmatpush1.msra.mxu0 0.0
      %1315 = vmatprep.subr.mxu0 0.0
      %1316 = vmatpush1.msra.mxu0 0.0
      %1317 = vmatprep.subr.mxu0 0.0
      %1318 = vmatpush1.msra.mxu0 0.0
      %1319 = vmatprep.subr.mxu0 0.0
      %1320 = vmatpush1.msra.mxu0 0.0
      %1321 = vmatprep.subr.mxu0 0.0
      %1322 = vmatpush1.msra.mxu0 0.0
      %1323 = vmatprep.subr.mxu0 0.0
      %1324 = vmatpush1.msra.mxu0 0.0
      %1325 = vmatprep.subr.mxu0 0.0
      %1326 = vmatpush1.msra.mxu0 0.0
      %1327 = vmatprep.subr.mxu0 0.0
      %1328 = vmatpush1.msra.mxu0 0.0
      %1329 = vmatprep.subr.mxu0 0.0
      %1330 = vmatpush1.msra.mxu0 0.0
      %1331 = vmatprep.subr.mxu0 0.0
      %1332 = vmatpush1.msra.mxu0 0.0
      %1333 = vmatprep.subr.mxu0 0.0
      %1334 = vmatpush1.msra.mxu0 0.0
      %1335 = vmatprep.subr.mxu0 0.0
      %1336 = vmatpush1.msra.mxu0 0.0
      %1337 = vmatprep.subr.mxu0 0.0
      %1338 = vmatpush1.msra.mxu0 0.0
      %1339 = vmatprep.subr.mxu0 0.0
      %1340 = vmatpush1.msra.mxu0 0.0
      %1341 = vmatprep.subr.mxu0 0.0
      %1342 = vmatpush1.msra.mxu0 0.0
      %1343 = vmatprep.mubr.f32.mxu0 0.0
      %1344 = vmatmul.mubr.f32.gmra.mrb[0].mxu0 %v1111
      %v1345 = vpop.f32.mrb[0].mxu0
      %v1346 = vadd.f32 %v1277, %v1345
      %v1347 = vpop.f32.mrb[0].mxu0
      %1348 = vdwg.mxu0
      %v1349 = vadd.f32 %v1090, %v1180
      %v1350 = vxor.u32 %v1349, 2147483648
      %v1351 = vmul.f32 %v1350, 1.442695
      %v1352 = vpow.pop %v1351
      %v1353 = vadd.f32 %v1352, 1.0
      %v1354 = vrcp.pop %v1353
      %v1355 = vmul.f32 1.0, %v1354
      %v1356 = vadd.f32 %v1094, %v1263
      %v1357 = vxor.u32 %v1356, 2147483648
      %v1358 = vmul.f32 %v1357, 1.442695
      %v1359 = vpow.pop %v1358
      %v1360 = vadd.f32 %v1359, 1.0
      %v1361 = vrcp.pop %v1360
      %v1362 = vmul.f32 1.0, %v1361
      %v1363 = vmul.f32 %v1355, %v1346
      %v1364 = vadd.f32 %v1098, %v1363
      %v1365 = vtanh.pop %v1364
      %v1366 = vsub.f32 1.0, %v1362
      %v1367 = vmul.f32 %v1366, %v1365
      %v1368 = vmul.f32 %v1362, %v1085
      %v1369 = vadd.f32 %v1367, %v1368
      %s1370 = scalar_lea.vmem [#allocation4], %s1088
      %1371 = vst.msk [vmem:[%s1370] sm:$0x3] %vm366, %v1369
      %s1372 = smul.u32 %s1087, 2
      %s1373 = scalar_lea.vmem [#allocation3], %s1372
      %v1374 = vld [vmem:[%s1373] sm:$0x3]
      %s1375 = ssub.s32 15, %s1080
      %s1376 = smul.u32 %s1375, 2
      %s1377 = scalar_lea.vmem [#allocation3], %s1376
      %v1378 = vld [vmem:[%s1377] sm:$0x3]
      %s1379 = ssub.s32 23, %s1080
      %s1380 = smul.u32 %s1379, 2
      %s1381 = scalar_lea.vmem [#allocation3], %s1380
      %v1382 = vld [vmem:[%s1381] sm:$0x3]
      %s1383 = scalar_lea.vmem %s4, 96
      %v1384 = vld [vmem:[%s1383] sm:$0xff]
      %v1385 = vld [vmem:[%s1383 + $0x8] sm:$0xff]
      %v1386 = vld [vmem:[%s1383 + $0x10] sm:$0xff]
      %v1387 = vld [vmem:[%s1383 + $0x18] sm:$0xff]
      %s1388 = scalar_lea.vmem [#allocation8], 3
      %v1389 = vld [vmem:[%s1388] sm:$0x1]
      %v1391 = vlaneseq
      %v1392 = vshrl.u32 %v1391, 7
      %v1393 = vsub.s32 0, %v1392
      %v1394 = vrot.slane %v1389, %v1393
      %v1397 = vsel %vm240, %v1086, 0
      %1399 = vmatprep.subr.mxu0 0.0
      %1400 = vmatpush1.msra.mxu0 %v1384
      %1401 = vmatprep.subr.mxu0 0.0
      %1402 = vmatpush1.msra.mxu0 %v1385
      %1403 = vmatprep.subr.mxu0 0.0
      %1404 = vmatpush1.msra.mxu0 %v1386
      %1405 = vmatprep.subr.mxu0 0.0
      %1406 = vmatpush1.msra.mxu0 %v1387
      %1407 = vmatprep.subr.mxu0 0.0
      %1408 = vmatpush1.msra.mxu0 0.0
      %1409 = vmatprep.subr.mxu0 0.0
      %1410 = vmatpush1.msra.mxu0 0.0
      %1411 = vmatprep.subr.mxu0 0.0
      %1412 = vmatpush1.msra.mxu0 0.0
      %1413 = vmatprep.subr.mxu0 0.0
      %1414 = vmatpush1.msra.mxu0 0.0
      %1415 = vmatprep.subr.mxu0 0.0
      %1416 = vmatpush1.msra.mxu0 0.0
      %1417 = vmatprep.subr.mxu0 0.0
      %1418 = vmatpush1.msra.mxu0 0.0
      %1419 = vmatprep.subr.mxu0 0.0
      %1420 = vmatpush1.msra.mxu0 0.0
      %1421 = vmatprep.subr.mxu0 0.0
      %1422 = vmatpush1.msra.mxu0 0.0
      %1423 = vmatprep.subr.mxu0 0.0
      %1424 = vmatpush1.msra.mxu0 0.0
      %1425 = vmatprep.subr.mxu0 0.0
      %1426 = vmatpush1.msra.mxu0 0.0
      %1427 = vmatprep.subr.mxu0 0.0
      %1428 = vmatpush1.msra.mxu0 0.0
      %1429 = vmatprep.subr.mxu0 0.0
      %1430 = vmatpush1.msra.mxu0 0.0
      %1431 = vmatprep.subr.mxu0 0.0
      %1432 = vmatpush1.msra.mxu0 0.0
      %1433 = vmatprep.subr.mxu0 0.0
      %1434 = vmatpush1.msra.mxu0 0.0
      %1435 = vmatprep.subr.mxu0 0.0
      %1436 = vmatpush1.msra.mxu0 0.0
      %1437 = vmatprep.subr.mxu0 0.0
      %1438 = vmatpush1.msra.mxu0 0.0
      %1439 = vmatprep.subr.mxu0 0.0
      %1440 = vmatpush1.msra.mxu0 0.0
      %1441 = vmatprep.subr.mxu0 0.0
      %1442 = vmatpush1.msra.mxu0 0.0
      %1443 = vmatprep.subr.mxu0 0.0
      %1444 = vmatpush1.msra.mxu0 0.0
      %1445 = vmatprep.subr.mxu0 0.0
      %1446 = vmatpush1.msra.mxu0 0.0
      %1447 = vmatprep.subr.mxu0 0.0
      %1448 = vmatpush1.msra.mxu0 0.0
      %1449 = vmatprep.subr.mxu0 0.0
      %1450 = vmatpush1.msra.mxu0 0.0
      %1451 = vmatprep.subr.mxu0 0.0
      %1452 = vmatpush1.msra.mxu0 0.0
      %1453 = vmatprep.subr.mxu0 0.0
      %1454 = vmatpush1.msra.mxu0 0.0
      %1455 = vmatprep.subr.mxu0 0.0
      %1456 = vmatpush1.msra.mxu0 0.0
      %1457 = vmatprep.subr.mxu0 0.0
      %1458 = vmatpush1.msra.mxu0 0.0
      %1459 = vmatprep.subr.mxu0 0.0
      %1460 = vmatpush1.msra.mxu0 0.0
      %1461 = vmatprep.subr.mxu0 0.0
      %1462 = vmatpush1.msra.mxu0 0.0
      %1463 = vmatprep.mubr.f32.mxu0 0.0
      %1464 = vmatmul.mubr.f32.gmra.mrb[0].mxu0 %v1397
      %v1465 = vpop.f32.mrb[0].mxu0
      %v1466 = vadd.f32 %v1394, %v1465
      %v1467 = vpop.f32.mrb[0].mxu0
      %1468 = vdwg.mxu0
      %s1469 = scalar_lea.vmem %s4, 128
      %v1470 = vld [vmem:[%s1469] sm:$0xff]
      %v1471 = vld [vmem:[%s1469 + $0x8] sm:$0xff]
      %v1472 = vld [vmem:[%s1469 + $0x10] sm:$0xff]
      %v1473 = vld [vmem:[%s1469 + $0x18] sm:$0xff]
      %s1474 = scalar_lea.vmem [#allocation8], 4
      %v1475 = vld [vmem:[%s1474] sm:$0x1]
      %v1477 = vlaneseq
      %v1478 = vshrl.u32 %v1477, 7
      %v1479 = vsub.s32 0, %v1478
      %v1480 = vrot.slane %v1475, %v1479
      %1482 = vmatprep.subr.mxu0 0.0
      %1483 = vmatpush1.msra.mxu0 %v1470
      %1484 = vmatprep.subr.mxu0 0.0
      %1485 = vmatpush1.msra.mxu0 %v1471
      %1486 = vmatprep.subr.mxu0 0.0
      %1487 = vmatpush1.msra.mxu0 %v1472
      %1488 = vmatprep.subr.mxu0 0.0
      %1489 = vmatpush1.msra.mxu0 %v1473
      %1490 = vmatprep.subr.mxu0 0.0
      %1491 = vmatpush1.msra.mxu0 0.0
      %1492 = vmatprep.subr.mxu0 0.0
      %1493 = vmatpush1.msra.mxu0 0.0
      %1494 = vmatprep.subr.mxu0 0.0
      %1495 = vmatpush1.msra.mxu0 0.0
      %1496 = vmatprep.subr.mxu0 0.0
      %1497 = vmatpush1.msra.mxu0 0.0
      %1498 = vmatprep.subr.mxu0 0.0
      %1499 = vmatpush1.msra.mxu0 0.0
      %1500 = vmatprep.subr.mxu0 0.0
      %1501 = vmatpush1.msra.mxu0 0.0
      %1502 = vmatprep.subr.mxu0 0.0
      %1503 = vmatpush1.msra.mxu0 0.0
      %1504 = vmatprep.subr.mxu0 0.0
      %1505 = vmatpush1.msra.mxu0 0.0
      %1506 = vmatprep.subr.mxu0 0.0
      %1507 = vmatpush1.msra.mxu0 0.0
      %1508 = vmatprep.subr.mxu0 0.0
      %1509 = vmatpush1.msra.mxu0 0.0
      %1510 = vmatprep.subr.mxu0 0.0
      %1511 = vmatpush1.msra.mxu0 0.0
      %1512 = vmatprep.subr.mxu0 0.0
      %1513 = vmatpush1.msra.mxu0 0.0
      %1514 = vmatprep.subr.mxu0 0.0
      %1515 = vmatpush1.msra.mxu0 0.0
      %1516 = vmatprep.subr.mxu0 0.0
      %1517 = vmatpush1.msra.mxu0 0.0
      %1518 = vmatprep.subr.mxu0 0.0
      %1519 = vmatpush1.msra.mxu0 0.0
      %1520 = vmatprep.subr.mxu0 0.0
      %1521 = vmatpush1.msra.mxu0 0.0
      %1522 = vmatprep.subr.mxu0 0.0
      %1523 = vmatpush1.msra.mxu0 0.0
      %1524 = vmatprep.subr.mxu0 0.0
      %1525 = vmatpush1.msra.mxu0 0.0
      %1526 = vmatprep.subr.mxu0 0.0
      %1527 = vmatpush1.msra.mxu0 0.0
      %1528 = vmatprep.subr.mxu0 0.0
      %1529 = vmatpush1.msra.mxu0 0.0
      %1530 = vmatprep.subr.mxu0 0.0
      %1531 = vmatpush1.msra.mxu0 0.0
      %1532 = vmatprep.subr.mxu0 0.0
      %1533 = vmatpush1.msra.mxu0 0.0
      %1534 = vmatprep.subr.mxu0 0.0
      %1535 = vmatpush1.msra.mxu0 0.0
      %1536 = vmatprep.subr.mxu0 0.0
      %1537 = vmatpush1.msra.mxu0 0.0
      %1538 = vmatprep.subr.mxu0 0.0
      %1539 = vmatpush1.msra.mxu0 0.0
      %1540 = vmatprep.subr.mxu0 0.0
      %1541 = vmatpush1.msra.mxu0 0.0
      %1542 = vmatprep.subr.mxu0 0.0
      %1543 = vmatpush1.msra.mxu0 0.0
      %1544 = vmatprep.subr.mxu0 0.0
      %1545 = vmatpush1.msra.mxu0 0.0
      %1546 = vmatprep.mubr.f32.mxu0 0.0
      %1547 = vmatmul.mubr.f32.gmra.mrb[0].mxu0 %v1397
      %v1548 = vpop.f32.mrb[0].mxu0
      %v1549 = vadd.f32 %v1480, %v1548
      %v1550 = vpop.f32.mrb[0].mxu0
      %1551 = vdwg.mxu0
      %s1552 = scalar_lea.vmem %s4, 160
      %v1553 = vld [vmem:[%s1552] sm:$0xff]
      %v1554 = vld [vmem:[%s1552 + $0x8] sm:$0xff]
      %v1555 = vld [vmem:[%s1552 + $0x10] sm:$0xff]
      %v1556 = vld [vmem:[%s1552 + $0x18] sm:$0xff]
      %s1557 = scalar_lea.vmem [#allocation8], 5
      %v1558 = vld [vmem:[%s1557] sm:$0x1]
      %v1560 = vlaneseq
      %v1561 = vshrl.u32 %v1560, 7
      %v1562 = vsub.s32 0, %v1561
      %v1563 = vrot.slane %v1558, %v1562
      %1565 = vmatprep.subr.mxu0 0.0
      %1566 = vmatpush1.msra.mxu0 %v1553
      %1567 = vmatprep.subr.mxu0 0.0
      %1568 = vmatpush1.msra.mxu0 %v1554
      %1569 = vmatprep.subr.mxu0 0.0
      %1570 = vmatpush1.msra.mxu0 %v1555
      %1571 = vmatprep.subr.mxu0 0.0
      %1572 = vmatpush1.msra.mxu0 %v1556
      %1573 = vmatprep.subr.mxu0 0.0
      %1574 = vmatpush1.msra.mxu0 0.0
      %1575 = vmatprep.subr.mxu0 0.0
      %1576 = vmatpush1.msra.mxu0 0.0
      %1577 = vmatprep.subr.mxu0 0.0
      %1578 = vmatpush1.msra.mxu0 0.0
      %1579 = vmatprep.subr.mxu0 0.0
      %1580 = vmatpush1.msra.mxu0 0.0
      %1581 = vmatprep.subr.mxu0 0.0
      %1582 = vmatpush1.msra.mxu0 0.0
      %1583 = vmatprep.subr.mxu0 0.0
      %1584 = vmatpush1.msra.mxu0 0.0
      %1585 = vmatprep.subr.mxu0 0.0
      %1586 = vmatpush1.msra.mxu0 0.0
      %1587 = vmatprep.subr.mxu0 0.0
      %1588 = vmatpush1.msra.mxu0 0.0
      %1589 = vmatprep.subr.mxu0 0.0
      %1590 = vmatpush1.msra.mxu0 0.0
      %1591 = vmatprep.subr.mxu0 0.0
      %1592 = vmatpush1.msra.mxu0 0.0
      %1593 = vmatprep.subr.mxu0 0.0
      %1594 = vmatpush1.msra.mxu0 0.0
      %1595 = vmatprep.subr.mxu0 0.0
      %1596 = vmatpush1.msra.mxu0 0.0
      %1597 = vmatprep.subr.mxu0 0.0
      %1598 = vmatpush1.msra.mxu0 0.0
      %1599 = vmatprep.subr.mxu0 0.0
      %1600 = vmatpush1.msra.mxu0 0.0
      %1601 = vmatprep.subr.mxu0 0.0
      %1602 = vmatpush1.msra.mxu0 0.0
      %1603 = vmatprep.subr.mxu0 0.0
      %1604 = vmatpush1.msra.mxu0 0.0
      %1605 = vmatprep.subr.mxu0 0.0
      %1606 = vmatpush1.msra.mxu0 0.0
      %1607 = vmatprep.subr.mxu0 0.0
      %1608 = vmatpush1.msra.mxu0 0.0
      %1609 = vmatprep.subr.mxu0 0.0
      %1610 = vmatpush1.msra.mxu0 0.0
      %1611 = vmatprep.subr.mxu0 0.0
      %1612 = vmatpush1.msra.mxu0 0.0
      %1613 = vmatprep.subr.mxu0 0.0
      %1614 = vmatpush1.msra.mxu0 0.0
      %1615 = vmatprep.subr.mxu0 0.0
      %1616 = vmatpush1.msra.mxu0 0.0
      %1617 = vmatprep.subr.mxu0 0.0
      %1618 = vmatpush1.msra.mxu0 0.0
      %1619 = vmatprep.subr.mxu0 0.0
      %1620 = vmatpush1.msra.mxu0 0.0
      %1621 = vmatprep.subr.mxu0 0.0
      %1622 = vmatpush1.msra.mxu0 0.0
      %1623 = vmatprep.subr.mxu0 0.0
      %1624 = vmatpush1.msra.mxu0 0.0
      %1625 = vmatprep.subr.mxu0 0.0
      %1626 = vmatpush1.msra.mxu0 0.0
      %1627 = vmatprep.subr.mxu0 0.0
      %1628 = vmatpush1.msra.mxu0 0.0
      %1629 = vmatprep.mubr.f32.mxu0 0.0
      %1630 = vmatmul.mubr.f32.gmra.mrb[0].mxu0 %v1397
      %v1631 = vpop.f32.mrb[0].mxu0
      %v1632 = vadd.f32 %v1563, %v1631
      %v1633 = vpop.f32.mrb[0].mxu0
      %1634 = vdwg.mxu0
      %v1635 = vadd.f32 %v1374, %v1466
      %v1636 = vxor.u32 %v1635, 2147483648
      %v1637 = vmul.f32 %v1636, 1.442695
      %v1638 = vpow.pop %v1637
      %v1639 = vadd.f32 %v1638, 1.0
      %v1640 = vrcp.pop %v1639
      %v1641 = vmul.f32 1.0, %v1640
      %v1642 = vadd.f32 %v1378, %v1549
      %v1643 = vxor.u32 %v1642, 2147483648
      %v1644 = vmul.f32 %v1643, 1.442695
      %v1645 = vpow.pop %v1644
      %v1646 = vadd.f32 %v1645, 1.0
      %v1647 = vrcp.pop %v1646
      %v1648 = vmul.f32 1.0, %v1647
      %v1649 = vmul.f32 %v1641, %v1632
      %v1650 = vadd.f32 %v1382, %v1649
      %v1651 = vtanh.pop %v1650
      %v1652 = vsub.f32 1.0, %v1648
      %v1653 = vmul.f32 %v1652, %v1651
      %v1654 = vmul.f32 %v1648, %v1086
      %v1655 = vadd.f32 %v1653, %v1654
      %s1656 = scalar_lea.vmem [#allocation5], %s1372
      %1657 = vst.msk [vmem:[%s1656] sm:$0x3] %vm366, %v1655
    $region138: #{_forward_jit.1} parent=1 // loop_footer
      %s1084 = sadd.s32 1, %s1080
    $region139: #{_forward_jit.1} parent=1 // loop_footer_branch
      %1079 = sbr.rel target = $region135
    $region140: #{_forward_jit.1} parent=1 // loop_exit
      _
    %v1658 = vld [vmem:[#allocation4] sm:$0x3]
    %v1659 = vld [vmem:[#allocation4 + $0x2] sm:$0x3]
    %v1660 = vld [vmem:[#allocation4 + $0x4] sm:$0x3]
    %v1661 = vld [vmem:[#allocation4 + $0x6] sm:$0x3]
    %v1662 = vld [vmem:[#allocation4 + $0x8] sm:$0x3]
    %v1663 = vld [vmem:[#allocation4 + $0xa] sm:$0x3]
    %v1664 = vld [vmem:[#allocation4 + $0xc] sm:$0x3]
    %v1665 = vld [vmem:[#allocation4 + $0xe] sm:$0x3]
    %v1666 = vld [vmem:[#allocation5] sm:$0x3]
    %v1667 = vld [vmem:[#allocation5 + $0x2] sm:$0x3]
    %v1668 = vld [vmem:[#allocation5 + $0x4] sm:$0x3]
    %v1669 = vld [vmem:[#allocation5 + $0x6] sm:$0x3]
    %v1670 = vld [vmem:[#allocation5 + $0x8] sm:$0x3]
    %v1671 = vld [vmem:[#allocation5 + $0xa] sm:$0x3]
    %v1672 = vld [vmem:[#allocation5 + $0xc] sm:$0x3]
    %v1673 = vld [vmem:[#allocation5 + $0xe] sm:$0x3]
    %1682 = vrot.lane.b32.xlu0 %v1666, 32
    %v1683 = vpop.permute.xlu0 %1682
    %1684 = vrot.lane.b32.xlu0 %v1667, 32
    %v1685 = vpop.permute.xlu0 %1684
    %1686 = vrot.lane.b32.xlu0 %v1668, 32
    %v1687 = vpop.permute.xlu0 %1686
    %1688 = vrot.lane.b32.xlu0 %v1669, 32
    %v1689 = vpop.permute.xlu0 %1688
    %1690 = vrot.lane.b32.xlu0 %v1670, 32
    %v1691 = vpop.permute.xlu0 %1690
    %1692 = vrot.lane.b32.xlu0 %v1671, 32
    %v1693 = vpop.permute.xlu0 %1692
    %1694 = vrot.lane.b32.xlu0 %v1672, 32
    %v1695 = vpop.permute.xlu0 %1694
    %1696 = vrot.lane.b32.xlu0 %v1673, 32
    %v1697 = vpop.permute.xlu0 %1696
    %v1706 = vsel %vm240, %v1658, %v1683
    %v1707 = vsel %vm240, %v1659, %v1685
    %v1708 = vsel %vm240, %v1660, %v1687
    %v1709 = vsel %vm240, %v1661, %v1689
    %v1710 = vsel %vm240, %v1662, %v1691
    %v1711 = vsel %vm240, %v1663, %v1693
    %v1712 = vsel %vm240, %v1664, %v1695
    %v1713 = vsel %vm240, %v1665, %v1697
    %1715 = vrot.lane.b32.xlu0 %v1086, 32
    %v1716 = vpop.permute.xlu0 %1715
    %v1718 = vsel %vm240, %v1085, %v1716
    %v1719 = vld [vmem:[%s8] sm:$0xff]
    %v1720 = vld [vmem:[%s8 + $0x8] sm:$0xff]
    %v1721 = vld [vmem:[%s8 + $0x10] sm:$0xff]
    %v1722 = vld [vmem:[%s8 + $0x18] sm:$0xff]
    %v1723 = vld [vmem:[%s8 + $0x20] sm:$0xff]
    %v1724 = vld [vmem:[%s8 + $0x28] sm:$0xff]
    %v1725 = vld [vmem:[%s8 + $0x30] sm:$0xff]
    %v1726 = vld [vmem:[%s8 + $0x38] sm:$0xff]
    %v1727 = vld [vmem:[#allocation10] sm:$0x1]
    %v1729 = vlaneseq
    %v1730 = vshrl.u32 %v1729, 7
    %v1731 = vsub.s32 0, %v1730
    %v1732 = vrot.slane %v1727, %v1731
    %v1742 = vcombine.low %v1706, %v1707
    %v1743 = vcombine.low %v1708, %v1709
    %v1745 = vunpack.c.l.s4 1983009808
    %v1746 = vunpack.c.0.s8 %v1745
    %v1747 = vlaneseq
    %v1748 = vshrl.u32 %v1747, 7
    %v1749 = vsub.s32 %v1746, %v1748
    %v1750 = vrot.slane %v1742, %v1749
    %v1752 = vunpack.c.l.s4 1983009808
    %v1753 = vunpack.c.0.s8 %v1752
    %v1754 = vlaneseq
    %v1755 = vshrl.u32 %v1754, 7
    %v1756 = vsub.s32 %v1753, %v1755
    %v1757 = vrot.slane %v1743, %v1756
    %v1758 = vcombine.low %v1750, %v1757
    %v1759 = vcombine.low %v1710, %v1711
    %v1760 = vcombine.low %v1712, %v1713
    %v1762 = vunpack.c.l.s4 1983009808
    %v1763 = vunpack.c.0.s8 %v1762
    %v1764 = vlaneseq
    %v1765 = vshrl.u32 %v1764, 7
    %v1766 = vsub.s32 %v1763, %v1765
    %v1767 = vrot.slane %v1759, %v1766
    %v1769 = vunpack.c.l.s4 1983009808
    %v1770 = vunpack.c.0.s8 %v1769
    %v1771 = vlaneseq
    %v1772 = vshrl.u32 %v1771, 7
    %v1773 = vsub.s32 %v1770, %v1772
    %v1774 = vrot.slane %v1760, %v1773
    %v1775 = vcombine.low %v1767, %v1774
    %vm1776 = vcmask 523264
    %v1777 = vsel %vm1776, %v1758, 0
    %v1779 = vsel %vm1776, %v1775, 0
    %1781 = vmatprep.subr.mxu0 0.0
    %1782 = vmatpush1.msra.mxu0 %v1719
    %1783 = vmatprep.subr.mxu0 0.0
    %1784 = vmatpush1.msra.mxu0 %v1720
    %1785 = vmatprep.subr.mxu0 0.0
    %1786 = vmatpush1.msra.mxu0 %v1721
    %1787 = vmatprep.subr.mxu0 0.0
    %1788 = vmatpush1.msra.mxu0 %v1722
    %1789 = vmatprep.subr.mxu0 0.0
    %1790 = vmatpush1.msra.mxu0 %v1723
    %1791 = vmatprep.subr.mxu0 0.0
    %1792 = vmatpush1.msra.mxu0 %v1724
    %1793 = vmatprep.subr.mxu0 0.0
    %1794 = vmatpush1.msra.mxu0 %v1725
    %1795 = vmatprep.subr.mxu0 0.0
    %1796 = vmatpush1.msra.mxu0 %v1726
    %1797 = vmatprep.subr.mxu0 0.0
    %1798 = vmatpush1.msra.mxu0 0.0
    %1799 = vmatprep.subr.mxu0 0.0
    %1800 = vmatpush1.msra.mxu0 0.0
    %1801 = vmatprep.subr.mxu0 0.0
    %1802 = vmatpush1.msra.mxu0 0.0
    %1803 = vmatprep.subr.mxu0 0.0
    %1804 = vmatpush1.msra.mxu0 0.0
    %1805 = vmatprep.subr.mxu0 0.0
    %1806 = vmatpush1.msra.mxu0 0.0
    %1807 = vmatprep.subr.mxu0 0.0
    %1808 = vmatpush1.msra.mxu0 0.0
    %1809 = vmatprep.subr.mxu0 0.0
    %1810 = vmatpush1.msra.mxu0 0.0
    %1811 = vmatprep.subr.mxu0 0.0
    %1812 = vmatpush1.msra.mxu0 0.0
    %1813 = vmatprep.subr.mxu0 0.0
    %1814 = vmatpush1.msra.mxu0 0.0
    %1815 = vmatprep.subr.mxu0 0.0
    %1816 = vmatpush1.msra.mxu0 0.0
    %1817 = vmatprep.subr.mxu0 0.0
    %1818 = vmatpush1.msra.mxu0 0.0
    %1819 = vmatprep.subr.mxu0 0.0
    %1820 = vmatpush1.msra.mxu0 0.0
    %1821 = vmatprep.subr.mxu0 0.0
    %1822 = vmatpush1.msra.mxu0 0.0
    %1823 = vmatprep.subr.mxu0 0.0
    %1824 = vmatpush1.msra.mxu0 0.0
    %1825 = vmatprep.subr.mxu0 0.0
    %1826 = vmatpush1.msra.mxu0 0.0
    %1827 = vmatprep.subr.mxu0 0.0
    %1828 = vmatpush1.msra.mxu0 0.0
    %1829 = vmatprep.subr.mxu0 0.0
    %1830 = vmatpush1.msra.mxu0 0.0
    %1831 = vmatprep.subr.mxu0 0.0
    %1832 = vmatpush1.msra.mxu0 0.0
    %1833 = vmatprep.subr.mxu0 0.0
    %1834 = vmatpush1.msra.mxu0 0.0
    %1835 = vmatprep.subr.mxu0 0.0
    %1836 = vmatpush1.msra.mxu0 0.0
    %1837 = vmatprep.subr.mxu0 0.0
    %1838 = vmatpush1.msra.mxu0 0.0
    %1839 = vmatprep.subr.mxu0 0.0
    %1840 = vmatpush1.msra.mxu0 0.0
    %1841 = vmatprep.subr.mxu0 0.0
    %1842 = vmatpush1.msra.mxu0 0.0
    %1843 = vmatprep.subr.mxu0 0.0
    %1844 = vmatpush1.msra.mxu0 0.0
    %1845 = vmatprep.mubr.f32.mxu0 0.0
    %1846 = vmatmul.mubr.f32.gmra.mrb[0].mxu0 %v1777
    %v1847 = vpop.f32.mrb[0].mxu0
    %v1848 = vadd.f32 %v1732, %v1847
    %v1849 = vpop.f32.mrb[0].mxu0
    %1850 = vmatprep.mubr.f32.mxu0 0.0
    %1851 = vmatmul.mubr.f32.gmra.mrb[0].mxu0 %v1779
    %v1852 = vpop.f32.mrb[0].mxu0
    %v1853 = vadd.f32 %v1732, %v1852
    %v1854 = vpop.f32.mrb[0].mxu0
    %1855 = vdwg.mxu0
    %v1858 = vcombine.high %v1848, %v1848
    %v1860 = vunpack.c.l.s4 1983009808
    %v1861 = vunpack.c.0.s8 %v1860
    %v1862 = vlaneseq
    %v1863 = vshrl.u32 %v1862, 7
    %v1864 = vsub.s32 %v1861, %v1863
    %v1865 = vrot.slane %v1848, %v1864
    %v1867 = vunpack.c.l.s4 1983009808
    %v1868 = vunpack.c.0.s8 %v1867
    %v1869 = vlaneseq
    %v1870 = vshrl.u32 %v1869, 7
    %v1871 = vsub.s32 %v1868, %v1870
    %v1872 = vrot.slane %v1858, %v1871
    %v1873 = vcombine.high %v1865, %v1865
    %v1874 = vcombine.high %v1872, %v1872
    %v1875 = vcombine.high %v1853, %v1853
    %v1877 = vunpack.c.l.s4 1983009808
    %v1878 = vunpack.c.0.s8 %v1877
    %v1879 = vlaneseq
    %v1880 = vshrl.u32 %v1879, 7
    %v1881 = vsub.s32 %v1878, %v1880
    %v1882 = vrot.slane %v1853, %v1881
    %v1884 = vunpack.c.l.s4 1983009808
    %v1885 = vunpack.c.0.s8 %v1884
    %v1886 = vlaneseq
    %v1887 = vshrl.u32 %v1886, 7
    %v1888 = vsub.s32 %v1885, %v1887
    %v1889 = vrot.slane %v1875, %v1888
    %v1890 = vcombine.high %v1882, %v1882
    %v1891 = vcombine.high %v1889, %v1889
    %v1900 = vld [vmem:[#allocation11] sm:$0x1]
    %v1901 = vlaneseq
    %v1902 = vand.u32 %v1901, 127
    %v1903 = vcvt.s32.f32 %v1902
    loop: start=0, step=1, limit=8
    $region141: #{_forward_jit.1} parent=1 // loop_pre_header
      _
    $region142: #{_forward_jit.1} parent=1 // loop_header
      %s1905 = sphi 0, %s1909
      %p1906 = scmp.ge.s32.totalorder %s1905, 8
      %v1910 = vphi %v1718, %v2906
      %v1911 = vphi 0.0, %v3271
    $region143: #{_forward_jit.1} parent=1 // loop_header_branch
      %1908 = sbr.rel (%p1906) target = $region147
    $region144: #{_forward_jit.1} parent=1 // loop_body
      %v1912 = vld [vmem:[%s7] sm:$0xff]
      %v1913 = vld [vmem:[%s7 + $0x8] sm:$0xff]
      %v1914 = vld [vmem:[%s7 + $0x10] sm:$0xff]
      %v1915 = vld [vmem:[%s7 + $0x18] sm:$0xff]
      %v1916 = vld [vmem:[%s7 + $0x20] sm:$0xff]
      %v1917 = vld [vmem:[%s7 + $0x28] sm:$0xff]
      %v1918 = vld [vmem:[%s7 + $0x30] sm:$0xff]
      %v1919 = vld [vmem:[%s7 + $0x38] sm:$0xff]
      %v1921 = vsel %vm1776, %v1910, 0
      %1923 = vmatprep.subr.mxu0 0.0
      %1924 = vmatpush1.msra.mxu0 %v1912
      %1925 = vmatprep.subr.mxu0 0.0
      %1926 = vmatpush1.msra.mxu0 %v1913
      %1927 = vmatprep.subr.mxu0 0.0
      %1928 = vmatpush1.msra.mxu0 %v1914
      %1929 = vmatprep.subr.mxu0 0.0
      %1930 = vmatpush1.msra.mxu0 %v1915
      %1931 = vmatprep.subr.mxu0 0.0
      %1932 = vmatpush1.msra.mxu0 %v1916
      %1933 = vmatprep.subr.mxu0 0.0
      %1934 = vmatpush1.msra.mxu0 %v1917
      %1935 = vmatprep.subr.mxu0 0.0
      %1936 = vmatpush1.msra.mxu0 %v1918
      %1937 = vmatprep.subr.mxu0 0.0
      %1938 = vmatpush1.msra.mxu0 %v1919
      %1939 = vmatprep.subr.mxu0 0.0
      %1940 = vmatpush1.msra.mxu0 0.0
      %1941 = vmatprep.subr.mxu0 0.0
      %1942 = vmatpush1.msra.mxu0 0.0
      %1943 = vmatprep.subr.mxu0 0.0
      %1944 = vmatpush1.msra.mxu0 0.0
      %1945 = vmatprep.subr.mxu0 0.0
      %1946 = vmatpush1.msra.mxu0 0.0
      %1947 = vmatprep.subr.mxu0 0.0
      %1948 = vmatpush1.msra.mxu0 0.0
      %1949 = vmatprep.subr.mxu0 0.0
      %1950 = vmatpush1.msra.mxu0 0.0
      %1951 = vmatprep.subr.mxu0 0.0
      %1952 = vmatpush1.msra.mxu0 0.0
      %1953 = vmatprep.subr.mxu0 0.0
      %1954 = vmatpush1.msra.mxu0 0.0
      %1955 = vmatprep.subr.mxu0 0.0
      %1956 = vmatpush1.msra.mxu0 0.0
      %1957 = vmatprep.subr.mxu0 0.0
      %1958 = vmatpush1.msra.mxu0 0.0
      %1959 = vmatprep.subr.mxu0 0.0
      %1960 = vmatpush1.msra.mxu0 0.0
      %1961 = vmatprep.subr.mxu0 0.0
      %1962 = vmatpush1.msra.mxu0 0.0
      %1963 = vmatprep.subr.mxu0 0.0
      %1964 = vmatpush1.msra.mxu0 0.0
      %1965 = vmatprep.subr.mxu0 0.0
      %1966 = vmatpush1.msra.mxu0 0.0
      %1967 = vmatprep.subr.mxu0 0.0
      %1968 = vmatpush1.msra.mxu0 0.0
      %1969 = vmatprep.subr.mxu0 0.0
      %1970 = vmatpush1.msra.mxu0 0.0
      %1971 = vmatprep.subr.mxu0 0.0
      %1972 = vmatpush1.msra.mxu0 0.0
      %1973 = vmatprep.subr.mxu0 0.0
      %1974 = vmatpush1.msra.mxu0 0.0
      %1975 = vmatprep.subr.mxu0 0.0
      %1976 = vmatpush1.msra.mxu0 0.0
      %1977 = vmatprep.subr.mxu0 0.0
      %1978 = vmatpush1.msra.mxu0 0.0
      %1979 = vmatprep.subr.mxu0 0.0
      %1980 = vmatpush1.msra.mxu0 0.0
      %1981 = vmatprep.subr.mxu0 0.0
      %1982 = vmatpush1.msra.mxu0 0.0
      %1983 = vmatprep.subr.mxu0 0.0
      %1984 = vmatpush1.msra.mxu0 0.0
      %1985 = vmatprep.subr.mxu0 0.0
      %1986 = vmatpush1.msra.mxu0 0.0
      %1987 = vmatprep.mubr.f32.mxu0 0.0
      %1988 = vmatmul.mubr.f32.gmra.mrb[0].mxu0 %v1921
      %v1989 = vpop.f32.mrb[0].mxu0
      %v1990 = vadd.f32 0.0, %v1989
      %v1991 = vpop.f32.mrb[0].mxu0
      %1992 = vdwg.mxu0
      %v1993 = vadd.f32 %v1990, %v1865
      %v1994 = vadd.f32 %v1990, %v1873
      %v1995 = vadd.f32 %v1990, %v1872
      %v1996 = vadd.f32 %v1990, %v1874
      %v1997 = vadd.f32 %v1990, %v1882
      %v1998 = vadd.f32 %v1990, %v1890
      %v1999 = vadd.f32 %v1990, %v1889
      %v2000 = vadd.f32 %v1990, %v1891
      %v2001 = vtanh.pop %v1993
      %v2002 = vtanh.pop %v1994
      %v2003 = vtanh.pop %v1995
      %v2004 = vtanh.pop %v1996
      %v2005 = vtanh.pop %v1997
      %v2006 = vtanh.pop %v1998
      %v2007 = vtanh.pop %v1999
      %v2008 = vtanh.pop %v2000
      %v2010 = vlaneseq
      %v2011 = vshrl.u32 %v2010, 7
      %v2012 = vsub.s32 0, %v2011
      %v2013 = vrot.slane %v1900, %v2012
      %v2015 = vmul.f32 %v2001, %v2013
      %v2016 = vmul.f32 %v2002, %v2013
      %v2017 = vmul.f32 %v2003, %v2013
      %v2018 = vmul.f32 %v2004, %v2013
      %v2019 = vmul.f32 %v2005, %v2013
      %v2020 = vmul.f32 %v2006, %v2013
      %v2021 = vmul.f32 %v2007, %v2013
      %v2022 = vmul.f32 %v2008, %v2013
      %v2023 = vsel %vm366, %v2015, 0.0
      %2024 = vadd.xlane.f32.xlu0 %v2023
      %v2025 = vpop.xlane.xlu0 %2024
      %v2026 = vsel %vm366, %v2016, 0.0
      %2027 = vadd.xlane.f32.xlu0 %v2026
      %v2028 = vpop.xlane.xlu0 %2027
      %v2029 = vsel %vm366, %v2017, 0.0
      %2030 = vadd.xlane.f32.xlu0 %v2029
      %v2031 = vpop.xlane.xlu0 %2030
      %v2032 = vsel %vm366, %v2018, 0.0
      %2033 = vadd.xlane.f32.xlu0 %v2032
      %v2034 = vpop.xlane.xlu0 %2033
      %v2035 = vsel %vm366, %v2019, 0.0
      %2036 = vadd.xlane.f32.xlu0 %v2035
      %v2037 = vpop.xlane.xlu0 %2036
      %v2038 = vsel %vm366, %v2020, 0.0
      %2039 = vadd.xlane.f32.xlu0 %v2038
      %v2040 = vpop.xlane.xlu0 %2039
      %v2041 = vsel %vm366, %v2021, 0.0
      %2042 = vadd.xlane.f32.xlu0 %v2041
      %v2043 = vpop.xlane.xlu0 %2042
      %v2044 = vsel %vm366, %v2022, 0.0
      %2045 = vadd.xlane.f32.xlu0 %v2044
      %v2046 = vpop.xlane.xlu0 %2045
      %vm2047 = vcmask 1041408
      %v2048 = vsel %vm2047, %v2025, -inf
      %v2049 = vsel %vm2047, %v2028, -inf
      %v2050 = vsel %vm2047, %v2031, -inf
      %v2051 = vsel %vm2047, %v2034, -inf
      %v2052 = vsel %vm2047, %v2037, -inf
      %v2053 = vmax.f32 %v2048, %v2052
      %v2054 = vsel %vm2047, %v2040, -inf
      %v2055 = vmax.f32 %v2049, %v2054
      %v2056 = vsel %vm2047, %v2043, -inf
      %v2057 = vmax.f32 %v2050, %v2056
      %v2058 = vsel %vm2047, %v2046, -inf
      %v2059 = vmax.f32 %v2051, %v2058
      %v2060 = vmax.f32 %v2053, %v2055
      %v2061 = vmax.f32 %v2057, %v2059
      %v2062 = vmax.f32 %v2060, %v2061
      %v2063 = vsub.f32 %v2025, %v2062
      %v2064 = vsub.f32 %v2028, %v2062
      %v2065 = vsub.f32 %v2031, %v2062
      %v2066 = vsub.f32 %v2034, %v2062
      %v2067 = vsub.f32 %v2037, %v2062
      %v2068 = vsub.f32 %v2040, %v2062
      %v2069 = vsub.f32 %v2043, %v2062
      %v2070 = vsub.f32 %v2046, %v2062
      %v2071 = vmul.f32 %v2063, 1.442695
      %v2072 = vpow.pop %v2071
      %v2073 = vmul.f32 %v2064, 1.442695
      %v2074 = vpow.pop %v2073
      %v2075 = vmul.f32 %v2065, 1.442695
      %v2076 = vpow.pop %v2075
      %v2077 = vmul.f32 %v2066, 1.442695
      %v2078 = vpow.pop %v2077
      %v2079 = vmul.f32 %v2067, 1.442695
      %v2080 = vpow.pop %v2079
      %v2081 = vmul.f32 %v2068, 1.442695
      %v2082 = vpow.pop %v2081
      %v2083 = vmul.f32 %v2069, 1.442695
      %v2084 = vpow.pop %v2083
      %v2085 = vmul.f32 %v2070, 1.442695
      %v2086 = vpow.pop %v2085
      %v2087 = vsel %vm2047, %v2072, 0.0
      %v2088 = vsel %vm2047, %v2074, 0.0
      %v2089 = vadd.f32 %v2087, %v2088
      %v2090 = vsel %vm2047, %v2076, 0.0
      %v2091 = vadd.f32 %v2089, %v2090
      %v2092 = vsel %vm2047, %v2078, 0.0
      %v2093 = vadd.f32 %v2091, %v2092
      %v2094 = vsel %vm2047, %v2080, 0.0
      %v2095 = vadd.f32 %v2093, %v2094
      %v2096 = vsel %vm2047, %v2082, 0.0
      %v2097 = vadd.f32 %v2095, %v2096
      %v2098 = vsel %vm2047, %v2084, 0.0
      %v2099 = vadd.f32 %v2097, %v2098
      %v2100 = vsel %vm2047, %v2086, 0.0
      %v2101 = vadd.f32 %v2099, %v2100
      %v2102 = vrcp.pop %v2101
      %v2103 = vmul.f32 %v2072, %v2102
      %v2104 = vmul.f32 %v2074, %v2102
      %v2105 = vmul.f32 %v2076, %v2102
      %v2106 = vmul.f32 %v2078, %v2102
      %v2107 = vmul.f32 %v2080, %v2102
      %v2108 = vmul.f32 %v2082, %v2102
      %v2109 = vmul.f32 %v2084, %v2102
      %v2110 = vmul.f32 %v2086, %v2102
      %v2111 = vmul.f32 %v2103, %v1706
      %v2112 = vmul.f32 %v2104, %v1707
      %v2113 = vmul.f32 %v2105, %v1708
      %v2114 = vmul.f32 %v2106, %v1709
      %v2115 = vmul.f32 %v2107, %v1710
      %v2116 = vmul.f32 %v2108, %v1711
      %v2117 = vmul.f32 %v2109, %v1712
      %v2118 = vmul.f32 %v2110, %v1713
      %vm2119 = vcmask 517120
      %v2120 = vsel %vm2119, %v2111, 0.0
      %v2121 = vsel %vm2119, %v2112, 0.0
      %v2122 = vadd.f32 %v2120, %v2121
      %v2123 = vsel %vm2119, %v2113, 0.0
      %v2124 = vadd.f32 %v2122, %v2123
      %v2125 = vsel %vm2119, %v2114, 0.0
      %v2126 = vadd.f32 %v2124, %v2125
      %v2127 = vsel %vm2119, %v2115, 0.0
      %v2128 = vadd.f32 %v2126, %v2127
      %v2129 = vsel %vm2119, %v2116, 0.0
      %v2130 = vadd.f32 %v2128, %v2129
      %v2131 = vsel %vm2119, %v2117, 0.0
      %v2132 = vadd.f32 %v2130, %v2131
      %v2133 = vsel %vm2119, %v2118, 0.0
      %v2134 = vadd.f32 %v2132, %v2133
      %v2135 = vld [vmem:[#allocation13] sm:$0xff]
      %v2136 = vld [vmem:[#allocation13 + $0x8] sm:$0xff]
      %v2137 = vld [vmem:[#allocation13 + $0x10] sm:$0xff]
      %v2138 = vld [vmem:[#allocation13 + $0x18] sm:$0xff]
      %v2139 = vld [vmem:[#allocation14] sm:$0xff]
      %v2140 = vld [vmem:[#allocation14 + $0x8] sm:$0xff]
      %v2141 = vld [vmem:[#allocation14 + $0x10] sm:$0xff]
      %v2142 = vld [vmem:[#allocation14 + $0x18] sm:$0xff]
      %v2143 = vld [vmem:[#allocation14 + $0x20] sm:$0xff]
      %v2144 = vld [vmem:[#allocation14 + $0x28] sm:$0xff]
      %v2145 = vld [vmem:[#allocation14 + $0x30] sm:$0xff]
      %v2146 = vld [vmem:[#allocation14 + $0x38] sm:$0xff]
      %v2148 = vsel %vm1776, %v2134, 0
      %2150 = vmatprep.subr.mxu0 0.0
      %2151 = vmatpush1.msra.mxu0 %v2139
      %2152 = vmatprep.subr.mxu0 0.0
      %2153 = vmatpush1.msra.mxu0 %v2140
      %2154 = vmatprep.subr.mxu0 0.0
      %2155 = vmatpush1.msra.mxu0 %v2141
      %2156 = vmatprep.subr.mxu0 0.0
      %2157 = vmatpush1.msra.mxu0 %v2142
      %2158 = vmatprep.subr.mxu0 0.0
      %2159 = vmatpush1.msra.mxu0 %v2143
      %2160 = vmatprep.subr.mxu0 0.0
      %2161 = vmatpush1.msra.mxu0 %v2144
      %2162 = vmatprep.subr.mxu0 0.0
      %2163 = vmatpush1.msra.mxu0 %v2145
      %2164 = vmatprep.subr.mxu0 0.0
      %2165 = vmatpush1.msra.mxu0 %v2146
      %2166 = vmatprep.subr.mxu0 0.0
      %2167 = vmatpush1.msra.mxu0 0.0
      %2168 = vmatprep.subr.mxu0 0.0
      %2169 = vmatpush1.msra.mxu0 0.0
      %2170 = vmatprep.subr.mxu0 0.0
      %2171 = vmatpush1.msra.mxu0 0.0
      %2172 = vmatprep.subr.mxu0 0.0
      %2173 = vmatpush1.msra.mxu0 0.0
      %2174 = vmatprep.subr.mxu0 0.0
      %2175 = vmatpush1.msra.mxu0 0.0
      %2176 = vmatprep.subr.mxu0 0.0
      %2177 = vmatpush1.msra.mxu0 0.0
      %2178 = vmatprep.subr.mxu0 0.0
      %2179 = vmatpush1.msra.mxu0 0.0
      %2180 = vmatprep.subr.mxu0 0.0
      %2181 = vmatpush1.msra.mxu0 0.0
      %2182 = vmatprep.subr.mxu0 0.0
      %2183 = vmatpush1.msra.mxu0 0.0
      %2184 = vmatprep.subr.mxu0 0.0
      %2185 = vmatpush1.msra.mxu0 0.0
      %2186 = vmatprep.subr.mxu0 0.0
      %2187 = vmatpush1.msra.mxu0 0.0
      %2188 = vmatprep.subr.mxu0 0.0
      %2189 = vmatpush1.msra.mxu0 0.0
      %2190 = vmatprep.subr.mxu0 0.0
      %2191 = vmatpush1.msra.mxu0 0.0
      %2192 = vmatprep.subr.mxu0 0.0
      %2193 = vmatpush1.msra.mxu0 0.0
      %2194 = vmatprep.subr.mxu0 0.0
      %2195 = vmatpush1.msra.mxu0 0.0
      %2196 = vmatprep.subr.mxu0 0.0
      %2197 = vmatpush1.msra.mxu0 0.0
      %2198 = vmatprep.subr.mxu0 0.0
      %2199 = vmatpush1.msra.mxu0 0.0
      %2200 = vmatprep.subr.mxu0 0.0
      %2201 = vmatpush1.msra.mxu0 0.0
      %2202 = vmatprep.subr.mxu0 0.0
      %2203 = vmatpush1.msra.mxu0 0.0
      %2204 = vmatprep.subr.mxu0 0.0
      %2205 = vmatpush1.msra.mxu0 0.0
      %2206 = vmatprep.subr.mxu0 0.0
      %2207 = vmatpush1.msra.mxu0 0.0
      %2208 = vmatprep.subr.mxu0 0.0
      %2209 = vmatpush1.msra.mxu0 0.0
      %2210 = vmatprep.subr.mxu0 0.0
      %2211 = vmatpush1.msra.mxu0 0.0
      %2212 = vmatprep.subr.mxu0 0.0
      %2213 = vmatpush1.msra.mxu0 0.0
      %2214 = vmatprep.mubr.f32.mxu0 0.0
      %2215 = vmatmul.mubr.f32.gmra.mrb[0].mxu0 %v2148
      %v2216 = vpop.f32.mrb[0].mxu0
      %v2217 = vadd.f32 0.0, %v2216
      %v2218 = vpop.f32.mrb[0].mxu0
      %2219 = vdwg.mxu0
      %v2221 = vsel %vm240, %v1911, 0
      %2223 = vmatprep.subr.mxu0 0.0
      %2224 = vmatpush1.msra.mxu0 %v2135
      %2225 = vmatprep.subr.mxu0 0.0
      %2226 = vmatpush1.msra.mxu0 %v2136
      %2227 = vmatprep.subr.mxu0 0.0
      %2228 = vmatpush1.msra.mxu0 %v2137
      %2229 = vmatprep.subr.mxu0 0.0
      %2230 = vmatpush1.msra.mxu0 %v2138
      %2231 = vmatprep.subr.mxu0 0.0
      %2232 = vmatpush1.msra.mxu0 0.0
      %2233 = vmatprep.subr.mxu0 0.0
      %2234 = vmatpush1.msra.mxu0 0.0
      %2235 = vmatprep.subr.mxu0 0.0
      %2236 = vmatpush1.msra.mxu0 0.0
      %2237 = vmatprep.subr.mxu0 0.0
      %2238 = vmatpush1.msra.mxu0 0.0
      %2239 = vmatprep.subr.mxu0 0.0
      %2240 = vmatpush1.msra.mxu0 0.0
      %2241 = vmatprep.subr.mxu0 0.0
      %2242 = vmatpush1.msra.mxu0 0.0
      %2243 = vmatprep.subr.mxu0 0.0
      %2244 = vmatpush1.msra.mxu0 0.0
      %2245 = vmatprep.subr.mxu0 0.0
      %2246 = vmatpush1.msra.mxu0 0.0
      %2247 = vmatprep.subr.mxu0 0.0
      %2248 = vmatpush1.msra.mxu0 0.0
      %2249 = vmatprep.subr.mxu0 0.0
      %2250 = vmatpush1.msra.mxu0 0.0
      %2251 = vmatprep.subr.mxu0 0.0
      %2252 = vmatpush1.msra.mxu0 0.0
      %2253 = vmatprep.subr.mxu0 0.0
      %2254 = vmatpush1.msra.mxu0 0.0
      %2255 = vmatprep.subr.mxu0 0.0
      %2256 = vmatpush1.msra.mxu0 0.0
      %2257 = vmatprep.subr.mxu0 0.0
      %2258 = vmatpush1.msra.mxu0 0.0
      %2259 = vmatprep.subr.mxu0 0.0
      %2260 = vmatpush1.msra.mxu0 0.0
      %2261 = vmatprep.subr.mxu0 0.0
      %2262 = vmatpush1.msra.mxu0 0.0
      %2263 = vmatprep.subr.mxu0 0.0
      %2264 = vmatpush1.msra.mxu0 0.0
      %2265 = vmatprep.subr.mxu0 0.0
      %2266 = vmatpush1.msra.mxu0 0.0
      %2267 = vmatprep.subr.mxu0 0.0
      %2268 = vmatpush1.msra.mxu0 0.0
      %2269 = vmatprep.subr.mxu0 0.0
      %2270 = vmatpush1.msra.mxu0 0.0
      %2271 = vmatprep.subr.mxu0 0.0
      %2272 = vmatpush1.msra.mxu0 0.0
      %2273 = vmatprep.subr.mxu0 0.0
      %2274 = vmatpush1.msra.mxu0 0.0
      %2275 = vmatprep.subr.mxu0 0.0
      %2276 = vmatpush1.msra.mxu0 0.0
      %2277 = vmatprep.subr.mxu0 0.0
      %2278 = vmatpush1.msra.mxu0 0.0
      %2279 = vmatprep.subr.mxu0 0.0
      %2280 = vmatpush1.msra.mxu0 0.0
      %2281 = vmatprep.subr.mxu0 0.0
      %2282 = vmatpush1.msra.mxu0 0.0
      %2283 = vmatprep.subr.mxu0 0.0
      %2284 = vmatpush1.msra.mxu0 0.0
      %2285 = vmatprep.subr.mxu0 0.0
      %2286 = vmatpush1.msra.mxu0 0.0
      %2287 = vmatprep.mubr.f32.mxu0 0.0
      %2288 = vmatmul.mubr.f32.gmra.mrb[0].mxu0 %v2221
      %v2289 = vpop.f32.mrb[0].mxu0
      %v2290 = vadd.f32 %v2217, %v2289
      %v2291 = vpop.f32.mrb[0].mxu0
      %2292 = vdwg.mxu0
      %v2293 = vld [vmem:[#allocation17] sm:$0x1]
      %v2295 = vlaneseq
      %v2296 = vshrl.u32 %v2295, 7
      %v2297 = vsub.s32 0, %v2296
      %v2298 = vrot.slane %v2293, %v2297
      %v2300 = vadd.f32 %v2290, %v2298
      %v2301 = vld [vmem:[#allocation16] sm:$0xff]
      %v2302 = vld [vmem:[#allocation16 + $0x8] sm:$0xff]
      %v2303 = vld [vmem:[#allocation16 + $0x10] sm:$0xff]
      %v2304 = vld [vmem:[#allocation16 + $0x18] sm:$0xff]
      %v2305 = vld [vmem:[#allocation16 + $0x20] sm:$0xff]
      %v2306 = vld [vmem:[#allocation16 + $0x28] sm:$0xff]
      %v2307 = vld [vmem:[#allocation16 + $0x30] sm:$0xff]
      %v2308 = vld [vmem:[#allocation16 + $0x38] sm:$0xff]
      %v2309 = vld [vmem:[#allocation19] sm:$0x1]
      %v2311 = vlaneseq
      %v2312 = vshrl.u32 %v2311, 7
      %v2313 = vsub.s32 0, %v2312
      %v2314 = vrot.slane %v2309, %v2313
      %2316 = vmatprep.subr.mxu0 0.0
      %2317 = vmatpush1.msra.mxu0 %v2301
      %2318 = vmatprep.subr.mxu0 0.0
      %2319 = vmatpush1.msra.mxu0 %v2302
      %2320 = vmatprep.subr.mxu0 0.0
      %2321 = vmatpush1.msra.mxu0 %v2303
      %2322 = vmatprep.subr.mxu0 0.0
      %2323 = vmatpush1.msra.mxu0 %v2304
      %2324 = vmatprep.subr.mxu0 0.0
      %2325 = vmatpush1.msra.mxu0 %v2305
      %2326 = vmatprep.subr.mxu0 0.0
      %2327 = vmatpush1.msra.mxu0 %v2306
      %2328 = vmatprep.subr.mxu0 0.0
      %2329 = vmatpush1.msra.mxu0 %v2307
      %2330 = vmatprep.subr.mxu0 0.0
      %2331 = vmatpush1.msra.mxu0 %v2308
      %2332 = vmatprep.subr.mxu0 0.0
      %2333 = vmatpush1.msra.mxu0 0.0
      %2334 = vmatprep.subr.mxu0 0.0
      %2335 = vmatpush1.msra.mxu0 0.0
      %2336 = vmatprep.subr.mxu0 0.0
      %2337 = vmatpush1.msra.mxu0 0.0
      %2338 = vmatprep.subr.mxu0 0.0
      %2339 = vmatpush1.msra.mxu0 0.0
      %2340 = vmatprep.subr.mxu0 0.0
      %2341 = vmatpush1.msra.mxu0 0.0
      %2342 = vmatprep.subr.mxu0 0.0
      %2343 = vmatpush1.msra.mxu0 0.0
      %2344 = vmatprep.subr.mxu0 0.0
      %2345 = vmatpush1.msra.mxu0 0.0
      %2346 = vmatprep.subr.mxu0 0.0
      %2347 = vmatpush1.msra.mxu0 0.0
      %2348 = vmatprep.subr.mxu0 0.0
      %2349 = vmatpush1.msra.mxu0 0.0
      %2350 = vmatprep.subr.mxu0 0.0
      %2351 = vmatpush1.msra.mxu0 0.0
      %2352 = vmatprep.subr.mxu0 0.0
      %2353 = vmatpush1.msra.mxu0 0.0
      %2354 = vmatprep.subr.mxu0 0.0
      %2355 = vmatpush1.msra.mxu0 0.0
      %2356 = vmatprep.subr.mxu0 0.0
      %2357 = vmatpush1.msra.mxu0 0.0
      %2358 = vmatprep.subr.mxu0 0.0
      %2359 = vmatpush1.msra.mxu0 0.0
      %2360 = vmatprep.subr.mxu0 0.0
      %2361 = vmatpush1.msra.mxu0 0.0
      %2362 = vmatprep.subr.mxu0 0.0
      %2363 = vmatpush1.msra.mxu0 0.0
      %2364 = vmatprep.subr.mxu0 0.0
      %2365 = vmatpush1.msra.mxu0 0.0
      %2366 = vmatprep.subr.mxu0 0.0
      %2367 = vmatpush1.msra.mxu0 0.0
      %2368 = vmatprep.subr.mxu0 0.0
      %2369 = vmatpush1.msra.mxu0 0.0
      %2370 = vmatprep.subr.mxu0 0.0
      %2371 = vmatpush1.msra.mxu0 0.0
      %2372 = vmatprep.subr.mxu0 0.0
      %2373 = vmatpush1.msra.mxu0 0.0
      %2374 = vmatprep.subr.mxu0 0.0
      %2375 = vmatpush1.msra.mxu0 0.0
      %2376 = vmatprep.subr.mxu0 0.0
      %2377 = vmatpush1.msra.mxu0 0.0
      %2378 = vmatprep.subr.mxu0 0.0
      %2379 = vmatpush1.msra.mxu0 0.0
      %2380 = vmatprep.mubr.f32.mxu0 0.0
      %2381 = vmatmul.mubr.f32.gmra.mrb[0].mxu0 %v1921
      %v2382 = vpop.f32.mrb[0].mxu0
      %v2383 = vadd.f32 %v2314, %v2382
      %v2384 = vpop.f32.mrb[0].mxu0
      %2385 = vdwg.mxu0
      %s2386 = scalar_lea.vmem [#allocation13], 32
      %v2387 = vld [vmem:[%s2386] sm:$0xff]
      %v2388 = vld [vmem:[%s2386 + $0x8] sm:$0xff]
      %v2389 = vld [vmem:[%s2386 + $0x10] sm:$0xff]
      %v2390 = vld [vmem:[%s2386 + $0x18] sm:$0xff]
      %s2391 = scalar_lea.vmem [#allocation14], 64
      %v2392 = vld [vmem:[%s2391] sm:$0xff]
      %v2393 = vld [vmem:[%s2391 + $0x8] sm:$0xff]
      %v2394 = vld [vmem:[%s2391 + $0x10] sm:$0xff]
      %v2395 = vld [vmem:[%s2391 + $0x18] sm:$0xff]
      %v2396 = vld [vmem:[%s2391 + $0x20] sm:$0xff]
      %v2397 = vld [vmem:[%s2391 + $0x28] sm:$0xff]
      %v2398 = vld [vmem:[%s2391 + $0x30] sm:$0xff]
      %v2399 = vld [vmem:[%s2391 + $0x38] sm:$0xff]
      %2400 = vmatprep.subr.mxu0 0.0
      %2401 = vmatpush1.msra.mxu0 %v2392
      %2402 = vmatprep.subr.mxu0 0.0
      %2403 = vmatpush1.msra.mxu0 %v2393
      %2404 = vmatprep.subr.mxu0 0.0
      %2405 = vmatpush1.msra.mxu0 %v2394
      %2406 = vmatprep.subr.mxu0 0.0
      %2407 = vmatpush1.msra.mxu0 %v2395
      %2408 = vmatprep.subr.mxu0 0.0
      %2409 = vmatpush1.msra.mxu0 %v2396
      %2410 = vmatprep.subr.mxu0 0.0
      %2411 = vmatpush1.msra.mxu0 %v2397
      %2412 = vmatprep.subr.mxu0 0.0
      %2413 = vmatpush1.msra.mxu0 %v2398
      %2414 = vmatprep.subr.mxu0 0.0
      %2415 = vmatpush1.msra.mxu0 %v2399
      %2416 = vmatprep.subr.mxu0 0.0
      %2417 = vmatpush1.msra.mxu0 0.0
      %2418 = vmatprep.subr.mxu0 0.0
      %2419 = vmatpush1.msra.mxu0 0.0
      %2420 = vmatprep.subr.mxu0 0.0
      %2421 = vmatpush1.msra.mxu0 0.0
      %2422 = vmatprep.subr.mxu0 0.0
      %2423 = vmatpush1.msra.mxu0 0.0
      %2424 = vmatprep.subr.mxu0 0.0
      %2425 = vmatpush1.msra.mxu0 0.0
      %2426 = vmatprep.subr.mxu0 0.0
      %2427 = vmatpush1.msra.mxu0 0.0
      %2428 = vmatprep.subr.mxu0 0.0
      %2429 = vmatpush1.msra.mxu0 0.0
      %2430 = vmatprep.subr.mxu0 0.0
      %2431 = vmatpush1.msra.mxu0 0.0
      %2432 = vmatprep.subr.mxu0 0.0
      %2433 = vmatpush1.msra.mxu0 0.0
      %2434 = vmatprep.subr.mxu0 0.0
      %2435 = vmatpush1.msra.mxu0 0.0
      %2436 = vmatprep.subr.mxu0 0.0
      %2437 = vmatpush1.msra.mxu0 0.0
      %2438 = vmatprep.subr.mxu0 0.0
      %2439 = vmatpush1.msra.mxu0 0.0
      %2440 = vmatprep.subr.mxu0 0.0
      %2441 = vmatpush1.msra.mxu0 0.0
      %2442 = vmatprep.subr.mxu0 0.0
      %2443 = vmatpush1.msra.mxu0 0.0
      %2444 = vmatprep.subr.mxu0 0.0
      %2445 = vmatpush1.msra.mxu0 0.0
      %2446 = vmatprep.subr.mxu0 0.0
      %2447 = vmatpush1.msra.mxu0 0.0
      %2448 = vmatprep.subr.mxu0 0.0
      %2449 = vmatpush1.msra.mxu0 0.0
      %2450 = vmatprep.subr.mxu0 0.0
      %2451 = vmatpush1.msra.mxu0 0.0
      %2452 = vmatprep.subr.mxu0 0.0
      %2453 = vmatpush1.msra.mxu0 0.0
      %2454 = vmatprep.subr.mxu0 0.0
      %2455 = vmatpush1.msra.mxu0 0.0
      %2456 = vmatprep.subr.mxu0 0.0
      %2457 = vmatpush1.msra.mxu0 0.0
      %2458 = vmatprep.subr.mxu0 0.0
      %2459 = vmatpush1.msra.mxu0 0.0
      %2460 = vmatprep.subr.mxu0 0.0
      %2461 = vmatpush1.msra.mxu0 0.0
      %2462 = vmatprep.subr.mxu0 0.0
      %2463 = vmatpush1.msra.mxu0 0.0
      %2464 = vmatprep.mubr.f32.mxu0 0.0
      %2465 = vmatmul.mubr.f32.gmra.mrb[0].mxu0 %v2148
      %v2466 = vpop.f32.mrb[0].mxu0
      %v2467 = vadd.f32 0.0, %v2466
      %v2468 = vpop.f32.mrb[0].mxu0
      %2469 = vdwg.mxu0
      %2470 = vmatprep.subr.mxu0 0.0
      %2471 = vmatpush1.msra.mxu0 %v2387
      %2472 = vmatprep.subr.mxu0 0.0
      %2473 = vmatpush1.msra.mxu0 %v2388
      %2474 = vmatprep.subr.mxu0 0.0
      %2475 = vmatpush1.msra.mxu0 %v2389
      %2476 = vmatprep.subr.mxu0 0.0
      %2477 = vmatpush1.msra.mxu0 %v2390
      %2478 = vmatprep.subr.mxu0 0.0
      %2479 = vmatpush1.msra.mxu0 0.0
      %2480 = vmatprep.subr.mxu0 0.0
      %2481 = vmatpush1.msra.mxu0 0.0
      %2482 = vmatprep.subr.mxu0 0.0
      %2483 = vmatpush1.msra.mxu0 0.0
      %2484 = vmatprep.subr.mxu0 0.0
      %2485 = vmatpush1.msra.mxu0 0.0
      %2486 = vmatprep.subr.mxu0 0.0
      %2487 = vmatpush1.msra.mxu0 0.0
      %2488 = vmatprep.subr.mxu0 0.0
      %2489 = vmatpush1.msra.mxu0 0.0
      %2490 = vmatprep.subr.mxu0 0.0
      %2491 = vmatpush1.msra.mxu0 0.0
      %2492 = vmatprep.subr.mxu0 0.0
      %2493 = vmatpush1.msra.mxu0 0.0
      %2494 = vmatprep.subr.mxu0 0.0
      %2495 = vmatpush1.msra.mxu0 0.0
      %2496 = vmatprep.subr.mxu0 0.0
      %2497 = vmatpush1.msra.mxu0 0.0
      %2498 = vmatprep.subr.mxu0 0.0
      %2499 = vmatpush1.msra.mxu0 0.0
      %2500 = vmatprep.subr.mxu0 0.0
      %2501 = vmatpush1.msra.mxu0 0.0
      %2502 = vmatprep.subr.mxu0 0.0
      %2503 = vmatpush1.msra.mxu0 0.0
      %2504 = vmatprep.subr.mxu0 0.0
      %2505 = vmatpush1.msra.mxu0 0.0
      %2506 = vmatprep.subr.mxu0 0.0
      %2507 = vmatpush1.msra.mxu0 0.0
      %2508 = vmatprep.subr.mxu0 0.0
      %2509 = vmatpush1.msra.mxu0 0.0
      %2510 = vmatprep.subr.mxu0 0.0
      %2511 = vmatpush1.msra.mxu0 0.0
      %2512 = vmatprep.subr.mxu0 0.0
      %2513 = vmatpush1.msra.mxu0 0.0
      %2514 = vmatprep.subr.mxu0 0.0
      %2515 = vmatpush1.msra.mxu0 0.0
      %2516 = vmatprep.subr.mxu0 0.0
      %2517 = vmatpush1.msra.mxu0 0.0
      %2518 = vmatprep.subr.mxu0 0.0
      %2519 = vmatpush1.msra.mxu0 0.0
      %2520 = vmatprep.subr.mxu0 0.0
      %2521 = vmatpush1.msra.mxu0 0.0
      %2522 = vmatprep.subr.mxu0 0.0
      %2523 = vmatpush1.msra.mxu0 0.0
      %2524 = vmatprep.subr.mxu0 0.0
      %2525 = vmatpush1.msra.mxu0 0.0
      %2526 = vmatprep.subr.mxu0 0.0
      %2527 = vmatpush1.msra.mxu0 0.0
      %2528 = vmatprep.subr.mxu0 0.0
      %2529 = vmatpush1.msra.mxu0 0.0
      %2530 = vmatprep.subr.mxu0 0.0
      %2531 = vmatpush1.msra.mxu0 0.0
      %2532 = vmatprep.subr.mxu0 0.0
      %2533 = vmatpush1.msra.mxu0 0.0
      %2534 = vmatprep.mubr.f32.mxu0 0.0
      %2535 = vmatmul.mubr.f32.gmra.mrb[0].mxu0 %v2221
      %v2536 = vpop.f32.mrb[0].mxu0
      %v2537 = vadd.f32 %v2467, %v2536
      %v2538 = vpop.f32.mrb[0].mxu0
      %2539 = vdwg.mxu0
      %s2540 = scalar_lea.vmem [#allocation17], 1
      %v2541 = vld [vmem:[%s2540] sm:$0x1]
      %v2543 = vlaneseq
      %v2544 = vshrl.u32 %v2543, 7
      %v2545 = vsub.s32 0, %v2544
      %v2546 = vrot.slane %v2541, %v2545
      %v2548 = vadd.f32 %v2537, %v2546
      %s2549 = scalar_lea.vmem [#allocation16], 64
      %v2550 = vld [vmem:[%s2549] sm:$0xff]
      %v2551 = vld [vmem:[%s2549 + $0x8] sm:$0xff]
      %v2552 = vld [vmem:[%s2549 + $0x10] sm:$0xff]
      %v2553 = vld [vmem:[%s2549 + $0x18] sm:$0xff]
      %v2554 = vld [vmem:[%s2549 + $0x20] sm:$0xff]
      %v2555 = vld [vmem:[%s2549 + $0x28] sm:$0xff]
      %v2556 = vld [vmem:[%s2549 + $0x30] sm:$0xff]
      %v2557 = vld [vmem:[%s2549 + $0x38] sm:$0xff]
      %s2558 = scalar_lea.vmem [#allocation19], 1
      %v2559 = vld [vmem:[%s2558] sm:$0x1]
      %v2561 = vlaneseq
      %v2562 = vshrl.u32 %v2561, 7
      %v2563 = vsub.s32 0, %v2562
      %v2564 = vrot.slane %v2559, %v2563
      %2566 = vmatprep.subr.mxu0 0.0
      %2567 = vmatpush1.msra.mxu0 %v2550
      %2568 = vmatprep.subr.mxu0 0.0
      %2569 = vmatpush1.msra.mxu0 %v2551
      %2570 = vmatprep.subr.mxu0 0.0
      %2571 = vmatpush1.msra.mxu0 %v2552
      %2572 = vmatprep.subr.mxu0 0.0
      %2573 = vmatpush1.msra.mxu0 %v2553
      %2574 = vmatprep.subr.mxu0 0.0
      %2575 = vmatpush1.msra.mxu0 %v2554
      %2576 = vmatprep.subr.mxu0 0.0
      %2577 = vmatpush1.msra.mxu0 %v2555
      %2578 = vmatprep.subr.mxu0 0.0
      %2579 = vmatpush1.msra.mxu0 %v2556
      %2580 = vmatprep.subr.mxu0 0.0
      %2581 = vmatpush1.msra.mxu0 %v2557
      %2582 = vmatprep.subr.mxu0 0.0
      %2583 = vmatpush1.msra.mxu0 0.0
      %2584 = vmatprep.subr.mxu0 0.0
      %2585 = vmatpush1.msra.mxu0 0.0
      %2586 = vmatprep.subr.mxu0 0.0
      %2587 = vmatpush1.msra.mxu0 0.0
      %2588 = vmatprep.subr.mxu0 0.0
      %2589 = vmatpush1.msra.mxu0 0.0
      %2590 = vmatprep.subr.mxu0 0.0
      %2591 = vmatpush1.msra.mxu0 0.0
      %2592 = vmatprep.subr.mxu0 0.0
      %2593 = vmatpush1.msra.mxu0 0.0
      %2594 = vmatprep.subr.mxu0 0.0
      %2595 = vmatpush1.msra.mxu0 0.0
      %2596 = vmatprep.subr.mxu0 0.0
      %2597 = vmatpush1.msra.mxu0 0.0
      %2598 = vmatprep.subr.mxu0 0.0
      %2599 = vmatpush1.msra.mxu0 0.0
      %2600 = vmatprep.subr.mxu0 0.0
      %2601 = vmatpush1.msra.mxu0 0.0
      %2602 = vmatprep.subr.mxu0 0.0
      %2603 = vmatpush1.msra.mxu0 0.0
      %2604 = vmatprep.subr.mxu0 0.0
      %2605 = vmatpush1.msra.mxu0 0.0
      %2606 = vmatprep.subr.mxu0 0.0
      %2607 = vmatpush1.msra.mxu0 0.0
      %2608 = vmatprep.subr.mxu0 0.0
      %2609 = vmatpush1.msra.mxu0 0.0
      %2610 = vmatprep.subr.mxu0 0.0
      %2611 = vmatpush1.msra.mxu0 0.0
      %2612 = vmatprep.subr.mxu0 0.0
      %2613 = vmatpush1.msra.mxu0 0.0
      %2614 = vmatprep.subr.mxu0 0.0
      %2615 = vmatpush1.msra.mxu0 0.0
      %2616 = vmatprep.subr.mxu0 0.0
      %2617 = vmatpush1.msra.mxu0 0.0
      %2618 = vmatprep.subr.mxu0 0.0
      %2619 = vmatpush1.msra.mxu0 0.0
      %2620 = vmatprep.subr.mxu0 0.0
      %2621 = vmatpush1.msra.mxu0 0.0
      %2622 = vmatprep.subr.mxu0 0.0
      %2623 = vmatpush1.msra.mxu0 0.0
      %2624 = vmatprep.subr.mxu0 0.0
      %2625 = vmatpush1.msra.mxu0 0.0
      %2626 = vmatprep.subr.mxu0 0.0
      %2627 = vmatpush1.msra.mxu0 0.0
      %2628 = vmatprep.subr.mxu0 0.0
      %2629 = vmatpush1.msra.mxu0 0.0
      %2630 = vmatprep.mubr.f32.mxu0 0.0
      %2631 = vmatmul.mubr.f32.gmra.mrb[0].mxu0 %v1921
      %v2632 = vpop.f32.mrb[0].mxu0
      %v2633 = vadd.f32 %v2564, %v2632
      %v2634 = vpop.f32.mrb[0].mxu0
      %2635 = vdwg.mxu0
      %s2636 = scalar_lea.vmem [#allocation13], 64
      %v2637 = vld [vmem:[%s2636] sm:$0xff]
      %v2638 = vld [vmem:[%s2636 + $0x8] sm:$0xff]
      %v2639 = vld [vmem:[%s2636 + $0x10] sm:$0xff]
      %v2640 = vld [vmem:[%s2636 + $0x18] sm:$0xff]
      %s2641 = scalar_lea.vmem [#allocation14], 128
      %v2642 = vld [vmem:[%s2641] sm:$0xff]
      %v2643 = vld [vmem:[%s2641 + $0x8] sm:$0xff]
      %v2644 = vld [vmem:[%s2641 + $0x10] sm:$0xff]
      %v2645 = vld [vmem:[%s2641 + $0x18] sm:$0xff]
      %v2646 = vld [vmem:[%s2641 + $0x20] sm:$0xff]
      %v2647 = vld [vmem:[%s2641 + $0x28] sm:$0xff]
      %v2648 = vld [vmem:[%s2641 + $0x30] sm:$0xff]
      %v2649 = vld [vmem:[%s2641 + $0x38] sm:$0xff]
      %2650 = vmatprep.subr.mxu0 0.0
      %2651 = vmatpush1.msra.mxu0 %v2642
      %2652 = vmatprep.subr.mxu0 0.0
      %2653 = vmatpush1.msra.mxu0 %v2643
      %2654 = vmatprep.subr.mxu0 0.0
      %2655 = vmatpush1.msra.mxu0 %v2644
      %2656 = vmatprep.subr.mxu0 0.0
      %2657 = vmatpush1.msra.mxu0 %v2645
      %2658 = vmatprep.subr.mxu0 0.0
      %2659 = vmatpush1.msra.mxu0 %v2646
      %2660 = vmatprep.subr.mxu0 0.0
      %2661 = vmatpush1.msra.mxu0 %v2647
      %2662 = vmatprep.subr.mxu0 0.0
      %2663 = vmatpush1.msra.mxu0 %v2648
      %2664 = vmatprep.subr.mxu0 0.0
      %2665 = vmatpush1.msra.mxu0 %v2649
      %2666 = vmatprep.subr.mxu0 0.0
      %2667 = vmatpush1.msra.mxu0 0.0
      %2668 = vmatprep.subr.mxu0 0.0
      %2669 = vmatpush1.msra.mxu0 0.0
      %2670 = vmatprep.subr.mxu0 0.0
      %2671 = vmatpush1.msra.mxu0 0.0
      %2672 = vmatprep.subr.mxu0 0.0
      %2673 = vmatpush1.msra.mxu0 0.0
      %2674 = vmatprep.subr.mxu0 0.0
      %2675 = vmatpush1.msra.mxu0 0.0
      %2676 = vmatprep.subr.mxu0 0.0
      %2677 = vmatpush1.msra.mxu0 0.0
      %2678 = vmatprep.subr.mxu0 0.0
      %2679 = vmatpush1.msra.mxu0 0.0
      %2680 = vmatprep.subr.mxu0 0.0
      %2681 = vmatpush1.msra.mxu0 0.0
      %2682 = vmatprep.subr.mxu0 0.0
      %2683 = vmatpush1.msra.mxu0 0.0
      %2684 = vmatprep.subr.mxu0 0.0
      %2685 = vmatpush1.msra.mxu0 0.0
      %2686 = vmatprep.subr.mxu0 0.0
      %2687 = vmatpush1.msra.mxu0 0.0
      %2688 = vmatprep.subr.mxu0 0.0
      %2689 = vmatpush1.msra.mxu0 0.0
      %2690 = vmatprep.subr.mxu0 0.0
      %2691 = vmatpush1.msra.mxu0 0.0
      %2692 = vmatprep.subr.mxu0 0.0
      %2693 = vmatpush1.msra.mxu0 0.0
      %2694 = vmatprep.subr.mxu0 0.0
      %2695 = vmatpush1.msra.mxu0 0.0
      %2696 = vmatprep.subr.mxu0 0.0
      %2697 = vmatpush1.msra.mxu0 0.0
      %2698 = vmatprep.subr.mxu0 0.0
      %2699 = vmatpush1.msra.mxu0 0.0
      %2700 = vmatprep.subr.mxu0 0.0
      %2701 = vmatpush1.msra.mxu0 0.0
      %2702 = vmatprep.subr.mxu0 0.0
      %2703 = vmatpush1.msra.mxu0 0.0
      %2704 = vmatprep.subr.mxu0 0.0
      %2705 = vmatpush1.msra.mxu0 0.0
      %2706 = vmatprep.subr.mxu0 0.0
      %2707 = vmatpush1.msra.mxu0 0.0
      %2708 = vmatprep.subr.mxu0 0.0
      %2709 = vmatpush1.msra.mxu0 0.0
      %2710 = vmatprep.subr.mxu0 0.0
      %2711 = vmatpush1.msra.mxu0 0.0
      %2712 = vmatprep.subr.mxu0 0.0
      %2713 = vmatpush1.msra.mxu0 0.0
      %2714 = vmatprep.mubr.f32.mxu0 0.0
      %2715 = vmatmul.mubr.f32.gmra.mrb[0].mxu0 %v2148
      %v2716 = vpop.f32.mrb[0].mxu0
      %v2717 = vadd.f32 0.0, %v2716
      %v2718 = vpop.f32.mrb[0].mxu0
      %2719 = vdwg.mxu0
      %2720 = vmatprep.subr.mxu0 0.0
      %2721 = vmatpush1.msra.mxu0 %v2637
      %2722 = vmatprep.subr.mxu0 0.0
      %2723 = vmatpush1.msra.mxu0 %v2638
      %2724 = vmatprep.subr.mxu0 0.0
      %2725 = vmatpush1.msra.mxu0 %v2639
      %2726 = vmatprep.subr.mxu0 0.0
      %2727 = vmatpush1.msra.mxu0 %v2640
      %2728 = vmatprep.subr.mxu0 0.0
      %2729 = vmatpush1.msra.mxu0 0.0
      %2730 = vmatprep.subr.mxu0 0.0
      %2731 = vmatpush1.msra.mxu0 0.0
      %2732 = vmatprep.subr.mxu0 0.0
      %2733 = vmatpush1.msra.mxu0 0.0
      %2734 = vmatprep.subr.mxu0 0.0
      %2735 = vmatpush1.msra.mxu0 0.0
      %2736 = vmatprep.subr.mxu0 0.0
      %2737 = vmatpush1.msra.mxu0 0.0
      %2738 = vmatprep.subr.mxu0 0.0
      %2739 = vmatpush1.msra.mxu0 0.0
      %2740 = vmatprep.subr.mxu0 0.0
      %2741 = vmatpush1.msra.mxu0 0.0
      %2742 = vmatprep.subr.mxu0 0.0
      %2743 = vmatpush1.msra.mxu0 0.0
      %2744 = vmatprep.subr.mxu0 0.0
      %2745 = vmatpush1.msra.mxu0 0.0
      %2746 = vmatprep.subr.mxu0 0.0
      %2747 = vmatpush1.msra.mxu0 0.0
      %2748 = vmatprep.subr.mxu0 0.0
      %2749 = vmatpush1.msra.mxu0 0.0
      %2750 = vmatprep.subr.mxu0 0.0
      %2751 = vmatpush1.msra.mxu0 0.0
      %2752 = vmatprep.subr.mxu0 0.0
      %2753 = vmatpush1.msra.mxu0 0.0
      %2754 = vmatprep.subr.mxu0 0.0
      %2755 = vmatpush1.msra.mxu0 0.0
      %2756 = vmatprep.subr.mxu0 0.0
      %2757 = vmatpush1.msra.mxu0 0.0
      %2758 = vmatprep.subr.mxu0 0.0
      %2759 = vmatpush1.msra.mxu0 0.0
      %2760 = vmatprep.subr.mxu0 0.0
      %2761 = vmatpush1.msra.mxu0 0.0
      %2762 = vmatprep.subr.mxu0 0.0
      %2763 = vmatpush1.msra.mxu0 0.0
      %2764 = vmatprep.subr.mxu0 0.0
      %2765 = vmatpush1.msra.mxu0 0.0
      %2766 = vmatprep.subr.mxu0 0.0
      %2767 = vmatpush1.msra.mxu0 0.0
      %2768 = vmatprep.subr.mxu0 0.0
      %2769 = vmatpush1.msra.mxu0 0.0
      %2770 = vmatprep.subr.mxu0 0.0
      %2771 = vmatpush1.msra.mxu0 0.0
      %2772 = vmatprep.subr.mxu0 0.0
      %2773 = vmatpush1.msra.mxu0 0.0
      %2774 = vmatprep.subr.mxu0 0.0
      %2775 = vmatpush1.msra.mxu0 0.0
      %2776 = vmatprep.subr.mxu0 0.0
      %2777 = vmatpush1.msra.mxu0 0.0
      %2778 = vmatprep.subr.mxu0 0.0
      %2779 = vmatpush1.msra.mxu0 0.0
      %2780 = vmatprep.subr.mxu0 0.0
      %2781 = vmatpush1.msra.mxu0 0.0
      %2782 = vmatprep.subr.mxu0 0.0
      %2783 = vmatpush1.msra.mxu0 0.0
      %2784 = vmatprep.mubr.f32.mxu0 0.0
      %2785 = vmatmul.mubr.f32.gmra.mrb[0].mxu0 %v2221
      %v2786 = vpop.f32.mrb[0].mxu0
      %v2787 = vadd.f32 %v2717, %v2786
      %v2788 = vpop.f32.mrb[0].mxu0
      %2789 = vdwg.mxu0
      %s2790 = scalar_lea.vmem [#allocation17], 2
      %v2791 = vld [vmem:[%s2790] sm:$0x1]
      %v2793 = vlaneseq
      %v2794 = vshrl.u32 %v2793, 7
      %v2795 = vsub.s32 0, %v2794
      %v2796 = vrot.slane %v2791, %v2795
      %v2798 = vadd.f32 %v2787, %v2796
      %s2799 = scalar_lea.vmem [#allocation16], 128
      %v2800 = vld [vmem:[%s2799] sm:$0xff]
      %v2801 = vld [vmem:[%s2799 + $0x8] sm:$0xff]
      %v2802 = vld [vmem:[%s2799 + $0x10] sm:$0xff]
      %v2803 = vld [vmem:[%s2799 + $0x18] sm:$0xff]
      %v2804 = vld [vmem:[%s2799 + $0x20] sm:$0xff]
      %v2805 = vld [vmem:[%s2799 + $0x28] sm:$0xff]
      %v2806 = vld [vmem:[%s2799 + $0x30] sm:$0xff]
      %v2807 = vld [vmem:[%s2799 + $0x38] sm:$0xff]
      %s2808 = scalar_lea.vmem [#allocation19], 2
      %v2809 = vld [vmem:[%s2808] sm:$0x1]
      %v2811 = vlaneseq
      %v2812 = vshrl.u32 %v2811, 7
      %v2813 = vsub.s32 0, %v2812
      %v2814 = vrot.slane %v2809, %v2813
      %2816 = vmatprep.subr.mxu0 0.0
      %2817 = vmatpush1.msra.mxu0 %v2800
      %2818 = vmatprep.subr.mxu0 0.0
      %2819 = vmatpush1.msra.mxu0 %v2801
      %2820 = vmatprep.subr.mxu0 0.0
      %2821 = vmatpush1.msra.mxu0 %v2802
      %2822 = vmatprep.subr.mxu0 0.0
      %2823 = vmatpush1.msra.mxu0 %v2803
      %2824 = vmatprep.subr.mxu0 0.0
      %2825 = vmatpush1.msra.mxu0 %v2804
      %2826 = vmatprep.subr.mxu0 0.0
      %2827 = vmatpush1.msra.mxu0 %v2805
      %2828 = vmatprep.subr.mxu0 0.0
      %2829 = vmatpush1.msra.mxu0 %v2806
      %2830 = vmatprep.subr.mxu0 0.0
      %2831 = vmatpush1.msra.mxu0 %v2807
      %2832 = vmatprep.subr.mxu0 0.0
      %2833 = vmatpush1.msra.mxu0 0.0
      %2834 = vmatprep.subr.mxu0 0.0
      %2835 = vmatpush1.msra.mxu0 0.0
      %2836 = vmatprep.subr.mxu0 0.0
      %2837 = vmatpush1.msra.mxu0 0.0
      %2838 = vmatprep.subr.mxu0 0.0
      %2839 = vmatpush1.msra.mxu0 0.0
      %2840 = vmatprep.subr.mxu0 0.0
      %2841 = vmatpush1.msra.mxu0 0.0
      %2842 = vmatprep.subr.mxu0 0.0
      %2843 = vmatpush1.msra.mxu0 0.0
      %2844 = vmatprep.subr.mxu0 0.0
      %2845 = vmatpush1.msra.mxu0 0.0
      %2846 = vmatprep.subr.mxu0 0.0
      %2847 = vmatpush1.msra.mxu0 0.0
      %2848 = vmatprep.subr.mxu0 0.0
      %2849 = vmatpush1.msra.mxu0 0.0
      %2850 = vmatprep.subr.mxu0 0.0
      %2851 = vmatpush1.msra.mxu0 0.0
      %2852 = vmatprep.subr.mxu0 0.0
      %2853 = vmatpush1.msra.mxu0 0.0
      %2854 = vmatprep.subr.mxu0 0.0
      %2855 = vmatpush1.msra.mxu0 0.0
      %2856 = vmatprep.subr.mxu0 0.0
      %2857 = vmatpush1.msra.mxu0 0.0
      %2858 = vmatprep.subr.mxu0 0.0
      %2859 = vmatpush1.msra.mxu0 0.0
      %2860 = vmatprep.subr.mxu0 0.0
      %2861 = vmatpush1.msra.mxu0 0.0
      %2862 = vmatprep.subr.mxu0 0.0
      %2863 = vmatpush1.msra.mxu0 0.0
      %2864 = vmatprep.subr.mxu0 0.0
      %2865 = vmatpush1.msra.mxu0 0.0
      %2866 = vmatprep.subr.mxu0 0.0
      %2867 = vmatpush1.msra.mxu0 0.0
      %2868 = vmatprep.subr.mxu0 0.0
      %2869 = vmatpush1.msra.mxu0 0.0
      %2870 = vmatprep.subr.mxu0 0.0
      %2871 = vmatpush1.msra.mxu0 0.0
      %2872 = vmatprep.subr.mxu0 0.0
      %2873 = vmatpush1.msra.mxu0 0.0
      %2874 = vmatprep.subr.mxu0 0.0
      %2875 = vmatpush1.msra.mxu0 0.0
      %2876 = vmatprep.subr.mxu0 0.0
      %2877 = vmatpush1.msra.mxu0 0.0
      %2878 = vmatprep.subr.mxu0 0.0
      %2879 = vmatpush1.msra.mxu0 0.0
      %2880 = vmatprep.mubr.f32.mxu0 0.0
      %2881 = vmatmul.mubr.f32.gmra.mrb[0].mxu0 %v1921
      %v2882 = vpop.f32.mrb[0].mxu0
      %v2883 = vadd.f32 %v2814, %v2882
      %v2884 = vpop.f32.mrb[0].mxu0
      %2885 = vdwg.mxu0
      %v2886 = vadd.f32 %v2300, %v2383
      %v2887 = vxor.u32 %v2886, 2147483648
      %v2888 = vmul.f32 %v2887, 1.442695
      %v2889 = vpow.pop %v2888
      %v2890 = vadd.f32 %v2889, 1.0
      %v2891 = vrcp.pop %v2890
      %v2892 = vmul.f32 1.0, %v2891
      %v2893 = vadd.f32 %v2548, %v2633
      %v2894 = vxor.u32 %v2893, 2147483648
      %v2895 = vmul.f32 %v2894, 1.442695
      %v2896 = vpow.pop %v2895
      %v2897 = vadd.f32 %v2896, 1.0
      %v2898 = vrcp.pop %v2897
      %v2899 = vmul.f32 1.0, %v2898
      %v2900 = vmul.f32 %v2892, %v2883
      %v2901 = vadd.f32 %v2798, %v2900
      %v2902 = vtanh.pop %v2901
      %v2903 = vsub.f32 1.0, %v2899
      %v2904 = vmul.f32 %v2903, %v2902
      %v2905 = vmul.f32 %v2899, %v1910
      %v2906 = vadd.f32 %v2904, %v2905
      %v2907 = vld [vmem:[#allocation20] sm:$0xff]
      %v2908 = vld [vmem:[#allocation20 + $0x8] sm:$0xff]
      %v2909 = vld [vmem:[#allocation20 + $0x10] sm:$0xff]
      %v2910 = vld [vmem:[#allocation20 + $0x18] sm:$0xff]
      %v2911 = vld [vmem:[#allocation20 + $0x20] sm:$0xff]
      %v2912 = vld [vmem:[#allocation20 + $0x28] sm:$0xff]
      %v2913 = vld [vmem:[#allocation20 + $0x30] sm:$0xff]
      %v2914 = vld [vmem:[#allocation20 + $0x38] sm:$0xff]
      %v2915 = vld [vmem:[#allocation22] sm:$0xff]
      %v2916 = vld [vmem:[#allocation22 + $0x8] sm:$0xff]
      %v2917 = vld [vmem:[#allocation22 + $0x10] sm:$0xff]
      %v2918 = vld [vmem:[#allocation22 + $0x18] sm:$0xff]
      %v2919 = vld [vmem:[#allocation22 + $0x20] sm:$0xff]
      %v2920 = vld [vmem:[#allocation22 + $0x28] sm:$0xff]
      %v2921 = vld [vmem:[#allocation22 + $0x30] sm:$0xff]
      %v2922 = vld [vmem:[#allocation22 + $0x38] sm:$0xff]
      %2923 = vmatprep.subr.mxu0 0.0
      %2924 = vmatpush1.msra.mxu0 %v2915
      %2925 = vmatprep.subr.mxu0 0.0
      %2926 = vmatpush1.msra.mxu0 %v2916
      %2927 = vmatprep.subr.mxu0 0.0
      %2928 = vmatpush1.msra.mxu0 %v2917
      %2929 = vmatprep.subr.mxu0 0.0
      %2930 = vmatpush1.msra.mxu0 %v2918
      %2931 = vmatprep.subr.mxu0 0.0
      %2932 = vmatpush1.msra.mxu0 %v2919
      %2933 = vmatprep.subr.mxu0 0.0
      %2934 = vmatpush1.msra.mxu0 %v2920
      %2935 = vmatprep.subr.mxu0 0.0
      %2936 = vmatpush1.msra.mxu0 %v2921
      %2937 = vmatprep.subr.mxu0 0.0
      %2938 = vmatpush1.msra.mxu0 %v2922
      %2939 = vmatprep.subr.mxu0 0.0
      %2940 = vmatpush1.msra.mxu0 0.0
      %2941 = vmatprep.subr.mxu0 0.0
      %2942 = vmatpush1.msra.mxu0 0.0
      %2943 = vmatprep.subr.mxu0 0.0
      %2944 = vmatpush1.msra.mxu0 0.0
      %2945 = vmatprep.subr.mxu0 0.0
      %2946 = vmatpush1.msra.mxu0 0.0
      %2947 = vmatprep.subr.mxu0 0.0
      %2948 = vmatpush1.msra.mxu0 0.0
      %2949 = vmatprep.subr.mxu0 0.0
      %2950 = vmatpush1.msra.mxu0 0.0
      %2951 = vmatprep.subr.mxu0 0.0
      %2952 = vmatpush1.msra.mxu0 0.0
      %2953 = vmatprep.subr.mxu0 0.0
      %2954 = vmatpush1.msra.mxu0 0.0
      %2955 = vmatprep.subr.mxu0 0.0
      %2956 = vmatpush1.msra.mxu0 0.0
      %2957 = vmatprep.subr.mxu0 0.0
      %2958 = vmatpush1.msra.mxu0 0.0
      %2959 = vmatprep.subr.mxu0 0.0
      %2960 = vmatpush1.msra.mxu0 0.0
      %2961 = vmatprep.subr.mxu0 0.0
      %2962 = vmatpush1.msra.mxu0 0.0
      %2963 = vmatprep.subr.mxu0 0.0
      %2964 = vmatpush1.msra.mxu0 0.0
      %2965 = vmatprep.subr.mxu0 0.0
      %2966 = vmatpush1.msra.mxu0 0.0
      %2967 = vmatprep.subr.mxu0 0.0
      %2968 = vmatpush1.msra.mxu0 0.0
      %2969 = vmatprep.subr.mxu0 0.0
      %2970 = vmatpush1.msra.mxu0 0.0
      %2971 = vmatprep.subr.mxu0 0.0
      %2972 = vmatpush1.msra.mxu0 0.0
      %2973 = vmatprep.subr.mxu0 0.0
      %2974 = vmatpush1.msra.mxu0 0.0
      %2975 = vmatprep.subr.mxu0 0.0
      %2976 = vmatpush1.msra.mxu0 0.0
      %2977 = vmatprep.subr.mxu0 0.0
      %2978 = vmatpush1.msra.mxu0 0.0
      %2979 = vmatprep.subr.mxu0 0.0
      %2980 = vmatpush1.msra.mxu0 0.0
      %2981 = vmatprep.subr.mxu0 0.0
      %2982 = vmatpush1.msra.mxu0 0.0
      %2983 = vmatprep.subr.mxu0 0.0
      %2984 = vmatpush1.msra.mxu0 0.0
      %2985 = vmatprep.subr.mxu0 0.0
      %2986 = vmatpush1.msra.mxu0 0.0
      %2987 = vmatprep.mubr.f32.mxu0 0.0
      %2988 = vmatmul.mubr.f32.gmra.mrb[0].mxu0 %v2148
      %v2989 = vpop.f32.mrb[0].mxu0
      %v2990 = vadd.f32 0.0, %v2989
      %v2991 = vpop.f32.mrb[0].mxu0
      %2992 = vdwg.mxu0
      %v2994 = vsel %vm1776, %v2906, 0
      %2996 = vmatprep.subr.mxu0 0.0
      %2997 = vmatpush1.msra.mxu0 %v2907
      %2998 = vmatprep.subr.mxu0 0.0
      %2999 = vmatpush1.msra.mxu0 %v2908
      %3000 = vmatprep.subr.mxu0 0.0
      %3001 = vmatpush1.msra.mxu0 %v2909
      %3002 = vmatprep.subr.mxu0 0.0
      %3003 = vmatpush1.msra.mxu0 %v2910
      %3004 = vmatprep.subr.mxu0 0.0
      %3005 = vmatpush1.msra.mxu0 %v2911
      %3006 = vmatprep.subr.mxu0 0.0
      %3007 = vmatpush1.msra.mxu0 %v2912
      %3008 = vmatprep.subr.mxu0 0.0
      %3009 = vmatpush1.msra.mxu0 %v2913
      %3010 = vmatprep.subr.mxu0 0.0
      %3011 = vmatpush1.msra.mxu0 %v2914
      %3012 = vmatprep.subr.mxu0 0.0
      %3013 = vmatpush1.msra.mxu0 0.0
      %3014 = vmatprep.subr.mxu0 0.0
      %3015 = vmatpush1.msra.mxu0 0.0
      %3016 = vmatprep.subr.mxu0 0.0
      %3017 = vmatpush1.msra.mxu0 0.0
      %3018 = vmatprep.subr.mxu0 0.0
      %3019 = vmatpush1.msra.mxu0 0.0
      %3020 = vmatprep.subr.mxu0 0.0
      %3021 = vmatpush1.msra.mxu0 0.0
      %3022 = vmatprep.subr.mxu0 0.0
      %3023 = vmatpush1.msra.mxu0 0.0
      %3024 = vmatprep.subr.mxu0 0.0
      %3025 = vmatpush1.msra.mxu0 0.0
      %3026 = vmatprep.subr.mxu0 0.0
      %3027 = vmatpush1.msra.mxu0 0.0
      %3028 = vmatprep.subr.mxu0 0.0
      %3029 = vmatpush1.msra.mxu0 0.0
      %3030 = vmatprep.subr.mxu0 0.0
      %3031 = vmatpush1.msra.mxu0 0.0
      %3032 = vmatprep.subr.mxu0 0.0
      %3033 = vmatpush1.msra.mxu0 0.0
      %3034 = vmatprep.subr.mxu0 0.0
      %3035 = vmatpush1.msra.mxu0 0.0
      %3036 = vmatprep.subr.mxu0 0.0
      %3037 = vmatpush1.msra.mxu0 0.0
      %3038 = vmatprep.subr.mxu0 0.0
      %3039 = vmatpush1.msra.mxu0 0.0
      %3040 = vmatprep.subr.mxu0 0.0
      %3041 = vmatpush1.msra.mxu0 0.0
      %3042 = vmatprep.subr.mxu0 0.0
      %3043 = vmatpush1.msra.mxu0 0.0
      %3044 = vmatprep.subr.mxu0 0.0
      %3045 = vmatpush1.msra.mxu0 0.0
      %3046 = vmatprep.subr.mxu0 0.0
      %3047 = vmatpush1.msra.mxu0 0.0
      %3048 = vmatprep.subr.mxu0 0.0
      %3049 = vmatpush1.msra.mxu0 0.0
      %3050 = vmatprep.subr.mxu0 0.0
      %3051 = vmatpush1.msra.mxu0 0.0
      %3052 = vmatprep.subr.mxu0 0.0
      %3053 = vmatpush1.msra.mxu0 0.0
      %3054 = vmatprep.subr.mxu0 0.0
      %3055 = vmatpush1.msra.mxu0 0.0
      %3056 = vmatprep.subr.mxu0 0.0
      %3057 = vmatpush1.msra.mxu0 0.0
      %3058 = vmatprep.subr.mxu0 0.0
      %3059 = vmatpush1.msra.mxu0 0.0
      %3060 = vmatprep.mubr.f32.mxu0 0.0
      %3061 = vmatmul.mubr.f32.gmra.mrb[0].mxu0 %v2994
      %v3062 = vpop.f32.mrb[0].mxu0
      %v3063 = vadd.f32 %v2990, %v3062
      %v3064 = vpop.f32.mrb[0].mxu0
      %3065 = vdwg.mxu0
      %v3066 = vld [vmem:[%s18] sm:$0xff]
      %v3067 = vld [vmem:[%s18 + $0x8] sm:$0xff]
      %v3068 = vld [vmem:[%s18 + $0x10] sm:$0xff]
      %v3069 = vld [vmem:[%s18 + $0x18] sm:$0xff]
      %3070 = vmatprep.subr.mxu0 0.0
      %3071 = vmatpush1.msra.mxu0 %v3066
      %3072 = vmatprep.subr.mxu0 0.0
      %3073 = vmatpush1.msra.mxu0 %v3067
      %3074 = vmatprep.subr.mxu0 0.0
      %3075 = vmatpush1.msra.mxu0 %v3068
      %3076 = vmatprep.subr.mxu0 0.0
      %3077 = vmatpush1.msra.mxu0 %v3069
      %3078 = vmatprep.subr.mxu0 0.0
      %3079 = vmatpush1.msra.mxu0 0.0
      %3080 = vmatprep.subr.mxu0 0.0
      %3081 = vmatpush1.msra.mxu0 0.0
      %3082 = vmatprep.subr.mxu0 0.0
      %3083 = vmatpush1.msra.mxu0 0.0
      %3084 = vmatprep.subr.mxu0 0.0
      %3085 = vmatpush1.msra.mxu0 0.0
      %3086 = vmatprep.subr.mxu0 0.0
      %3087 = vmatpush1.msra.mxu0 0.0
      %3088 = vmatprep.subr.mxu0 0.0
      %3089 = vmatpush1.msra.mxu0 0.0
      %3090 = vmatprep.subr.mxu0 0.0
      %3091 = vmatpush1.msra.mxu0 0.0
      %3092 = vmatprep.subr.mxu0 0.0
      %3093 = vmatpush1.msra.mxu0 0.0
      %3094 = vmatprep.subr.mxu0 0.0
      %3095 = vmatpush1.msra.mxu0 0.0
      %3096 = vmatprep.subr.mxu0 0.0
      %3097 = vmatpush1.msra.mxu0 0.0
      %3098 = vmatprep.subr.mxu0 0.0
      %3099 = vmatpush1.msra.mxu0 0.0
      %3100 = vmatprep.subr.mxu0 0.0
      %3101 = vmatpush1.msra.mxu0 0.0
      %3102 = vmatprep.subr.mxu0 0.0
      %3103 = vmatpush1.msra.mxu0 0.0
      %3104 = vmatprep.subr.mxu0 0.0
      %3105 = vmatpush1.msra.mxu0 0.0
      %3106 = vmatprep.subr.mxu0 0.0
      %3107 = vmatpush1.msra.mxu0 0.0
      %3108 = vmatprep.subr.mxu0 0.0
      %3109 = vmatpush1.msra.mxu0 0.0
      %3110 = vmatprep.subr.mxu0 0.0
      %3111 = vmatpush1.msra.mxu0 0.0
      %3112 = vmatprep.subr.mxu0 0.0
      %3113 = vmatpush1.msra.mxu0 0.0
      %3114 = vmatprep.subr.mxu0 0.0
      %3115 = vmatpush1.msra.mxu0 0.0
      %3116 = vmatprep.subr.mxu0 0.0
      %3117 = vmatpush1.msra.mxu0 0.0
      %3118 = vmatprep.subr.mxu0 0.0
      %3119 = vmatpush1.msra.mxu0 0.0
      %3120 = vmatprep.subr.mxu0 0.0
      %3121 = vmatpush1.msra.mxu0 0.0
      %3122 = vmatprep.subr.mxu0 0.0
      %3123 = vmatpush1.msra.mxu0 0.0
      %3124 = vmatprep.subr.mxu0 0.0
      %3125 = vmatpush1.msra.mxu0 0.0
      %3126 = vmatprep.subr.mxu0 0.0
      %3127 = vmatpush1.msra.mxu0 0.0
      %3128 = vmatprep.subr.mxu0 0.0
      %3129 = vmatpush1.msra.mxu0 0.0
      %3130 = vmatprep.subr.mxu0 0.0
      %3131 = vmatpush1.msra.mxu0 0.0
      %3132 = vmatprep.subr.mxu0 0.0
      %3133 = vmatpush1.msra.mxu0 0.0
      %3134 = vmatprep.mubr.f32.mxu0 0.0
      %3135 = vmatmul.mubr.f32.gmra.mrb[0].mxu0 %v2221
      %v3136 = vpop.f32.mrb[0].mxu0
      %v3137 = vadd.f32 0.0, %v3136
      %v3138 = vpop.f32.mrb[0].mxu0
      %3139 = vdwg.mxu0
      %v3140 = vadd.f32 %v3063, %v3137
      %v3141 = vld [vmem:[#allocation23] sm:$0x1]
      %v3143 = vlaneseq
      %v3144 = vshrl.u32 %v3143, 7
      %v3145 = vsub.s32 0, %v3144
      %v3146 = vrot.slane %v3141, %v3145
      %v3148 = vadd.f32 %v3140, %v3146
      %s3149 = smul.u32 %s1905, 2
      %s3150 = scalar_lea.vmem %s21, %s3149
      %3151 = vst.msk [vmem:[%s3150] sm:$0x3] %vm2119, %v3148
      %v3152 = vsel %vm2119, %v3148, -inf
      %3153 = vmax.xlane.f32.xlu0 %v3152
      %v3154 = vpop.xlane.xlu0 %3153
      %vm3155 = vcmp.ge.f32.partialorder %v3148, %v3154
      %v3156 = vsel %vm3155, %v1903, 64.0
      %v3157 = vsel %vm2119, %v3156, inf
      %3158 = vmin.xlane.f32.xlu0 %v3157
      %v3159 = vpop.xlane.xlu0 %3158
      %v3160 = vcvt.f32.s32.to.zero.pseudo %v3159
      %s3161 = scalar_lea.vmem %s22, %s3149
      %vm3162 = vcmask 1024
      %3163 = vst.msk [vmem:[%s3161] sm:$0x3] %vm3162, %v3160
      %vm3164 = vcmp.eq.f32.partialorder %v1903, %v3159
      %v3165 = vsel %vm3164, 1, 0
      %v3166 = vcvt.s32.f32 %v3165
      %s3167 = scalar_lea.vmem %s2, %s1905
      %v3168 = vld [vmem:[%s3167] sm:$0x1]
      %s3169 = scalar_lea.vmem %s1, %s3149
      %v3170 = vld [vmem:[%s3169] sm:$0x3]
      %v3172 = vlaneseq
      %v3173 = vshrl.u32 %v3172, 7
      %v3174 = vsub.s32 0, %v3173
      %v3175 = vrot.slane %v3168, %v3174
      %3176 = vset.pattern.permute.xlu0 0
      %3177 = vperm.xlu0 %3176, %v3175
      %v3178 = vpop.permute.xlu0 %3177
      %v3180 = vmul.f32 %v3178, %v3170
      %v3181 = vsub.f32 1.0, %v3168
      %v3183 = vlaneseq
      %v3184 = vshrl.u32 %v3183, 7
      %v3185 = vsub.s32 0, %v3184
      %v3186 = vrot.slane %v3181, %v3185
      %3187 = vset.pattern.permute.xlu0 0
      %3188 = vperm.xlu0 %3187, %v3186
      %v3189 = vpop.permute.xlu0 %3188
      %v3191 = vmul.f32 %v3189, %v3166
      %v3192 = vadd.f32 %v3180, %v3191
      %v3193 = vld [vmem:[%s20] sm:$0xff]
      %v3194 = vld [vmem:[%s20 + $0x8] sm:$0xff]
      %v3195 = vld [vmem:[%s20 + $0x10] sm:$0xff]
      %v3196 = vld [vmem:[%s20 + $0x18] sm:$0xff]
      %v3197 = vld [vmem:[%s20 + $0x20] sm:$0xff]
      %v3198 = vld [vmem:[%s20 + $0x28] sm:$0xff]
      %v3199 = vld [vmem:[%s20 + $0x30] sm:$0xff]
      %v3200 = vld [vmem:[%s20 + $0x38] sm:$0xff]
      %v3202 = vsel %vm1776, %v3192, 0
      %3204 = vmatprep.subr.mxu0 0.0
      %3205 = vmatpush1.msra.mxu0 %v3193
      %3206 = vmatprep.subr.mxu0 0.0
      %3207 = vmatpush1.msra.mxu0 %v3194
      %3208 = vmatprep.subr.mxu0 0.0
      %3209 = vmatpush1.msra.mxu0 %v3195
      %3210 = vmatprep.subr.mxu0 0.0
      %3211 = vmatpush1.msra.mxu0 %v3196
      %3212 = vmatprep.subr.mxu0 0.0
      %3213 = vmatpush1.msra.mxu0 %v3197
      %3214 = vmatprep.subr.mxu0 0.0
      %3215 = vmatpush1.msra.mxu0 %v3198
      %3216 = vmatprep.subr.mxu0 0.0
      %3217 = vmatpush1.msra.mxu0 %v3199
      %3218 = vmatprep.subr.mxu0 0.0
      %3219 = vmatpush1.msra.mxu0 %v3200
      %3220 = vmatprep.subr.mxu0 0.0
      %3221 = vmatpush1.msra.mxu0 0.0
      %3222 = vmatprep.subr.mxu0 0.0
      %3223 = vmatpush1.msra.mxu0 0.0
      %3224 = vmatprep.subr.mxu0 0.0
      %3225 = vmatpush1.msra.mxu0 0.0
      %3226 = vmatprep.subr.mxu0 0.0
      %3227 = vmatpush1.msra.mxu0 0.0
      %3228 = vmatprep.subr.mxu0 0.0
      %3229 = vmatpush1.msra.mxu0 0.0
      %3230 = vmatprep.subr.mxu0 0.0
      %3231 = vmatpush1.msra.mxu0 0.0
      %3232 = vmatprep.subr.mxu0 0.0
      %3233 = vmatpush1.msra.mxu0 0.0
      %3234 = vmatprep.subr.mxu0 0.0
      %3235 = vmatpush1.msra.mxu0 0.0
      %3236 = vmatprep.subr.mxu0 0.0
      %3237 = vmatpush1.msra.mxu0 0.0
      %3238 = vmatprep.subr.mxu0 0.0
      %3239 = vmatpush1.msra.mxu0 0.0
      %3240 = vmatprep.subr.mxu0 0.0
      %3241 = vmatpush1.msra.mxu0 0.0
      %3242 = vmatprep.subr.mxu0 0.0
      %3243 = vmatpush1.msra.mxu0 0.0
      %3244 = vmatprep.subr.mxu0 0.0
      %3245 = vmatpush1.msra.mxu0 0.0
      %3246 = vmatprep.subr.mxu0 0.0
      %3247 = vmatpush1.msra.mxu0 0.0
      %3248 = vmatprep.subr.mxu0 0.0
      %3249 = vmatpush1.msra.mxu0 0.0
      %3250 = vmatprep.subr.mxu0 0.0
      %3251 = vmatpush1.msra.mxu0 0.0
      %3252 = vmatprep.subr.mxu0 0.0
      %3253 = vmatpush1.msra.mxu0 0.0
      %3254 = vmatprep.subr.mxu0 0.0
      %3255 = vmatpush1.msra.mxu0 0.0
      %3256 = vmatprep.subr.mxu0 0.0
      %3257 = vmatpush1.msra.mxu0 0.0
      %3258 = vmatprep.subr.mxu0 0.0
      %3259 = vmatpush1.msra.mxu0 0.0
      %3260 = vmatprep.subr.mxu0 0.0
      %3261 = vmatpush1.msra.mxu0 0.0
      %3262 = vmatprep.subr.mxu0 0.0
      %3263 = vmatpush1.msra.mxu0 0.0
      %3264 = vmatprep.subr.mxu0 0.0
      %3265 = vmatpush1.msra.mxu0 0.0
      %3266 = vmatprep.subr.mxu0 0.0
      %3267 = vmatpush1.msra.mxu0 0.0
      %3268 = vmatprep.mubr.f32.mxu0 0.0
      %3269 = vmatmul.mubr.f32.gmra.mrb[0].mxu0 %v3202
      %v3270 = vpop.f32.mrb[0].mxu0
      %v3271 = vadd.f32 0.0, %v3270
      %v3272 = vpop.f32.mrb[0].mxu0
      %3273 = vdwg.mxu0
    $region145: #{_forward_jit.1} parent=1 // loop_footer
      %s1909 = sadd.s32 1, %s1905
    $region146: #{_forward_jit.1} parent=1 // loop_footer_branch
      %1904 = sbr.rel target = $region142
    $region147: #{_forward_jit.1} parent=1 // loop_exit
      _
    // Predicated region
    $region148: #{_forward_jit.1} parent=1 // pred_check
      _
    $region149: #{_forward_jit.1} parent=1 // pred_check_branch
      %3275 = sbr.rel (0) target = $region151
    $region150: #{_forward_jit.1} parent=1 // pred_region
      _
    $region151: #{_forward_jit.1} parent=1 // pred_fallthru
      _
    // Predicated region
    $region152: #{_forward_jit.1} parent=1 // pred_check
      _
    $region153: #{_forward_jit.1} parent=1 // pred_check_branch
      %3277 = sbr.rel (0) target = $region155
    $region154: #{_forward_jit.1} parent=1 // pred_region
      _
    $region155: #{_forward_jit.1} parent=1 // pred_fallthru
      _
    // Predicated region
    $region156: #{_forward_jit.1} parent=1 // pred_check
      _
    $region157: #{_forward_jit.1} parent=1 // pred_check_branch
      %3279 = sbr.rel (0) target = $region159
    $region158: #{_forward_jit.1} parent=1 // pred_region
      _
    $region159: #{_forward_jit.1} parent=1 // pred_fallthru
      _
    // Predicated region
    $region160: #{_forward_jit.1} parent=1 // pred_check
      _
    $region161: #{_forward_jit.1} parent=1 // pred_check_branch
      %3281 = sbr.rel (0) target = $region163
    $region162: #{_forward_jit.1} parent=1 // pred_region
      _
    $region163: #{_forward_jit.1} parent=1 // pred_fallthru
      _
    %3282 = vsyncpa [#allocation7], 1
    %3283 = vsyncpa [#allocation9], 1
    %3284 = vsyncpa [#allocation12], 1
    %3285 = vsyncpa [#allocation15], 1
    %3286 = vsyncpa [#allocation18], 1
    %3287 = vsyncpa [#allocation21], 1
    %3288 = vsyncpa [#allocation24], 1

</llo_original>
